<compile_context>
chip_gen: v6e
topology: v6e:2x2x1
jax: 0.10.0
libtpu: 0.0.40
codegen_flags: <defaults>
</compile_context>

<pallas_src>
import functools

import jax
import jax.numpy as jnp
from jax.experimental import pallas as pl
from jax.experimental.pallas import tpu as pltpu


_MIB = 1024 * 1024


def _vmem_budget(*nbytes):
    """Per-call VMEM request derived from actual block sizes (double-buffering +
    headroom), capped at 48 MiB so it stays safe on v7x's 64 MiB VMEM."""
    need = 3 * sum(int(n) for n in nbytes)
    return int(min(48 * _MIB, max(8 * _MIB, need)))


def _reduction_tile(n, cap):
    """Largest multiple-of-8 divisor of n that is <= cap (else n itself)."""
    if n <= cap or n % 8 != 0:
        return n
    t = cap - cap % 8
    while t >= 8:
        if n % t == 0:
            return t
        t -= 8
    return n


# ------------------------------ conv3x3 + ReLU --------------------------------

def _conv3x3_kernel(x_ref, w_ref, b_ref, o_ref, acc_ref, *, cin, m, wp):
    """x:(1,Lp,Cin) bf16 flattened padded image, w:(9*Cin,Cout) bf16 tap-major,
    b:(1,Cout) f32, o:(1,M,Cout) f32, acc:(M,Cout) f32 VMEM accumulator.

    The 3x3 window is accumulated in-kernel over 9 static shifted views of the
    flattened spatial axis (no im2col in HBM)."""
    acc_ref[...] = jnp.zeros_like(acc_ref)
    for t in range(9):
        dy, dx = divmod(t, 3)
        off = dy * wp + dx
        lhs = x_ref[0, off:off + m, :]                    # (M, Cin) bf16, static slice
        w_t = w_ref[t * cin:(t + 1) * cin, :]             # (Cin, Cout) bf16
        acc_ref[...] += jnp.dot(lhs, w_t, preferred_element_type=jnp.float32)
    o_ref[0] = jnp.maximum(acc_ref[...] + b_ref[...], 0.0)


def _conv3x3_relu(x_nhwc, w, b):
    """3x3 'same' conv (stride 1, pad 1) + ReLU  ==  Conv2d(k=3, p=1) + ReLU.

    x: (B,H,W,Cin) f32; w: (9*Cin,Cout) bf16 laid out (ky,kx,cin)->cout; b: (Cout,).
    Returns (B,H,W,Cout) f32."""
    B, H, W, Cin = x_nhwc.shape
    Cout = w.shape[1]
    Wp = W + 2
    # pad H by (1,2): the extra bottom row is only ever read for the two discarded
    # "wrap" columns of the flattened-window formulation.
    xp = jnp.pad(x_nhwc, ((0, 0), (1, 2), (1, 1), (0, 0))).astype(jnp.bfloat16)
    Lp = (H + 3) * Wp
    xf = xp.reshape(B, Lp, Cin)
    M = H * Wp                                   # output rows incl. 2 wrap columns/row

    blk_bytes = (Lp * Cin * 2, 9 * Cin * Cout * 2, Cout * 4,
                 M * Cout * 4, M * Cout * 4)
    out = pl.pallas_call(
        functools.partial(_conv3x3_kernel, cin=Cin, m=M, wp=Wp),
        out_shape=jax.ShapeDtypeStruct((B, M, Cout), jnp.float32),
        grid=(B,),
        in_specs=[
            pl.BlockSpec((1, Lp, Cin), lambda i: (i, 0, 0)),
            pl.BlockSpec((9 * Cin, Cout), lambda i: (0, 0)),
            pl.BlockSpec((1, Cout), lambda i: (0, 0)),
        ],
        out_specs=pl.BlockSpec((1, M, Cout), lambda i: (i, 0, 0)),
        scratch_shapes=[pltpu.VMEM((M, Cout), jnp.float32)],
        compiler_params=pltpu.CompilerParams(
            dimension_semantics=("parallel",),
            vmem_limit_bytes=_vmem_budget(*blk_bytes),
        ),
    )(xf, w, b.reshape(1, Cout))
    # TODO(synk): for very large images, additionally tile the spatial (row) axis
    # with a halo (pl.Element) instead of one batch element per grid step.
    return out.reshape(B, H, Wp, Cout)[:, :, :W, :]   # drop the 2 wrap columns


# --------------------------------- Gram matrix --------------------------------

def _gram_kernel(f_ref, o_ref, acc_ref, *, scale):
    """f:(1,t_hw,C) -> accumulate f^T f over the HW grid axis into acc:(C,C)."""
    @pl.when(pl.program_id(1) == 0)
    def _():
        acc_ref[...] = jnp.zeros_like(acc_ref)

    f = f_ref[0]
    acc_ref[...] += jax.lax.dot_general(
        f, f, (((0,), (0,)), ((), ())), preferred_element_type=jnp.float32)

    @pl.when(pl.program_id(1) == pl.num_programs(1) - 1)
    def _():
        o_ref[0] = acc_ref[...] * scale


def gram_matrix(feat_nhwc):
    """feat: (B,H,W,C) NHWC -> (B,C,C); matches torch gram_matrix (divide by C*H*W)."""
    B, H, W, C = feat_nhwc.shape
    HW = H * W
    f = feat_nhwc.reshape(B, HW, C).astype(jnp.float32)
    t_hw = _reduction_tile(HW, 2048)
    scale = 1.0 / float(C * HW)
    return pl.pallas_call(
        functools.partial(_gram_kernel, scale=scale),
        out_shape=jax.ShapeDtypeStruct((B, C, C), jnp.float32),
        grid=(B, HW // t_hw),
        in_specs=[pl.BlockSpec((1, t_hw, C), lambda b, j: (b, j, 0))],
        out_specs=pl.BlockSpec((1, C, C), lambda b, j: (b, 0, 0)),
        scratch_shapes=[pltpu.VMEM((C, C), jnp.float32)],
        compiler_params=pltpu.CompilerParams(
            dimension_semantics=("parallel", "arbitrary"),
            vmem_limit_bytes=_vmem_budget(t_hw * C * 4, C * C * 4, C * C * 4),
        ),
    )(f)


# ------------------------------------ MSE -------------------------------------

def _sse_kernel(a_ref, b_ref, o_ref):
    @pl.when(pl.program_id(0) == 0)
    def _():
        o_ref[...] = jnp.zeros_like(o_ref)
    d = a_ref[...].astype(jnp.float32) - b_ref[...].astype(jnp.float32)
    o_ref[...] = o_ref[...] + jnp.sum(d * d)


def mse(a, b):
    """Mean-squared error with chunked f32 accumulation (F.mse_loss 'mean')."""
    C = a.shape[-1]
    a2 = a.reshape(-1, C).astype(jnp.float32)
    b2 = b.reshape(-1, C).astype(jnp.float32)
    R = a2.shape[0]
    tr = _reduction_tile(R, 1024)
    sse = pl.pallas_call(
        _sse_kernel,
        out_shape=jax.ShapeDtypeStruct((1, 1), jnp.float32),
        grid=(R // tr,),
        in_specs=[
            pl.BlockSpec((tr, C), lambda i: (i, 0)),
            pl.BlockSpec((tr, C), lambda i: (i, 0)),
        ],
        out_specs=pl.BlockSpec((1, 1), lambda i: (0, 0)),
        compiler_params=pltpu.CompilerParams(
            dimension_semantics=("arbitrary",),
            vmem_limit_bytes=_vmem_budget(tr * C * 4, tr * C * 4),
        ),
    )(a2, b2)
    return sse[0, 0] / float(a2.size)


# --------------------------- synthetic VGG16 features --------------------------

_VGG_CFG = [
    ("conv1_1", 3, 64), ("conv1_2", 64, 64), ("pool",),
    ("conv2_1", 64, 128), ("conv2_2", 128, 128), ("pool",),
    ("conv3_1", 128, 256), ("conv3_2", 256, 256), ("conv3_3", 256, 256), ("pool",),
    ("conv4_1", 256, 512), ("conv4_2", 512, 512), ("conv4_3", 512, 512),
]

_RELU_NAME = {"conv1_2": "relu1_2", "conv2_2": "relu2_2",
              "conv3_3": "relu3_3", "conv4_3": "relu4_3"}


def init_vgg_params(key):
    """Deterministic synthetic VGG16-features weights (torchvision vgg16 shapes),
    stored bf16 pre-reshaped for the tap-matmul: (3*3*cin, cout), tap-major.
    # TODO(synk): pretrained ImageNet weights not loadable in-script; He-init stand-in."""
    params = {}
    for entry in _VGG_CFG:
        if entry[0] == "pool":
            continue
        name, cin, cout = entry
        key, kw = jax.random.split(key)
        w = (jax.random.normal(kw, (9 * cin, cout), jnp.float32)
             * jnp.sqrt(2.0 / (9 * cin))).astype(jnp.bfloat16)
        b = jnp.zeros((cout,), jnp.float32)
        params[name] = (w, b)
    return params


def _maxpool2x2(x):
    # glue: 2x2 / stride-2 max pool (MaxPool2d) in plain JAX; not the hot path
    B, H, W, C = x.shape
    return x.reshape(B, H // 2, 2, W // 2, 2, C).max(axis=(2, 4))


def vgg_features(x_nchw, params, wanted):
    """Mirrors VGGFeatures.forward: dict layer_name -> NHWC feature tensor.
    Features stay channels-last; gram/mse consume NHWC directly (no transposes)."""
    x = jnp.transpose(x_nchw, (0, 2, 3, 1)).astype(jnp.float32)  # NCHW -> NHWC once
    feats = {}
    for entry in _VGG_CFG:
        if entry[0] == "pool":
            x = _maxpool2x2(x)
            continue
        name = entry[0]
        w, b = params[name]
        x = _conv3x3_relu(x, w, b)                 # conv + fused bias/ReLU in Pallas
        rname = _RELU_NAME.get(name)
        if rname is not None and rname in wanted:
            feats[rname] = x                       # NHWC, no NCHW round-trip
    return feats


# -------------------------------- PerceptualLoss -------------------------------

class PerceptualLoss:
    def __init__(self, style_image_nchw, style_layers=None, content_layer="relu3_3",
                 key=None):
        if key is None:
            key = jax.random.PRNGKey(42)
        self.style_layers = style_layers or ["relu1_2", "relu2_2", "relu3_3", "relu4_3"]
        self.content_layer = content_layer
        self.params = init_vgg_params(key)
        self.wanted = set(self.style_layers) | {self.content_layer}
        target_style = vgg_features(style_image_nchw, self.params,
                                    set(self.style_layers))
        self.style_grams = {l: gram_matrix(target_style[l]) for l in self.style_layers}

    def __call__(self, output, target):
        out_feats = vgg_features(output, self.params, self.wanted)
        tgt_feats = vgg_features(target, self.params, {self.content_layer})
        content_loss = mse(out_feats[self.content_layer],
                           tgt_feats[self.content_layer])
        style_loss = jnp.float32(0.0)
        for layer in self.style_layers:
            G = gram_matrix(out_feats[layer])
            A = self.style_grams[layer]
            if A.shape[0] != G.shape[0]:
                A = jnp.broadcast_to(A, G.shape)   # == A.expand(B, -1, -1)
            style_loss = style_loss + mse(G, A)
        return content_loss, style_loss


if __name__ == "__main__":
    key = jax.random.PRNGKey(0)
    k1, k2, k3 = jax.random.split(key, 3)
    B, H, W = 2, 16, 16
    style_image = jax.random.uniform(k1, (1, 3, H, W), jnp.float32)
    output = jax.random.uniform(k2, (B, 3, H, W), jnp.float32)
    target = jax.random.uniform(k3, (B, 3, H, W), jnp.float32)

    loss_fn = PerceptualLoss(style_image)
    content_loss, style_loss = loss_fn(output, target)
    jax.block_until_ready((content_loss, style_loss))
    print("KERNEL_OK")
</pallas_src>

<mosaic_0001>
module attributes {stable_mosaic.version = 11 : i64} {
  func.func @_conv3x3_kernel(%arg0: i32, %arg1: memref<1x342x3xbf16, #tpu.memory_space<vmem>>, %arg2: memref<27x64xbf16, #tpu.memory_space<vmem>>, %arg3: memref<1x64xf32, #tpu.memory_space<vmem>>, %arg4: memref<1x288x64xf32, #tpu.memory_space<vmem>>, %arg5: memref<288x64xf32, #tpu.memory_space<vmem>>) attributes {dimension_semantics = [#tpu.dimension_semantics<parallel>], iteration_bounds = array<i64: 1>, scalar_prefetch = 0 : i64, scratch_operands = 1 : i64, tpu.core_type = #tpu.core_type<tc>, window_params = [{transform_indices = @transform_0, window_bounds = array<i64: 1, 342, 3>}, {pipeline_mode = #tpu.pipeline_mode<synchronous>, transform_indices = @transform_1, window_bounds = array<i64: 27, 64>}, {pipeline_mode = #tpu.pipeline_mode<synchronous>, transform_indices = @transform_2, window_bounds = array<i64: 1, 64>}, {transform_indices = @transform_3, window_bounds = array<i64: 1, 288, 64>}]} {
    %cst = arith.constant 0.000000e+00 : f32
    %0 = vector.broadcast %cst : f32 to vector<288x64xf32>
    %c0 = arith.constant 0 : index
    %c0_0 = arith.constant 0 : index
    %1 = vector.load %arg5[%c0, %c0_0] : memref<288x64xf32, #tpu.memory_space<vmem>>, vector<288x64xf32>
    tpu.vector_store %arg5[%c0, %c0_0], %0 {strides = array<i32>} : memref<288x64xf32, #tpu.memory_space<vmem>>, vector<288x64xf32>,
    %c0_1 = arith.constant 0 : index
    %c0_2 = arith.constant 0 : index
    %c0_3 = arith.constant 0 : index
    %2 = vector.load %arg1[%c0_1, %c0_2, %c0_3] : memref<1x342x3xbf16, #tpu.memory_space<vmem>>, vector<1x288x3xbf16>
    %3 = vector.shape_cast %2 : vector<1x288x3xbf16> to vector<288x3xbf16>
    %c0_4 = arith.constant 0 : index
    %c0_5 = arith.constant 0 : index
    %4 = vector.load %arg2[%c0_4, %c0_5] : memref<27x64xbf16, #tpu.memory_space<vmem>>, vector<3x64xbf16>
    %c0_6 = arith.constant 0 : index
    %c0_7 = arith.constant 0 : index
    %5 = vector.load %arg5[%c0_6, %c0_7] : memref<288x64xf32, #tpu.memory_space<vmem>>, vector<288x64xf32>
    %cst_8 = arith.constant dense<0.000000e+00> : vector<288x64xf32>
    %6 = tpu.matmul %3, %4, %cst_8 {dimension_numbers = #tpu.dot_dimension_numbers<[1], [0], [0], [1], [0, 0, 1, 1], [], []>} : vector<288x3xbf16>, vector<3x64xbf16>, vector<288x64xf32> -> vector<288x64xf32>
    %7 = arith.addf %5, %6 : vector<288x64xf32>
    %c0_9 = arith.constant 0 : index
    %c0_10 = arith.constant 0 : index
    %8 = vector.load %arg5[%c0_9, %c0_10] : memref<288x64xf32, #tpu.memory_space<vmem>>, vector<288x64xf32>
    tpu.vector_store %arg5[%c0_9, %c0_10], %7 {strides = array<i32>} : memref<288x64xf32, #tpu.memory_space<vmem>>, vector<288x64xf32>,
    %c0_11 = arith.constant 0 : index
    %c1 = arith.constant 1 : index
    %c0_12 = arith.constant 0 : index
    %9 = vector.load %arg1[%c0_11, %c1, %c0_12] : memref<1x342x3xbf16, #tpu.memory_space<vmem>>, vector<1x288x3xbf16>
    %10 = vector.shape_cast %9 : vector<1x288x3xbf16> to vector<288x3xbf16>
    %c3 = arith.constant 3 : index
    %c0_13 = arith.constant 0 : index
    %11 = vector.load %arg2[%c3, %c0_13] : memref<27x64xbf16, #tpu.memory_space<vmem>>, vector<3x64xbf16>
    %c0_14 = arith.constant 0 : index
    %c0_15 = arith.constant 0 : index
    %12 = vector.load %arg5[%c0_14, %c0_15] : memref<288x64xf32, #tpu.memory_space<vmem>>, vector<288x64xf32>
    %cst_16 = arith.constant dense<0.000000e+00> : vector<288x64xf32>
    %13 = tpu.matmul %10, %11, %cst_16 {dimension_numbers = #tpu.dot_dimension_numbers<[1], [0], [0], [1], [0, 0, 1, 1], [], []>} : vector<288x3xbf16>, vector<3x64xbf16>, vector<288x64xf32> -> vector<288x64xf32>
    %14 = arith.addf %12, %13 : vector<288x64xf32>
    %c0_17 = arith.constant 0 : index
    %c0_18 = arith.constant 0 : index
    %15 = vector.load %arg5[%c0_17, %c0_18] : memref<288x64xf32, #tpu.memory_space<vmem>>, vector<288x64xf32>
    tpu.vector_store %arg5[%c0_17, %c0_18], %14 {strides = array<i32>} : memref<288x64xf32, #tpu.memory_space<vmem>>, vector<288x64xf32>,
    %c0_19 = arith.constant 0 : index
    %c2 = arith.constant 2 : index
    %c0_20 = arith.constant 0 : index
    %16 = vector.load %arg1[%c0_19, %c2, %c0_20] : memref<1x342x3xbf16, #tpu.memory_space<vmem>>, vector<1x288x3xbf16>
    %17 = vector.shape_cast %16 : vector<1x288x3xbf16> to vector<288x3xbf16>
    %c6 = arith.constant 6 : index
    %c0_21 = arith.constant 0 : index
    %18 = vector.load %arg2[%c6, %c0_21] : memref<27x64xbf16, #tpu.memory_space<vmem>>, vector<3x64xbf16>
    %c0_22 = arith.constant 0 : index
    %c0_23 = arith.constant 0 : index
    %19 = vector.load %arg5[%c0_22, %c0_23] : memref<288x64xf32, #tpu.memory_space<vmem>>, vector<288x64xf32>
    %cst_24 = arith.constant dense<0.000000e+00> : vector<288x64xf32>
    %20 = tpu.matmul %17, %18, %cst_24 {dimension_numbers = #tpu.dot_dimension_numbers<[1], [0], [0], [1], [0, 0, 1, 1], [], []>} : vector<288x3xbf16>, vector<3x64xbf16>, vector<288x64xf32> -> vector<288x64xf32>
    %21 = arith.addf %19, %20 : vector<288x64xf32>
    %c0_25 = arith.constant 0 : index
    %c0_26 = arith.constant 0 : index
    %22 = vector.load %arg5[%c0_25, %c0_26] : memref<288x64xf32, #tpu.memory_space<vmem>>, vector<288x64xf32>
    tpu.vector_store %arg5[%c0_25, %c0_26], %21 {strides = array<i32>} : memref<288x64xf32, #tpu.memory_space<vmem>>, vector<288x64xf32>,
    %c0_27 = arith.constant 0 : index
    %c18 = arith.constant 18 : index
    %c0_28 = arith.constant 0 : index
    %23 = vector.load %arg1[%c0_27, %c18, %c0_28] : memref<1x342x3xbf16, #tpu.memory_space<vmem>>, vector<1x288x3xbf16>
    %24 = vector.shape_cast %23 : vector<1x288x3xbf16> to vector<288x3xbf16>
    %c9 = arith.constant 9 : index
    %c0_29 = arith.constant 0 : index
    %25 = vector.load %arg2[%c9, %c0_29] : memref<27x64xbf16, #tpu.memory_space<vmem>>, vector<3x64xbf16>
    %c0_30 = arith.constant 0 : index
    %c0_31 = arith.constant 0 : index
    %26 = vector.load %arg5[%c0_30, %c0_31] : memref<288x64xf32, #tpu.memory_space<vmem>>, vector<288x64xf32>
    %cst_32 = arith.constant dense<0.000000e+00> : vector<288x64xf32>
    %27 = tpu.matmul %24, %25, %cst_32 {dimension_numbers = #tpu.dot_dimension_numbers<[1], [0], [0], [1], [0, 0, 1, 1], [], []>} : vector<288x3xbf16>, vector<3x64xbf16>, vector<288x64xf32> -> vector<288x64xf32>
    %28 = arith.addf %26, %27 : vector<288x64xf32>
    %c0_33 = arith.constant 0 : index
    %c0_34 = arith.constant 0 : index
    %29 = vector.load %arg5[%c0_33, %c0_34] : memref<288x64xf32, #tpu.memory_space<vmem>>, vector<288x64xf32>
    tpu.vector_store %arg5[%c0_33, %c0_34], %28 {strides = array<i32>} : memref<288x64xf32, #tpu.memory_space<vmem>>, vector<288x64xf32>,
    %c0_35 = arith.constant 0 : index
    %c19 = arith.constant 19 : index
    %c0_36 = arith.constant 0 : index
    %30 = vector.load %arg1[%c0_35, %c19, %c0_36] : memref<1x342x3xbf16, #tpu.memory_space<vmem>>, vector<1x288x3xbf16>
    %31 = vector.shape_cast %30 : vector<1x288x3xbf16> to vector<288x3xbf16>
    %c12 = arith.constant 12 : index
    %c0_37 = arith.constant 0 : index
    %32 = vector.load %arg2[%c12, %c0_37] : memref<27x64xbf16, #tpu.memory_space<vmem>>, vector<3x64xbf16>
    %c0_38 = arith.constant 0 : index
    %c0_39 = arith.constant 0 : index
    %33 = vector.load %arg5[%c0_38, %c0_39] : memref<288x64xf32, #tpu.memory_space<vmem>>, vector<288x64xf32>
    %cst_40 = arith.constant dense<0.000000e+00> : vector<288x64xf32>
    %34 = tpu.matmul %31, %32, %cst_40 {dimension_numbers = #tpu.dot_dimension_numbers<[1], [0], [0], [1], [0, 0, 1, 1], [], []>} : vector<288x3xbf16>, vector<3x64xbf16>, vector<288x64xf32> -> vector<288x64xf32>
    %35 = arith.addf %33, %34 : vector<288x64xf32>
    %c0_41 = arith.constant 0 : index
    %c0_42 = arith.constant 0 : index
    %36 = vector.load %arg5[%c0_41, %c0_42] : memref<288x64xf32, #tpu.memory_space<vmem>>, vector<288x64xf32>
    tpu.vector_store %arg5[%c0_41, %c0_42], %35 {strides = array<i32>} : memref<288x64xf32, #tpu.memory_space<vmem>>, vector<288x64xf32>,
    %c0_43 = arith.constant 0 : index
    %c20 = arith.constant 20 : index
    %c0_44 = arith.constant 0 : index
    %37 = vector.load %arg1[%c0_43, %c20, %c0_44] : memref<1x342x3xbf16, #tpu.memory_space<vmem>>, vector<1x288x3xbf16>
    %38 = vector.shape_cast %37 : vector<1x288x3xbf16> to vector<288x3xbf16>
    %c15 = arith.constant 15 : index
    %c0_45 = arith.constant 0 : index
    %39 = vector.load %arg2[%c15, %c0_45] : memref<27x64xbf16, #tpu.memory_space<vmem>>, vector<3x64xbf16>
    %c0_46 = arith.constant 0 : index
    %c0_47 = arith.constant 0 : index
    %40 = vector.load %arg5[%c0_46, %c0_47] : memref<288x64xf32, #tpu.memory_space<vmem>>, vector<288x64xf32>
    %cst_48 = arith.constant dense<0.000000e+00> : vector<288x64xf32>
    %41 = tpu.matmul %38, %39, %cst_48 {dimension_numbers = #tpu.dot_dimension_numbers<[1], [0], [0], [1], [0, 0, 1, 1], [], []>} : vector<288x3xbf16>, vector<3x64xbf16>, vector<288x64xf32> -> vector<288x64xf32>
    %42 = arith.addf %40, %41 : vector<288x64xf32>
    %c0_49 = arith.constant 0 : index
    %c0_50 = arith.constant 0 : index
    %43 = vector.load %arg5[%c0_49, %c0_50] : memref<288x64xf32, #tpu.memory_space<vmem>>, vector<288x64xf32>
    tpu.vector_store %arg5[%c0_49, %c0_50], %42 {strides = array<i32>} : memref<288x64xf32, #tpu.memory_space<vmem>>, vector<288x64xf32>,
    %c0_51 = arith.constant 0 : index
    %c36 = arith.constant 36 : index
    %c0_52 = arith.constant 0 : index
    %44 = vector.load %arg1[%c0_51, %c36, %c0_52] : memref<1x342x3xbf16, #tpu.memory_space<vmem>>, vector<1x288x3xbf16>
    %45 = vector.shape_cast %44 : vector<1x288x3xbf16> to vector<288x3xbf16>
    %c18_53 = arith.constant 18 : index
    %c0_54 = arith.constant 0 : index
    %46 = vector.load %arg2[%c18_53, %c0_54] : memref<27x64xbf16, #tpu.memory_space<vmem>>, vector<3x64xbf16>
    %c0_55 = arith.constant 0 : index
    %c0_56 = arith.constant 0 : index
    %47 = vector.load %arg5[%c0_55, %c0_56] : memref<288x64xf32, #tpu.memory_space<vmem>>, vector<288x64xf32>
    %cst_57 = arith.constant dense<0.000000e+00> : vector<288x64xf32>
    %48 = tpu.matmul %45, %46, %cst_57 {dimension_numbers = #tpu.dot_dimension_numbers<[1], [0], [0], [1], [0, 0, 1, 1], [], []>} : vector<288x3xbf16>, vector<3x64xbf16>, vector<288x64xf32> -> vector<288x64xf32>
    %49 = arith.addf %47, %48 : vector<288x64xf32>
    %c0_58 = arith.constant 0 : index
    %c0_59 = arith.constant 0 : index
    %50 = vector.load %arg5[%c0_58, %c0_59] : memref<288x64xf32, #tpu.memory_space<vmem>>, vector<288x64xf32>
    tpu.vector_store %arg5[%c0_58, %c0_59], %49 {strides = array<i32>} : memref<288x64xf32, #tpu.memory_space<vmem>>, vector<288x64xf32>,
    %c0_60 = arith.constant 0 : index
    %c37 = arith.constant 37 : index
    %c0_61 = arith.constant 0 : index
    %51 = vector.load %arg1[%c0_60, %c37, %c0_61] : memref<1x342x3xbf16, #tpu.memory_space<vmem>>, vector<1x288x3xbf16>
    %52 = vector.shape_cast %51 : vector<1x288x3xbf16> to vector<288x3xbf16>
    %c21 = arith.constant 21 : index
    %c0_62 = arith.constant 0 : index
    %53 = vector.load %arg2[%c21, %c0_62] : memref<27x64xbf16, #tpu.memory_space<vmem>>, vector<3x64xbf16>
    %c0_63 = arith.constant 0 : index
    %c0_64 = arith.constant 0 : index
    %54 = vector.load %arg5[%c0_63, %c0_64] : memref<288x64xf32, #tpu.memory_space<vmem>>, vector<288x64xf32>
    %cst_65 = arith.constant dense<0.000000e+00> : vector<288x64xf32>
    %55 = tpu.matmul %52, %53, %cst_65 {dimension_numbers = #tpu.dot_dimension_numbers<[1], [0], [0], [1], [0, 0, 1, 1], [], []>} : vector<288x3xbf16>, vector<3x64xbf16>, vector<288x64xf32> -> vector<288x64xf32>
    %56 = arith.addf %54, %55 : vector<288x64xf32>
    %c0_66 = arith.constant 0 : index
    %c0_67 = arith.constant 0 : index
    %57 = vector.load %arg5[%c0_66, %c0_67] : memref<288x64xf32, #tpu.memory_space<vmem>>, vector<288x64xf32>
    tpu.vector_store %arg5[%c0_66, %c0_67], %56 {strides = array<i32>} : memref<288x64xf32, #tpu.memory_space<vmem>>, vector<288x64xf32>,
    %c0_68 = arith.constant 0 : index
    %c38 = arith.constant 38 : index
    %c0_69 = arith.constant 0 : index
    %58 = vector.load %arg1[%c0_68, %c38, %c0_69] : memref<1x342x3xbf16, #tpu.memory_space<vmem>>, vector<1x288x3xbf16>
    %59 = vector.shape_cast %58 : vector<1x288x3xbf16> to vector<288x3xbf16>
    %c24 = arith.constant 24 : index
    %c0_70 = arith.constant 0 : index
    %60 = vector.load %arg2[%c24, %c0_70] : memref<27x64xbf16, #tpu.memory_space<vmem>>, vector<3x64xbf16>
    %c0_71 = arith.constant 0 : index
    %c0_72 = arith.constant 0 : index
    %61 = vector.load %arg5[%c0_71, %c0_72] : memref<288x64xf32, #tpu.memory_space<vmem>>, vector<288x64xf32>
    %cst_73 = arith.constant dense<0.000000e+00> : vector<288x64xf32>
    %62 = tpu.matmul %59, %60, %cst_73 {dimension_numbers = #tpu.dot_dimension_numbers<[1], [0], [0], [1], [0, 0, 1, 1], [], []>} : vector<288x3xbf16>, vector<3x64xbf16>, vector<288x64xf32> -> vector<288x64xf32>
    %63 = arith.addf %61, %62 : vector<288x64xf32>
    %c0_74 = arith.constant 0 : index
    %c0_75 = arith.constant 0 : index
    %64 = vector.load %arg5[%c0_74, %c0_75] : memref<288x64xf32, #tpu.memory_space<vmem>>, vector<288x64xf32>
    tpu.vector_store %arg5[%c0_74, %c0_75], %63 {strides = array<i32>} : memref<288x64xf32, #tpu.memory_space<vmem>>, vector<288x64xf32>,
    %c0_76 = arith.constant 0 : index
    %c0_77 = arith.constant 0 : index
    %65 = vector.load %arg5[%c0_76, %c0_77] : memref<288x64xf32, #tpu.memory_space<vmem>>, vector<288x64xf32>
    %c0_78 = arith.constant 0 : index
    %c0_79 = arith.constant 0 : index
    %66 = vector.load %arg3[%c0_78, %c0_79] : memref<1x64xf32, #tpu.memory_space<vmem>>, vector<1x64xf32>
    %67 = vector.broadcast %66 : vector<1x64xf32> to vector<288x64xf32>
    %68 = arith.addf %65, %67 : vector<288x64xf32>
    %cst_80 = arith.constant 0.000000e+00 : f32
    %69 = vector.broadcast %cst_80 : f32 to vector<288x64xf32>
    %70 = arith.maximumf %68, %69 : vector<288x64xf32>
    %c0_81 = arith.constant 0 : index
    %c0_82 = arith.constant 0 : index
    %c0_83 = arith.constant 0 : index
    %71 = vector.load %arg4[%c0_81, %c0_82, %c0_83] : memref<1x288x64xf32, #tpu.memory_space<vmem>>, vector<1x288x64xf32>
    %72 = vector.shape_cast %71 : vector<1x288x64xf32> to vector<288x64xf32>
    %73 = vector.shape_cast %70 : vector<288x64xf32> to vector<1x288x64xf32>
    tpu.vector_store %arg4[%c0_81, %c0_82, %c0_83], %73 {strides = array<i32>} : memref<1x288x64xf32, #tpu.memory_space<vmem>>, vector<1x288x64xf32>,
    return
  }
  func.func @transform_0(%arg0: i32) -> (i32, i32, i32) {
    %c0_i32 = arith.constant 0 : i32
    %c0_i32_0 = arith.constant 0 : i32
    %c0_i32_1 = arith.constant 0 : i32
    return %arg0, %c0_i32, %c0_i32_0 : i32, i32, i32
  }
  func.func @transform_1(%arg0: i32) -> (i32, i32) {
    %c0_i32 = arith.constant 0 : i32
    %c0_i32_0 = arith.constant 0 : i32
    %c0_i32_1 = arith.constant 0 : i32
    return %c0_i32, %c0_i32_0 : i32, i32
  }
  func.func @transform_2(%arg0: i32) -> (i32, i32) {
    %c0_i32 = arith.constant 0 : i32
    %c0_i32_0 = arith.constant 0 : i32
    %c0_i32_1 = arith.constant 0 : i32
    return %c0_i32, %c0_i32_0 : i32, i32
  }
  func.func @transform_3(%arg0: i32) -> (i32, i32, i32) {
    %c0_i32 = arith.constant 0 : i32
    %c0_i32_0 = arith.constant 0 : i32
    %c0_i32_1 = arith.constant 0 : i32
    return %arg0, %c0_i32, %c0_i32_0 : i32, i32, i32
  }
}

</mosaic_0001>

<llo_original>
// kernel: tpu_custom_call.1
$region0: #{tpu_custom_call.1}
  #allocation0 [shape = 'u32[]', space=smem, size = 0x4, offset = 0x4, fixed_abs, tag = 'smem constant byte address 0x4 - core index']
  #allocation1 [shape = 'u32[144,128]{1,0:T(1,128)}', space=vmem, size = 0x12000, scoped, tag = 'internal scratch']
  #allocation2 [shape = 'f32[288,64]{1,0:T(8,128)}', space=vmem, size = 0x24000, scoped, tag = 'scratch operand']
  %s0 = inlined_call_operand.vmem [shape: bf16[1,342,3], index: 0, kind: input, shape index: {}]
  %s1 = inlined_call_operand.vmem [shape: bf16[27,64], index: 1, kind: input, shape index: {}]
  %s2 = inlined_call_operand.vmem [shape: f32[1,64], index: 2, kind: input, shape index: {}]
  %s3 = inlined_call_operand.vmem [shape: f32[1,288,64], index: 3, kind: output, shape index: {}]
  %s4 = sld [smem:[#allocation0]]
  $region22: #{tpu_custom_call.1} parent=0
    _
  %s6 = ssub.s32 1, %s4
  %s7 = scalar_select 0, %s6, %s4
  // Predicated region
  $region2: #{tpu_custom_call.1} parent=0 // pred_check
    _
  $region3: #{tpu_custom_call.1} parent=0 // pred_check_branch
    %9 = sbr.rel (0) target = $region5
  $region4: #{tpu_custom_call.1} parent=0 // pred_region
    _
  $region5: #{tpu_custom_call.1} parent=0 // pred_fallthru
    _
  // Predicated region
  $region6: #{tpu_custom_call.1} parent=0 // pred_check
    _
  $region7: #{tpu_custom_call.1} parent=0 // pred_check_branch
    %11 = sbr.rel (0) target = $region9
  $region8: #{tpu_custom_call.1} parent=0 // pred_region
    _
  $region9: #{tpu_custom_call.1} parent=0 // pred_fallthru
    _
  // Predicated region
  $region10: #{tpu_custom_call.1} parent=0 // pred_check
    _
  $region11: #{tpu_custom_call.1} parent=0 // pred_check_branch
    %13 = sbr.rel (0) target = $region13
  $region12: #{tpu_custom_call.1} parent=0 // pred_region
    _
  $region13: #{tpu_custom_call.1} parent=0 // pred_fallthru
    _
  %vm15 = vcmask 523264
  %16 = vst.msk [vmem:[#allocation2] sm:$0xff] %vm15, 0.0
  %17 = vst.msk [vmem:[#allocation2 + $0x8] sm:$0xff] %vm15, 0.0
  %18 = vst.msk [vmem:[#allocation2 + $0x10] sm:$0xff] %vm15, 0.0
  %19 = vst.msk [vmem:[#allocation2 + $0x18] sm:$0xff] %vm15, 0.0
  %20 = vst.msk [vmem:[#allocation2 + $0x20] sm:$0xff] %vm15, 0.0
  %21 = vst.msk [vmem:[#allocation2 + $0x28] sm:$0xff] %vm15, 0.0
  %22 = vst.msk [vmem:[#allocation2 + $0x30] sm:$0xff] %vm15, 0.0
  %23 = vst.msk [vmem:[#allocation2 + $0x38] sm:$0xff] %vm15, 0.0
  %24 = vst.msk [vmem:[#allocation2 + $0x40] sm:$0xff] %vm15, 0.0
  %25 = vst.msk [vmem:[#allocation2 + $0x48] sm:$0xff] %vm15, 0.0
  %26 = vst.msk [vmem:[#allocation2 + $0x50] sm:$0xff] %vm15, 0.0
  %27 = vst.msk [vmem:[#allocation2 + $0x58] sm:$0xff] %vm15, 0.0
  %28 = vst.msk [vmem:[#allocation2 + $0x60] sm:$0xff] %vm15, 0.0
  %29 = vst.msk [vmem:[#allocation2 + $0x68] sm:$0xff] %vm15, 0.0
  %30 = vst.msk [vmem:[#allocation2 + $0x70] sm:$0xff] %vm15, 0.0
  %31 = vst.msk [vmem:[#allocation2 + $0x78] sm:$0xff] %vm15, 0.0
  %32 = vst.msk [vmem:[#allocation2 + $0x80] sm:$0xff] %vm15, 0.0
  %33 = vst.msk [vmem:[#allocation2 + $0x88] sm:$0xff] %vm15, 0.0
  %34 = vst.msk [vmem:[#allocation2 + $0x90] sm:$0xff] %vm15, 0.0
  %35 = vst.msk [vmem:[#allocation2 + $0x98] sm:$0xff] %vm15, 0.0
  %36 = vst.msk [vmem:[#allocation2 + $0xa0] sm:$0xff] %vm15, 0.0
  %37 = vst.msk [vmem:[#allocation2 + $0xa8] sm:$0xff] %vm15, 0.0
  %38 = vst.msk [vmem:[#allocation2 + $0xb0] sm:$0xff] %vm15, 0.0
  %39 = vst.msk [vmem:[#allocation2 + $0xb8] sm:$0xff] %vm15, 0.0
  %40 = vst.msk [vmem:[#allocation2 + $0xc0] sm:$0xff] %vm15, 0.0
  %41 = vst.msk [vmem:[#allocation2 + $0xc8] sm:$0xff] %vm15, 0.0
  %42 = vst.msk [vmem:[#allocation2 + $0xd0] sm:$0xff] %vm15, 0.0
  %43 = vst.msk [vmem:[#allocation2 + $0xd8] sm:$0xff] %vm15, 0.0
  %44 = vst.msk [vmem:[#allocation2 + $0xe0] sm:$0xff] %vm15, 0.0
  %45 = vst.msk [vmem:[#allocation2 + $0xe8] sm:$0xff] %vm15, 0.0
  %46 = vst.msk [vmem:[#allocation2 + $0xf0] sm:$0xff] %vm15, 0.0
  %47 = vst.msk [vmem:[#allocation2 + $0xf8] sm:$0xff] %vm15, 0.0
  %48 = vst.msk [vmem:[#allocation2 + $0x100] sm:$0xff] %vm15, 0.0
  %49 = vst.msk [vmem:[#allocation2 + $0x108] sm:$0xff] %vm15, 0.0
  %50 = vst.msk [vmem:[#allocation2 + $0x110] sm:$0xff] %vm15, 0.0
  %51 = vst.msk [vmem:[#allocation2 + $0x118] sm:$0xff] %vm15, 0.0
  %v52 = vld [vmem:[%s0] sm:$0xf]
  %v53 = vld [vmem:[%s0 + $0x4] sm:$0xf]
  %v54 = vld [vmem:[%s0 + $0x8] sm:$0xf]
  %v55 = vld [vmem:[%s0 + $0xc] sm:$0xf]
  %v56 = vld [vmem:[%s0 + $0x10] sm:$0xf]
  %v57 = vld [vmem:[%s0 + $0x14] sm:$0xf]
  %v58 = vld [vmem:[%s0 + $0x18] sm:$0xf]
  %v59 = vld [vmem:[%s0 + $0x1c] sm:$0xf]
  %v60 = vld [vmem:[%s0 + $0x20] sm:$0xf]
  %v61 = vld [vmem:[%s0 + $0x24] sm:$0xf]
  %v62 = vld [vmem:[%s0 + $0x28] sm:$0xf]
  %v63 = vld [vmem:[%s0 + $0x2c] sm:$0xf]
  %v64 = vld [vmem:[%s0 + $0x30] sm:$0xf]
  %v65 = vld [vmem:[%s0 + $0x34] sm:$0xf]
  %v66 = vld [vmem:[%s0 + $0x38] sm:$0xf]
  %v67 = vld [vmem:[%s0 + $0x3c] sm:$0xf]
  %v68 = vld [vmem:[%s0 + $0x40] sm:$0xf]
  %v69 = vld [vmem:[%s0 + $0x44] sm:$0xf]
  %v70 = vld [vmem:[%s0 + $0x48] sm:$0xf]
  %v71 = vld [vmem:[%s0 + $0x4c] sm:$0xf]
  %v72 = vld [vmem:[%s0 + $0x50] sm:$0xf]
  %v73 = vld [vmem:[%s0 + $0x54] sm:$0xf]
  %v74 = vld [vmem:[%s0 + $0x58] sm:$0xf]
  %v75 = vld [vmem:[%s0 + $0x5c] sm:$0xf]
  %v76 = vld [vmem:[%s0 + $0x60] sm:$0xf]
  %v77 = vld [vmem:[%s0 + $0x64] sm:$0xf]
  %v78 = vld [vmem:[%s0 + $0x68] sm:$0xf]
  %v79 = vld [vmem:[%s0 + $0x6c] sm:$0xf]
  %v80 = vld [vmem:[%s0 + $0x70] sm:$0xf]
  %v81 = vld [vmem:[%s0 + $0x74] sm:$0xf]
  %v82 = vld [vmem:[%s0 + $0x78] sm:$0xf]
  %v83 = vld [vmem:[%s0 + $0x7c] sm:$0xf]
  %v84 = vld [vmem:[%s0 + $0x80] sm:$0xf]
  %v85 = vld [vmem:[%s0 + $0x84] sm:$0xf]
  %v86 = vld [vmem:[%s0 + $0x88] sm:$0xf]
  %v87 = vld [vmem:[%s0 + $0x8c] sm:$0xf]
  %v88 = vld [vmem:[%s1] sm:$0x3]
  %v89 = vld [vmem:[#allocation2] sm:$0xff]
  %v90 = vld [vmem:[#allocation2 + $0x8] sm:$0xff]
  %v91 = vld [vmem:[#allocation2 + $0x10] sm:$0xff]
  %v92 = vld [vmem:[#allocation2 + $0x18] sm:$0xff]
  %v93 = vld [vmem:[#allocation2 + $0x20] sm:$0xff]
  %v94 = vld [vmem:[#allocation2 + $0x28] sm:$0xff]
  %v95 = vld [vmem:[#allocation2 + $0x30] sm:$0xff]
  %v96 = vld [vmem:[#allocation2 + $0x38] sm:$0xff]
  %v97 = vld [vmem:[#allocation2 + $0x40] sm:$0xff]
  %v98 = vld [vmem:[#allocation2 + $0x48] sm:$0xff]
  %v99 = vld [vmem:[#allocation2 + $0x50] sm:$0xff]
  %v100 = vld [vmem:[#allocation2 + $0x58] sm:$0xff]
  %v101 = vld [vmem:[#allocation2 + $0x60] sm:$0xff]
  %v102 = vld [vmem:[#allocation2 + $0x68] sm:$0xff]
  %v103 = vld [vmem:[#allocation2 + $0x70] sm:$0xff]
  %v104 = vld [vmem:[#allocation2 + $0x78] sm:$0xff]
  %v105 = vld [vmem:[#allocation2 + $0x80] sm:$0xff]
  %v106 = vld [vmem:[#allocation2 + $0x88] sm:$0xff]
  %v107 = vld [vmem:[#allocation2 + $0x90] sm:$0xff]
  %v108 = vld [vmem:[#allocation2 + $0x98] sm:$0xff]
  %v109 = vld [vmem:[#allocation2 + $0xa0] sm:$0xff]
  %v110 = vld [vmem:[#allocation2 + $0xa8] sm:$0xff]
  %v111 = vld [vmem:[#allocation2 + $0xb0] sm:$0xff]
  %v112 = vld [vmem:[#allocation2 + $0xb8] sm:$0xff]
  %v113 = vld [vmem:[#allocation2 + $0xc0] sm:$0xff]
  %v114 = vld [vmem:[#allocation2 + $0xc8] sm:$0xff]
  %v115 = vld [vmem:[#allocation2 + $0xd0] sm:$0xff]
  %v116 = vld [vmem:[#allocation2 + $0xd8] sm:$0xff]
  %v117 = vld [vmem:[#allocation2 + $0xe0] sm:$0xff]
  %v118 = vld [vmem:[#allocation2 + $0xe8] sm:$0xff]
  %v119 = vld [vmem:[#allocation2 + $0xf0] sm:$0xff]
  %v120 = vld [vmem:[#allocation2 + $0xf8] sm:$0xff]
  %v121 = vld [vmem:[#allocation2 + $0x100] sm:$0xff]
  %v122 = vld [vmem:[#allocation2 + $0x108] sm:$0xff]
  %v123 = vld [vmem:[#allocation2 + $0x110] sm:$0xff]
  %v124 = vld [vmem:[#allocation2 + $0x118] sm:$0xff]
  %v161 = vunpack.c.l.b16 %v52
  %v162 = vunpack.c.l.b16 %v53
  %v163 = vunpack.c.l.b16 %v54
  %v164 = vunpack.c.l.b16 %v55
  %v165 = vunpack.c.l.b16 %v56
  %v166 = vunpack.c.l.b16 %v57
  %v167 = vunpack.c.l.b16 %v58
  %v168 = vunpack.c.l.b16 %v59
  %v169 = vunpack.c.l.b16 %v60
  %v170 = vunpack.c.l.b16 %v61
  %v171 = vunpack.c.l.b16 %v62
  %v172 = vunpack.c.l.b16 %v63
  %v173 = vunpack.c.l.b16 %v64
  %v174 = vunpack.c.l.b16 %v65
  %v175 = vunpack.c.l.b16 %v66
  %v176 = vunpack.c.l.b16 %v67
  %v177 = vunpack.c.l.b16 %v68
  %v178 = vunpack.c.l.b16 %v69
  %v179 = vunpack.c.l.b16 %v70
  %v180 = vunpack.c.l.b16 %v71
  %v181 = vunpack.c.l.b16 %v72
  %v182 = vunpack.c.l.b16 %v73
  %v183 = vunpack.c.l.b16 %v74
  %v184 = vunpack.c.l.b16 %v75
  %v185 = vunpack.c.l.b16 %v76
  %v186 = vunpack.c.l.b16 %v77
  %v187 = vunpack.c.l.b16 %v78
  %v188 = vunpack.c.l.b16 %v79
  %v189 = vunpack.c.l.b16 %v80
  %v190 = vunpack.c.l.b16 %v81
  %v191 = vunpack.c.l.b16 %v82
  %v192 = vunpack.c.l.b16 %v83
  %v193 = vunpack.c.l.b16 %v84
  %v194 = vunpack.c.l.b16 %v85
  %v195 = vunpack.c.l.b16 %v86
  %v196 = vunpack.c.l.b16 %v87
  %v197 = vpack.c.b16 %v162, %v161
  %v198 = vpack.c.b16 %v164, %v163
  %v199 = vpack.c.b16 %v166, %v165
  %v200 = vpack.c.b16 %v168, %v167
  %v201 = vpack.c.b16 %v170, %v169
  %v202 = vpack.c.b16 %v172, %v171
  %v203 = vpack.c.b16 %v174, %v173
  %v204 = vpack.c.b16 %v176, %v175
  %v205 = vpack.c.b16 %v178, %v177
  %v206 = vpack.c.b16 %v180, %v179
  %v207 = vpack.c.b16 %v182, %v181
  %v208 = vpack.c.b16 %v184, %v183
  %v209 = vpack.c.b16 %v186, %v185
  %v210 = vpack.c.b16 %v188, %v187
  %v211 = vpack.c.b16 %v190, %v189
  %v212 = vpack.c.b16 %v192, %v191
  %v213 = vpack.c.b16 %v194, %v193
  %v214 = vpack.c.b16 %v196, %v195
  %vm215 = vcmask 23552
  %v217 = vsel %vm215, %v197, 0
  %v220 = vsel %vm215, %v198, 0
  %v223 = vsel %vm215, %v199, 0
  %v226 = vsel %vm215, %v200, 0
  %v229 = vsel %vm215, %v201, 0
  %v232 = vsel %vm215, %v202, 0
  %v235 = vsel %vm215, %v203, 0
  %v238 = vsel %vm215, %v204, 0
  %v241 = vsel %vm215, %v205, 0
  %v244 = vsel %vm215, %v206, 0
  %v247 = vsel %vm215, %v207, 0
  %v250 = vsel %vm215, %v208, 0
  %v253 = vsel %vm215, %v209, 0
  %v256 = vsel %vm215, %v210, 0
  %v259 = vsel %vm215, %v211, 0
  %v262 = vsel %vm215, %v212, 0
  %v265 = vsel %vm215, %v213, 0
  %v268 = vsel %vm215, %v214, 0
  %vm270 = vcmask 1040384
  %vm271 = vcmask 1041408
  %v272 = vsel %vm270, 4294967295, 65535
  %v273 = vsel %vm271, %v272, 0
  %v275 = vand.u32 %v88, %v273
  %277 = vmatprep.subr.bf16.mxu0 0
  %278 = vmatpush1.bf16.msra.mxu0 0
  %279 = vmatprep.subr.bf16.mxu0 0
  %280 = vmatpush1.bf16.msra.mxu0 0
  %281 = vmatprep.subr.bf16.mxu0 0
  %282 = vmatpush1.bf16.msra.mxu0 0
  %283 = vmatprep.subr.bf16.mxu0 0
  %284 = vmatpush1.bf16.msra.mxu0 0
  %285 = vmatprep.subr.bf16.mxu0 0
  %286 = vmatpush1.bf16.msra.mxu0 0
  %287 = vmatprep.subr.bf16.mxu0 0
  %288 = vmatpush1.bf16.msra.mxu0 0
  %289 = vmatprep.subr.bf16.mxu0 0
  %290 = vmatpush1.bf16.msra.mxu0 0
  %291 = vmatprep.subr.bf16.mxu0 0
  %292 = vmatpush1.bf16.msra.mxu0 %v275
  %293 = vmatprep.subr.bf16.mxu0 0
  %294 = vmatpush2.bf16.msra.mxu0 0
  %295 = vmatprep.subr.bf16.mxu0 0
  %296 = vmatpush2.bf16.msra.mxu0 0
  %297 = vmatprep.subr.bf16.mxu0 0
  %298 = vmatpush2.bf16.msra.mxu0 0
  %299 = vmatprep.subr.bf16.mxu0 0
  %300 = vmatpush2.bf16.msra.mxu0 0
  %301 = vmatprep.subr.bf16.mxu0 0
  %302 = vmatpush2.bf16.msra.mxu0 0
  %303 = vmatprep.subr.bf16.mxu0 0
  %304 = vmatpush2.bf16.msra.mxu0 0
  %305 = vmatprep.subr.bf16.mxu0 0
  %306 = vmatpush2.bf16.msra.mxu0 0
  %307 = vmatprep.subr.bf16.mxu0 0
  %308 = vmatpush2.bf16.msra.mxu0 0
  %309 = vmatprep.mubr.bf16.mxu0 0
  %310 = vmatmul.mubr.bf16.gmra.mxu0 %v217
  %v311 = vpop.f32.mrf.mxu0
  %v312 = vadd.f32 0.0, %v311
  %v313 = vpop.f32.mrf.mxu0
  %v314 = vpop.f32.mrf.mxu0
  %v315 = vadd.f32 0.0, %v314
  %v316 = vpop.f32.mrf.mxu0
  %317 = vmatprep.mubr.bf16.mxu0 0
  %318 = vmatmul.mubr.bf16.gmra.mxu0 %v220
  %v319 = vpop.f32.mrf.mxu0
  %v320 = vadd.f32 0.0, %v319
  %v321 = vpop.f32.mrf.mxu0
  %v322 = vpop.f32.mrf.mxu0
  %v323 = vadd.f32 0.0, %v322
  %v324 = vpop.f32.mrf.mxu0
  %325 = vmatprep.mubr.bf16.mxu0 0
  %326 = vmatmul.mubr.bf16.gmra.mxu0 %v223
  %v327 = vpop.f32.mrf.mxu0
  %v328 = vadd.f32 0.0, %v327
  %v329 = vpop.f32.mrf.mxu0
  %v330 = vpop.f32.mrf.mxu0
  %v331 = vadd.f32 0.0, %v330
  %v332 = vpop.f32.mrf.mxu0
  %333 = vmatprep.mubr.bf16.mxu0 0
  %334 = vmatmul.mubr.bf16.gmra.mxu0 %v226
  %v335 = vpop.f32.mrf.mxu0
  %v336 = vadd.f32 0.0, %v335
  %v337 = vpop.f32.mrf.mxu0
  %v338 = vpop.f32.mrf.mxu0
  %v339 = vadd.f32 0.0, %v338
  %v340 = vpop.f32.mrf.mxu0
  %341 = vmatprep.mubr.bf16.mxu0 0
  %342 = vmatmul.mubr.bf16.gmra.mxu0 %v229
  %v343 = vpop.f32.mrf.mxu0
  %v344 = vadd.f32 0.0, %v343
  %v345 = vpop.f32.mrf.mxu0
  %v346 = vpop.f32.mrf.mxu0
  %v347 = vadd.f32 0.0, %v346
  %v348 = vpop.f32.mrf.mxu0
  %349 = vmatprep.mubr.bf16.mxu0 0
  %350 = vmatmul.mubr.bf16.gmra.mxu0 %v232
  %v351 = vpop.f32.mrf.mxu0
  %v352 = vadd.f32 0.0, %v351
  %v353 = vpop.f32.mrf.mxu0
  %v354 = vpop.f32.mrf.mxu0
  %v355 = vadd.f32 0.0, %v354
  %v356 = vpop.f32.mrf.mxu0
  %357 = vmatprep.mubr.bf16.mxu0 0
  %358 = vmatmul.mubr.bf16.gmra.mxu0 %v235
  %v359 = vpop.f32.mrf.mxu0
  %v360 = vadd.f32 0.0, %v359
  %v361 = vpop.f32.mrf.mxu0
  %v362 = vpop.f32.mrf.mxu0
  %v363 = vadd.f32 0.0, %v362
  %v364 = vpop.f32.mrf.mxu0
  %365 = vmatprep.mubr.bf16.mxu0 0
  %366 = vmatmul.mubr.bf16.gmra.mxu0 %v238
  %v367 = vpop.f32.mrf.mxu0
  %v368 = vadd.f32 0.0, %v367
  %v369 = vpop.f32.mrf.mxu0
  %v370 = vpop.f32.mrf.mxu0
  %v371 = vadd.f32 0.0, %v370
  %v372 = vpop.f32.mrf.mxu0
  %373 = vmatprep.mubr.bf16.mxu0 0
  %374 = vmatmul.mubr.bf16.gmra.mxu0 %v241
  %v375 = vpop.f32.mrf.mxu0
  %v376 = vadd.f32 0.0, %v375
  %v377 = vpop.f32.mrf.mxu0
  %v378 = vpop.f32.mrf.mxu0
  %v379 = vadd.f32 0.0, %v378
  %v380 = vpop.f32.mrf.mxu0
  %381 = vmatprep.mubr.bf16.mxu0 0
  %382 = vmatmul.mubr.bf16.gmra.mxu0 %v244
  %v383 = vpop.f32.mrf.mxu0
  %v384 = vadd.f32 0.0, %v383
  %v385 = vpop.f32.mrf.mxu0
  %v386 = vpop.f32.mrf.mxu0
  %v387 = vadd.f32 0.0, %v386
  %v388 = vpop.f32.mrf.mxu0
  %389 = vmatprep.mubr.bf16.mxu0 0
  %390 = vmatmul.mubr.bf16.gmra.mxu0 %v247
  %v391 = vpop.f32.mrf.mxu0
  %v392 = vadd.f32 0.0, %v391
  %v393 = vpop.f32.mrf.mxu0
  %v394 = vpop.f32.mrf.mxu0
  %v395 = vadd.f32 0.0, %v394
  %v396 = vpop.f32.mrf.mxu0
  %397 = vmatprep.mubr.bf16.mxu0 0
  %398 = vmatmul.mubr.bf16.gmra.mxu0 %v250
  %v399 = vpop.f32.mrf.mxu0
  %v400 = vadd.f32 0.0, %v399
  %v401 = vpop.f32.mrf.mxu0
  %v402 = vpop.f32.mrf.mxu0
  %v403 = vadd.f32 0.0, %v402
  %v404 = vpop.f32.mrf.mxu0
  %405 = vmatprep.mubr.bf16.mxu0 0
  %406 = vmatmul.mubr.bf16.gmra.mxu0 %v253
  %v407 = vpop.f32.mrf.mxu0
  %v408 = vadd.f32 0.0, %v407
  %v409 = vpop.f32.mrf.mxu0
  %v410 = vpop.f32.mrf.mxu0
  %v411 = vadd.f32 0.0, %v410
  %v412 = vpop.f32.mrf.mxu0
  %413 = vmatprep.mubr.bf16.mxu0 0
  %414 = vmatmul.mubr.bf16.gmra.mxu0 %v256
  %v415 = vpop.f32.mrf.mxu0
  %v416 = vadd.f32 0.0, %v415
  %v417 = vpop.f32.mrf.mxu0
  %v418 = vpop.f32.mrf.mxu0
  %v419 = vadd.f32 0.0, %v418
  %v420 = vpop.f32.mrf.mxu0
  %421 = vmatprep.mubr.bf16.mxu0 0
  %422 = vmatmul.mubr.bf16.gmra.mxu0 %v259
  %v423 = vpop.f32.mrf.mxu0
  %v424 = vadd.f32 0.0, %v423
  %v425 = vpop.f32.mrf.mxu0
  %v426 = vpop.f32.mrf.mxu0
  %v427 = vadd.f32 0.0, %v426
  %v428 = vpop.f32.mrf.mxu0
  %429 = vmatprep.mubr.bf16.mxu0 0
  %430 = vmatmul.mubr.bf16.gmra.mxu0 %v262
  %v431 = vpop.f32.mrf.mxu0
  %v432 = vadd.f32 0.0, %v431
  %v433 = vpop.f32.mrf.mxu0
  %v434 = vpop.f32.mrf.mxu0
  %v435 = vadd.f32 0.0, %v434
  %v436 = vpop.f32.mrf.mxu0
  %437 = vmatprep.mubr.bf16.mxu0 0
  %438 = vmatmul.mubr.bf16.gmra.mxu0 %v265
  %v439 = vpop.f32.mrf.mxu0
  %v440 = vadd.f32 0.0, %v439
  %v441 = vpop.f32.mrf.mxu0
  %v442 = vpop.f32.mrf.mxu0
  %v443 = vadd.f32 0.0, %v442
  %v444 = vpop.f32.mrf.mxu0
  %445 = vmatprep.mubr.bf16.mxu0 0
  %446 = vmatmul.mubr.bf16.gmra.mxu0 %v268
  %v447 = vpop.f32.mrf.mxu0
  %v448 = vadd.f32 0.0, %v447
  %v449 = vpop.f32.mrf.mxu0
  %v450 = vpop.f32.mrf.mxu0
  %v451 = vadd.f32 0.0, %v450
  %v452 = vpop.f32.mrf.mxu0
  %453 = vdwg.mxu0
  %v454 = vadd.f32 %v89, %v312
  %v455 = vadd.f32 %v90, %v315
  %v456 = vadd.f32 %v91, %v320
  %v457 = vadd.f32 %v92, %v323
  %v458 = vadd.f32 %v93, %v328
  %v459 = vadd.f32 %v94, %v331
  %v460 = vadd.f32 %v95, %v336
  %v461 = vadd.f32 %v96, %v339
  %v462 = vadd.f32 %v97, %v344
  %v463 = vadd.f32 %v98, %v347
  %v464 = vadd.f32 %v99, %v352
  %v465 = vadd.f32 %v100, %v355
  %v466 = vadd.f32 %v101, %v360
  %v467 = vadd.f32 %v102, %v363
  %v468 = vadd.f32 %v103, %v368
  %v469 = vadd.f32 %v104, %v371
  %v470 = vadd.f32 %v105, %v376
  %v471 = vadd.f32 %v106, %v379
  %v472 = vadd.f32 %v107, %v384
  %v473 = vadd.f32 %v108, %v387
  %v474 = vadd.f32 %v109, %v392
  %v475 = vadd.f32 %v110, %v395
  %v476 = vadd.f32 %v111, %v400
  %v477 = vadd.f32 %v112, %v403
  %v478 = vadd.f32 %v113, %v408
  %v479 = vadd.f32 %v114, %v411
  %v480 = vadd.f32 %v115, %v416
  %v481 = vadd.f32 %v116, %v419
  %v482 = vadd.f32 %v117, %v424
  %v483 = vadd.f32 %v118, %v427
  %v484 = vadd.f32 %v119, %v432
  %v485 = vadd.f32 %v120, %v435
  %v486 = vadd.f32 %v121, %v440
  %v487 = vadd.f32 %v122, %v443
  %v488 = vadd.f32 %v123, %v448
  %v489 = vadd.f32 %v124, %v451
  %490 = vst.msk [vmem:[#allocation2] sm:$0xff] %vm15, %v454
  %491 = vst.msk [vmem:[#allocation2 + $0x8] sm:$0xff] %vm15, %v455
  %492 = vst.msk [vmem:[#allocation2 + $0x10] sm:$0xff] %vm15, %v456
  %493 = vst.msk [vmem:[#allocation2 + $0x18] sm:$0xff] %vm15, %v457
  %494 = vst.msk [vmem:[#allocation2 + $0x20] sm:$0xff] %vm15, %v458
  %495 = vst.msk [vmem:[#allocation2 + $0x28] sm:$0xff] %vm15, %v459
  %496 = vst.msk [vmem:[#allocation2 + $0x30] sm:$0xff] %vm15, %v460
  %497 = vst.msk [vmem:[#allocation2 + $0x38] sm:$0xff] %vm15, %v461
  %498 = vst.msk [vmem:[#allocation2 + $0x40] sm:$0xff] %vm15, %v462
  %499 = vst.msk [vmem:[#allocation2 + $0x48] sm:$0xff] %vm15, %v463
  %500 = vst.msk [vmem:[#allocation2 + $0x50] sm:$0xff] %vm15, %v464
  %501 = vst.msk [vmem:[#allocation2 + $0x58] sm:$0xff] %vm15, %v465
  %502 = vst.msk [vmem:[#allocation2 + $0x60] sm:$0xff] %vm15, %v466
  %503 = vst.msk [vmem:[#allocation2 + $0x68] sm:$0xff] %vm15, %v467
  %504 = vst.msk [vmem:[#allocation2 + $0x70] sm:$0xff] %vm15, %v468
  %505 = vst.msk [vmem:[#allocation2 + $0x78] sm:$0xff] %vm15, %v469
  %506 = vst.msk [vmem:[#allocation2 + $0x80] sm:$0xff] %vm15, %v470
  %507 = vst.msk [vmem:[#allocation2 + $0x88] sm:$0xff] %vm15, %v471
  %508 = vst.msk [vmem:[#allocation2 + $0x90] sm:$0xff] %vm15, %v472
  %509 = vst.msk [vmem:[#allocation2 + $0x98] sm:$0xff] %vm15, %v473
  %510 = vst.msk [vmem:[#allocation2 + $0xa0] sm:$0xff] %vm15, %v474
  %511 = vst.msk [vmem:[#allocation2 + $0xa8] sm:$0xff] %vm15, %v475
  %512 = vst.msk [vmem:[#allocation2 + $0xb0] sm:$0xff] %vm15, %v476
  %513 = vst.msk [vmem:[#allocation2 + $0xb8] sm:$0xff] %vm15, %v477
  %514 = vst.msk [vmem:[#allocation2 + $0xc0] sm:$0xff] %vm15, %v478
  %515 = vst.msk [vmem:[#allocation2 + $0xc8] sm:$0xff] %vm15, %v479
  %516 = vst.msk [vmem:[#allocation2 + $0xd0] sm:$0xff] %vm15, %v480
  %517 = vst.msk [vmem:[#allocation2 + $0xd8] sm:$0xff] %vm15, %v481
  %518 = vst.msk [vmem:[#allocation2 + $0xe0] sm:$0xff] %vm15, %v482
  %519 = vst.msk [vmem:[#allocation2 + $0xe8] sm:$0xff] %vm15, %v483
  %520 = vst.msk [vmem:[#allocation2 + $0xf0] sm:$0xff] %vm15, %v484
  %521 = vst.msk [vmem:[#allocation2 + $0xf8] sm:$0xff] %vm15, %v485
  %522 = vst.msk [vmem:[#allocation2 + $0x100] sm:$0xff] %vm15, %v486
  %523 = vst.msk [vmem:[#allocation2 + $0x108] sm:$0xff] %vm15, %v487
  %524 = vst.msk [vmem:[#allocation2 + $0x110] sm:$0xff] %vm15, %v488
  %525 = vst.msk [vmem:[#allocation2 + $0x118] sm:$0xff] %vm15, %v489
  %v526 = vld [vmem:[%s0] sm:$0xf]
  %v527 = vld [vmem:[%s0 + $0x4] sm:$0xf]
  %v528 = vld [vmem:[%s0 + $0x8] sm:$0xf]
  %v529 = vld [vmem:[%s0 + $0xc] sm:$0xf]
  %v530 = vld [vmem:[%s0 + $0x10] sm:$0xf]
  %v531 = vld [vmem:[%s0 + $0x14] sm:$0xf]
  %v532 = vld [vmem:[%s0 + $0x18] sm:$0xf]
  %v533 = vld [vmem:[%s0 + $0x1c] sm:$0xf]
  %v534 = vld [vmem:[%s0 + $0x20] sm:$0xf]
  %v535 = vld [vmem:[%s0 + $0x24] sm:$0xf]
  %v536 = vld [vmem:[%s0 + $0x28] sm:$0xf]
  %v537 = vld [vmem:[%s0 + $0x2c] sm:$0xf]
  %v538 = vld [vmem:[%s0 + $0x30] sm:$0xf]
  %v539 = vld [vmem:[%s0 + $0x34] sm:$0xf]
  %v540 = vld [vmem:[%s0 + $0x38] sm:$0xf]
  %v541 = vld [vmem:[%s0 + $0x3c] sm:$0xf]
  %v542 = vld [vmem:[%s0 + $0x40] sm:$0xf]
  %v543 = vld [vmem:[%s0 + $0x44] sm:$0xf]
  %v544 = vld [vmem:[%s0 + $0x48] sm:$0xf]
  %v545 = vld [vmem:[%s0 + $0x4c] sm:$0xf]
  %v546 = vld [vmem:[%s0 + $0x50] sm:$0xf]
  %v547 = vld [vmem:[%s0 + $0x54] sm:$0xf]
  %v548 = vld [vmem:[%s0 + $0x58] sm:$0xf]
  %v549 = vld [vmem:[%s0 + $0x5c] sm:$0xf]
  %v550 = vld [vmem:[%s0 + $0x60] sm:$0xf]
  %v551 = vld [vmem:[%s0 + $0x64] sm:$0xf]
  %v552 = vld [vmem:[%s0 + $0x68] sm:$0xf]
  %v553 = vld [vmem:[%s0 + $0x6c] sm:$0xf]
  %v554 = vld [vmem:[%s0 + $0x70] sm:$0xf]
  %v555 = vld [vmem:[%s0 + $0x74] sm:$0xf]
  %v556 = vld [vmem:[%s0 + $0x78] sm:$0xf]
  %v557 = vld [vmem:[%s0 + $0x7c] sm:$0xf]
  %v558 = vld [vmem:[%s0 + $0x80] sm:$0xf]
  %v559 = vld [vmem:[%s0 + $0x84] sm:$0xf]
  %v560 = vld [vmem:[%s0 + $0x88] sm:$0xf]
  %v561 = vld [vmem:[%s0 + $0x8c] sm:$0xf]
  %v562 = vld [vmem:[%s0 + $0x90] sm:$0x1]
  %v563 = vld [vmem:[%s1] sm:$0x6]
  %v564 = vld [vmem:[#allocation2] sm:$0xff]
  %v565 = vld [vmem:[#allocation2 + $0x8] sm:$0xff]
  %v566 = vld [vmem:[#allocation2 + $0x10] sm:$0xff]
  %v567 = vld [vmem:[#allocation2 + $0x18] sm:$0xff]
  %v568 = vld [vmem:[#allocation2 + $0x20] sm:$0xff]
  %v569 = vld [vmem:[#allocation2 + $0x28] sm:$0xff]
  %v570 = vld [vmem:[#allocation2 + $0x30] sm:$0xff]
  %v571 = vld [vmem:[#allocation2 + $0x38] sm:$0xff]
  %v572 = vld [vmem:[#allocation2 + $0x40] sm:$0xff]
  %v573 = vld [vmem:[#allocation2 + $0x48] sm:$0xff]
  %v574 = vld [vmem:[#allocation2 + $0x50] sm:$0xff]
  %v575 = vld [vmem:[#allocation2 + $0x58] sm:$0xff]
  %v576 = vld [vmem:[#allocation2 + $0x60] sm:$0xff]
  %v577 = vld [vmem:[#allocation2 + $0x68] sm:$0xff]
  %v578 = vld [vmem:[#allocation2 + $0x70] sm:$0xff]
  %v579 = vld [vmem:[#allocation2 + $0x78] sm:$0xff]
  %v580 = vld [vmem:[#allocation2 + $0x80] sm:$0xff]
  %v581 = vld [vmem:[#allocation2 + $0x88] sm:$0xff]
  %v582 = vld [vmem:[#allocation2 + $0x90] sm:$0xff]
  %v583 = vld [vmem:[#allocation2 + $0x98] sm:$0xff]
  %v584 = vld [vmem:[#allocation2 + $0xa0] sm:$0xff]
  %v585 = vld [vmem:[#allocation2 + $0xa8] sm:$0xff]
  %v586 = vld [vmem:[#allocation2 + $0xb0] sm:$0xff]
  %v587 = vld [vmem:[#allocation2 + $0xb8] sm:$0xff]
  %v588 = vld [vmem:[#allocation2 + $0xc0] sm:$0xff]
  %v589 = vld [vmem:[#allocation2 + $0xc8] sm:$0xff]
  %v590 = vld [vmem:[#allocation2 + $0xd0] sm:$0xff]
  %v591 = vld [vmem:[#allocation2 + $0xd8] sm:$0xff]
  %v592 = vld [vmem:[#allocation2 + $0xe0] sm:$0xff]
  %v593 = vld [vmem:[#allocation2 + $0xe8] sm:$0xff]
  %v594 = vld [vmem:[#allocation2 + $0xf0] sm:$0xff]
  %v595 = vld [vmem:[#allocation2 + $0xf8] sm:$0xff]
  %v596 = vld [vmem:[#allocation2 + $0x100] sm:$0xff]
  %v597 = vld [vmem:[#allocation2 + $0x108] sm:$0xff]
  %v598 = vld [vmem:[#allocation2 + $0x110] sm:$0xff]
  %v599 = vld [vmem:[#allocation2 + $0x118] sm:$0xff]
  %v637 = vunpack.c.l.b16 %v526
  %v638 = vunpack.c.l.b16 %v527
  %v639 = vunpack.c.l.b16 %v528
  %v640 = vunpack.c.l.b16 %v529
  %v641 = vunpack.c.l.b16 %v530
  %v642 = vunpack.c.l.b16 %v531
  %v643 = vunpack.c.l.b16 %v532
  %v644 = vunpack.c.l.b16 %v533
  %v645 = vunpack.c.l.b16 %v534
  %v646 = vunpack.c.l.b16 %v535
  %v647 = vunpack.c.l.b16 %v536
  %v648 = vunpack.c.l.b16 %v537
  %v649 = vunpack.c.l.b16 %v538
  %v650 = vunpack.c.l.b16 %v539
  %v651 = vunpack.c.l.b16 %v540
  %v652 = vunpack.c.l.b16 %v541
  %v653 = vunpack.c.l.b16 %v542
  %v654 = vunpack.c.l.b16 %v543
  %v655 = vunpack.c.l.b16 %v544
  %v656 = vunpack.c.l.b16 %v545
  %v657 = vunpack.c.l.b16 %v546
  %v658 = vunpack.c.l.b16 %v547
  %v659 = vunpack.c.l.b16 %v548
  %v660 = vunpack.c.l.b16 %v549
  %v661 = vunpack.c.l.b16 %v550
  %v662 = vunpack.c.l.b16 %v551
  %v663 = vunpack.c.l.b16 %v552
  %v664 = vunpack.c.l.b16 %v553
  %v665 = vunpack.c.l.b16 %v554
  %v666 = vunpack.c.l.b16 %v555
  %v667 = vunpack.c.l.b16 %v556
  %v668 = vunpack.c.l.b16 %v557
  %v669 = vunpack.c.l.b16 %v558
  %v670 = vunpack.c.l.b16 %v559
  %v671 = vunpack.c.l.b16 %v560
  %v672 = vunpack.c.l.b16 %v561
  %v673 = vunpack.c.l.b16 %v562
  %v674 = vpack.c.b16 %v638, %v637
  %v675 = vpack.c.b16 %v640, %v639
  %v676 = vpack.c.b16 %v642, %v641
  %v677 = vpack.c.b16 %v644, %v643
  %v678 = vpack.c.b16 %v646, %v645
  %v679 = vpack.c.b16 %v648, %v647
  %v680 = vpack.c.b16 %v650, %v649
  %v681 = vpack.c.b16 %v652, %v651
  %v682 = vpack.c.b16 %v654, %v653
  %v683 = vpack.c.b16 %v656, %v655
  %v684 = vpack.c.b16 %v658, %v657
  %v685 = vpack.c.b16 %v660, %v659
  %v686 = vpack.c.b16 %v662, %v661
  %v687 = vpack.c.b16 %v664, %v663
  %v688 = vpack.c.b16 %v666, %v665
  %v689 = vpack.c.b16 %v668, %v667
  %v690 = vpack.c.b16 %v670, %v669
  %v691 = vpack.c.b16 %v672, %v671
  %v692 = vpack.c.b16 %v673, %v673
  %vm693 = vsmask.f32 7424
  %v695 = vshrl.u32 %v674, 16
  %v697 = vshll.u32 %v674, 16
  %v699 = vrot.slane %v697, 1
  %v700 = vor.u32 %v695, %v699
  %v702 = vshll.u32 %v675, 16
  %v704 = vrot.slane %v702, 1
  %v705 = vsel %vm693, %v700, %v704
  %v706 = vshrl.u32 %v675, 16
  %v708 = vor.u32 %v706, %v704
  %v710 = vshll.u32 %v676, 16
  %v712 = vrot.slane %v710, 1
  %v713 = vsel %vm693, %v708, %v712
  %v714 = vshrl.u32 %v676, 16
  %v716 = vor.u32 %v714, %v712
  %v718 = vshll.u32 %v677, 16
  %v720 = vrot.slane %v718, 1
  %v721 = vsel %vm693, %v716, %v720
  %v722 = vshrl.u32 %v677, 16
  %v724 = vor.u32 %v722, %v720
  %v726 = vshll.u32 %v678, 16
  %v728 = vrot.slane %v726, 1
  %v729 = vsel %vm693, %v724, %v728
  %v730 = vshrl.u32 %v678, 16
  %v732 = vor.u32 %v730, %v728
  %v734 = vshll.u32 %v679, 16
  %v736 = vrot.slane %v734, 1
  %v737 = vsel %vm693, %v732, %v736
  %v738 = vshrl.u32 %v679, 16
  %v740 = vor.u32 %v738, %v736
  %v742 = vshll.u32 %v680, 16
  %v744 = vrot.slane %v742, 1
  %v745 = vsel %vm693, %v740, %v744
  %v746 = vshrl.u32 %v680, 16
  %v748 = vor.u32 %v746, %v744
  %v750 = vshll.u32 %v681, 16
  %v752 = vrot.slane %v750, 1
  %v753 = vsel %vm693, %v748, %v752
  %v754 = vshrl.u32 %v681, 16
  %v756 = vor.u32 %v754, %v752
  %v758 = vshll.u32 %v682, 16
  %v760 = vrot.slane %v758, 1
  %v761 = vsel %vm693, %v756, %v760
  %v762 = vshrl.u32 %v682, 16
  %v764 = vor.u32 %v762, %v760
  %v766 = vshll.u32 %v683, 16
  %v768 = vrot.slane %v766, 1
  %v769 = vsel %vm693, %v764, %v768
  %v770 = vshrl.u32 %v683, 16
  %v772 = vor.u32 %v770, %v768
  %v774 = vshll.u32 %v684, 16
  %v776 = vrot.slane %v774, 1
  %v777 = vsel %vm693, %v772, %v776
  %v778 = vshrl.u32 %v684, 16
  %v780 = vor.u32 %v778, %v776
  %v782 = vshll.u32 %v685, 16
  %v784 = vrot.slane %v782, 1
  %v785 = vsel %vm693, %v780, %v784
  %v786 = vshrl.u32 %v685, 16
  %v788 = vor.u32 %v786, %v784
  %v790 = vshll.u32 %v686, 16
  %v792 = vrot.slane %v790, 1
  %v793 = vsel %vm693, %v788, %v792
  %v794 = vshrl.u32 %v686, 16
  %v796 = vor.u32 %v794, %v792
  %v798 = vshll.u32 %v687, 16
  %v800 = vrot.slane %v798, 1
  %v801 = vsel %vm693, %v796, %v800
  %v802 = vshrl.u32 %v687, 16
  %v804 = vor.u32 %v802, %v800
  %v806 = vshll.u32 %v688, 16
  %v808 = vrot.slane %v806, 1
  %v809 = vsel %vm693, %v804, %v808
  %v810 = vshrl.u32 %v688, 16
  %v812 = vor.u32 %v810, %v808
  %v814 = vshll.u32 %v689, 16
  %v816 = vrot.slane %v814, 1
  %v817 = vsel %vm693, %v812, %v816
  %v818 = vshrl.u32 %v689, 16
  %v820 = vor.u32 %v818, %v816
  %v822 = vshll.u32 %v690, 16
  %v824 = vrot.slane %v822, 1
  %v825 = vsel %vm693, %v820, %v824
  %v826 = vshrl.u32 %v690, 16
  %v828 = vor.u32 %v826, %v824
  %v830 = vshll.u32 %v691, 16
  %v832 = vrot.slane %v830, 1
  %v833 = vsel %vm693, %v828, %v832
  %v834 = vshrl.u32 %v691, 16
  %v836 = vor.u32 %v834, %v832
  %v838 = vshll.u32 %v692, 16
  %v840 = vrot.slane %v838, 1
  %v841 = vsel %vm693, %v836, %v840
  %v843 = vunpack.c.l.b16 %v563
  %v844 = vpack.c.b16 %v843, %v843
  %v846 = vshrl.u32 %v844, 16
  %v848 = vrot.slane %v846, 1
  %v849 = vshll.u32 %v844, 16
  %v851 = vrot.slane %v849, 2
  %v852 = vor.u32 %v848, %v851
  %v854 = vsel %vm215, %v705, 0
  %v857 = vsel %vm215, %v713, 0
  %v860 = vsel %vm215, %v721, 0
  %v863 = vsel %vm215, %v729, 0
  %v866 = vsel %vm215, %v737, 0
  %v869 = vsel %vm215, %v745, 0
  %v872 = vsel %vm215, %v753, 0
  %v875 = vsel %vm215, %v761, 0
  %v878 = vsel %vm215, %v769, 0
  %v881 = vsel %vm215, %v777, 0
  %v884 = vsel %vm215, %v785, 0
  %v887 = vsel %vm215, %v793, 0
  %v890 = vsel %vm215, %v801, 0
  %v893 = vsel %vm215, %v809, 0
  %v896 = vsel %vm215, %v817, 0
  %v899 = vsel %vm215, %v825, 0
  %v902 = vsel %vm215, %v833, 0
  %v905 = vsel %vm215, %v841, 0
  %v908 = vand.u32 %v852, %v273
  %910 = vmatprep.subr.bf16.mxu0 0
  %911 = vmatpush1.bf16.msra.mxu0 0
  %912 = vmatprep.subr.bf16.mxu0 0
  %913 = vmatpush1.bf16.msra.mxu0 0
  %914 = vmatprep.subr.bf16.mxu0 0
  %915 = vmatpush1.bf16.msra.mxu0 0
  %916 = vmatprep.subr.bf16.mxu0 0
  %917 = vmatpush1.bf16.msra.mxu0 0
  %918 = vmatprep.subr.bf16.mxu0 0
  %919 = vmatpush1.bf16.msra.mxu0 0
  %920 = vmatprep.subr.bf16.mxu0 0
  %921 = vmatpush1.bf16.msra.mxu0 0
  %922 = vmatprep.subr.bf16.mxu0 0
  %923 = vmatpush1.bf16.msra.mxu0 0
  %924 = vmatprep.subr.bf16.mxu0 0
  %925 = vmatpush1.bf16.msra.mxu0 %v908
  %926 = vmatprep.subr.bf16.mxu0 0
  %927 = vmatpush2.bf16.msra.mxu0 0
  %928 = vmatprep.subr.bf16.mxu0 0
  %929 = vmatpush2.bf16.msra.mxu0 0
  %930 = vmatprep.subr.bf16.mxu0 0
  %931 = vmatpush2.bf16.msra.mxu0 0
  %932 = vmatprep.subr.bf16.mxu0 0
  %933 = vmatpush2.bf16.msra.mxu0 0
  %934 = vmatprep.subr.bf16.mxu0 0
  %935 = vmatpush2.bf16.msra.mxu0 0
  %936 = vmatprep.subr.bf16.mxu0 0
  %937 = vmatpush2.bf16.msra.mxu0 0
  %938 = vmatprep.subr.bf16.mxu0 0
  %939 = vmatpush2.bf16.msra.mxu0 0
  %940 = vmatprep.subr.bf16.mxu0 0
  %941 = vmatpush2.bf16.msra.mxu0 0
  %942 = vmatprep.mubr.bf16.mxu0 0
  %943 = vmatmul.mubr.bf16.gmra.mxu0 %v854
  %v944 = vpop.f32.mrf.mxu0
  %v945 = vadd.f32 0.0, %v944
  %v946 = vpop.f32.mrf.mxu0
  %v947 = vpop.f32.mrf.mxu0
  %v948 = vadd.f32 0.0, %v947
  %v949 = vpop.f32.mrf.mxu0
  %950 = vmatprep.mubr.bf16.mxu0 0
  %951 = vmatmul.mubr.bf16.gmra.mxu0 %v857
  %v952 = vpop.f32.mrf.mxu0
  %v953 = vadd.f32 0.0, %v952
  %v954 = vpop.f32.mrf.mxu0
  %v955 = vpop.f32.mrf.mxu0
  %v956 = vadd.f32 0.0, %v955
  %v957 = vpop.f32.mrf.mxu0
  %958 = vmatprep.mubr.bf16.mxu0 0
  %959 = vmatmul.mubr.bf16.gmra.mxu0 %v860
  %v960 = vpop.f32.mrf.mxu0
  %v961 = vadd.f32 0.0, %v960
  %v962 = vpop.f32.mrf.mxu0
  %v963 = vpop.f32.mrf.mxu0
  %v964 = vadd.f32 0.0, %v963
  %v965 = vpop.f32.mrf.mxu0
  %966 = vmatprep.mubr.bf16.mxu0 0
  %967 = vmatmul.mubr.bf16.gmra.mxu0 %v863
  %v968 = vpop.f32.mrf.mxu0
  %v969 = vadd.f32 0.0, %v968
  %v970 = vpop.f32.mrf.mxu0
  %v971 = vpop.f32.mrf.mxu0
  %v972 = vadd.f32 0.0, %v971
  %v973 = vpop.f32.mrf.mxu0
  %974 = vmatprep.mubr.bf16.mxu0 0
  %975 = vmatmul.mubr.bf16.gmra.mxu0 %v866
  %v976 = vpop.f32.mrf.mxu0
  %v977 = vadd.f32 0.0, %v976
  %v978 = vpop.f32.mrf.mxu0
  %v979 = vpop.f32.mrf.mxu0
  %v980 = vadd.f32 0.0, %v979
  %v981 = vpop.f32.mrf.mxu0
  %982 = vmatprep.mubr.bf16.mxu0 0
  %983 = vmatmul.mubr.bf16.gmra.mxu0 %v869
  %v984 = vpop.f32.mrf.mxu0
  %v985 = vadd.f32 0.0, %v984
  %v986 = vpop.f32.mrf.mxu0
  %v987 = vpop.f32.mrf.mxu0
  %v988 = vadd.f32 0.0, %v987
  %v989 = vpop.f32.mrf.mxu0
  %990 = vmatprep.mubr.bf16.mxu0 0
  %991 = vmatmul.mubr.bf16.gmra.mxu0 %v872
  %v992 = vpop.f32.mrf.mxu0
  %v993 = vadd.f32 0.0, %v992
  %v994 = vpop.f32.mrf.mxu0
  %v995 = vpop.f32.mrf.mxu0
  %v996 = vadd.f32 0.0, %v995
  %v997 = vpop.f32.mrf.mxu0
  %998 = vmatprep.mubr.bf16.mxu0 0
  %999 = vmatmul.mubr.bf16.gmra.mxu0 %v875
  %v1000 = vpop.f32.mrf.mxu0
  %v1001 = vadd.f32 0.0, %v1000
  %v1002 = vpop.f32.mrf.mxu0
  %v1003 = vpop.f32.mrf.mxu0
  %v1004 = vadd.f32 0.0, %v1003
  %v1005 = vpop.f32.mrf.mxu0
  %1006 = vmatprep.mubr.bf16.mxu0 0
  %1007 = vmatmul.mubr.bf16.gmra.mxu0 %v878
  %v1008 = vpop.f32.mrf.mxu0
  %v1009 = vadd.f32 0.0, %v1008
  %v1010 = vpop.f32.mrf.mxu0
  %v1011 = vpop.f32.mrf.mxu0
  %v1012 = vadd.f32 0.0, %v1011
  %v1013 = vpop.f32.mrf.mxu0
  %1014 = vmatprep.mubr.bf16.mxu0 0
  %1015 = vmatmul.mubr.bf16.gmra.mxu0 %v881
  %v1016 = vpop.f32.mrf.mxu0
  %v1017 = vadd.f32 0.0, %v1016
  %v1018 = vpop.f32.mrf.mxu0
  %v1019 = vpop.f32.mrf.mxu0
  %v1020 = vadd.f32 0.0, %v1019
  %v1021 = vpop.f32.mrf.mxu0
  %1022 = vmatprep.mubr.bf16.mxu0 0
  %1023 = vmatmul.mubr.bf16.gmra.mxu0 %v884
  %v1024 = vpop.f32.mrf.mxu0
  %v1025 = vadd.f32 0.0, %v1024
  %v1026 = vpop.f32.mrf.mxu0
  %v1027 = vpop.f32.mrf.mxu0
  %v1028 = vadd.f32 0.0, %v1027
  %v1029 = vpop.f32.mrf.mxu0
  %1030 = vmatprep.mubr.bf16.mxu0 0
  %1031 = vmatmul.mubr.bf16.gmra.mxu0 %v887
  %v1032 = vpop.f32.mrf.mxu0
  %v1033 = vadd.f32 0.0, %v1032
  %v1034 = vpop.f32.mrf.mxu0
  %v1035 = vpop.f32.mrf.mxu0
  %v1036 = vadd.f32 0.0, %v1035
  %v1037 = vpop.f32.mrf.mxu0
  %1038 = vmatprep.mubr.bf16.mxu0 0
  %1039 = vmatmul.mubr.bf16.gmra.mxu0 %v890
  %v1040 = vpop.f32.mrf.mxu0
  %v1041 = vadd.f32 0.0, %v1040
  %v1042 = vpop.f32.mrf.mxu0
  %v1043 = vpop.f32.mrf.mxu0
  %v1044 = vadd.f32 0.0, %v1043
  %v1045 = vpop.f32.mrf.mxu0
  %1046 = vmatprep.mubr.bf16.mxu0 0
  %1047 = vmatmul.mubr.bf16.gmra.mxu0 %v893
  %v1048 = vpop.f32.mrf.mxu0
  %v1049 = vadd.f32 0.0, %v1048
  %v1050 = vpop.f32.mrf.mxu0
  %v1051 = vpop.f32.mrf.mxu0
  %v1052 = vadd.f32 0.0, %v1051
  %v1053 = vpop.f32.mrf.mxu0
  %1054 = vmatprep.mubr.bf16.mxu0 0
  %1055 = vmatmul.mubr.bf16.gmra.mxu0 %v896
  %v1056 = vpop.f32.mrf.mxu0
  %v1057 = vadd.f32 0.0, %v1056
  %v1058 = vpop.f32.mrf.mxu0
  %v1059 = vpop.f32.mrf.mxu0
  %v1060 = vadd.f32 0.0, %v1059
  %v1061 = vpop.f32.mrf.mxu0
  %1062 = vmatprep.mubr.bf16.mxu0 0
  %1063 = vmatmul.mubr.bf16.gmra.mxu0 %v899
  %v1064 = vpop.f32.mrf.mxu0
  %v1065 = vadd.f32 0.0, %v1064
  %v1066 = vpop.f32.mrf.mxu0
  %v1067 = vpop.f32.mrf.mxu0
  %v1068 = vadd.f32 0.0, %v1067
  %v1069 = vpop.f32.mrf.mxu0
  %1070 = vmatprep.mubr.bf16.mxu0 0
  %1071 = vmatmul.mubr.bf16.gmra.mxu0 %v902
  %v1072 = vpop.f32.mrf.mxu0
  %v1073 = vadd.f32 0.0, %v1072
  %v1074 = vpop.f32.mrf.mxu0
  %v1075 = vpop.f32.mrf.mxu0
  %v1076 = vadd.f32 0.0, %v1075
  %v1077 = vpop.f32.mrf.mxu0
  %1078 = vmatprep.mubr.bf16.mxu0 0
  %1079 = vmatmul.mubr.bf16.gmra.mxu0 %v905
  %v1080 = vpop.f32.mrf.mxu0
  %v1081 = vadd.f32 0.0, %v1080
  %v1082 = vpop.f32.mrf.mxu0
  %v1083 = vpop.f32.mrf.mxu0
  %v1084 = vadd.f32 0.0, %v1083
  %v1085 = vpop.f32.mrf.mxu0
  %1086 = vdwg.mxu0
  %v1087 = vadd.f32 %v564, %v945
  %v1088 = vadd.f32 %v565, %v948
  %v1089 = vadd.f32 %v566, %v953
  %v1090 = vadd.f32 %v567, %v956
  %v1091 = vadd.f32 %v568, %v961
  %v1092 = vadd.f32 %v569, %v964
  %v1093 = vadd.f32 %v570, %v969
  %v1094 = vadd.f32 %v571, %v972
  %v1095 = vadd.f32 %v572, %v977
  %v1096 = vadd.f32 %v573, %v980
  %v1097 = vadd.f32 %v574, %v985
  %v1098 = vadd.f32 %v575, %v988
  %v1099 = vadd.f32 %v576, %v993
  %v1100 = vadd.f32 %v577, %v996
  %v1101 = vadd.f32 %v578, %v1001
  %v1102 = vadd.f32 %v579, %v1004
  %v1103 = vadd.f32 %v580, %v1009
  %v1104 = vadd.f32 %v581, %v1012
  %v1105 = vadd.f32 %v582, %v1017
  %v1106 = vadd.f32 %v583, %v1020
  %v1107 = vadd.f32 %v584, %v1025
  %v1108 = vadd.f32 %v585, %v1028
  %v1109 = vadd.f32 %v586, %v1033
  %v1110 = vadd.f32 %v587, %v1036
  %v1111 = vadd.f32 %v588, %v1041
  %v1112 = vadd.f32 %v589, %v1044
  %v1113 = vadd.f32 %v590, %v1049
  %v1114 = vadd.f32 %v591, %v1052
  %v1115 = vadd.f32 %v592, %v1057
  %v1116 = vadd.f32 %v593, %v1060
  %v1117 = vadd.f32 %v594, %v1065
  %v1118 = vadd.f32 %v595, %v1068
  %v1119 = vadd.f32 %v596, %v1073
  %v1120 = vadd.f32 %v597, %v1076
  %v1121 = vadd.f32 %v598, %v1081
  %v1122 = vadd.f32 %v599, %v1084
  %1123 = vst.msk [vmem:[#allocation2] sm:$0xff] %vm15, %v1087
  %1124 = vst.msk [vmem:[#allocation2 + $0x8] sm:$0xff] %vm15, %v1088
  %1125 = vst.msk [vmem:[#allocation2 + $0x10] sm:$0xff] %vm15, %v1089
  %1126 = vst.msk [vmem:[#allocation2 + $0x18] sm:$0xff] %vm15, %v1090
  %1127 = vst.msk [vmem:[#allocation2 + $0x20] sm:$0xff] %vm15, %v1091
  %1128 = vst.msk [vmem:[#allocation2 + $0x28] sm:$0xff] %vm15, %v1092
  %1129 = vst.msk [vmem:[#allocation2 + $0x30] sm:$0xff] %vm15, %v1093
  %1130 = vst.msk [vmem:[#allocation2 + $0x38] sm:$0xff] %vm15, %v1094
  %1131 = vst.msk [vmem:[#allocation2 + $0x40] sm:$0xff] %vm15, %v1095
  %1132 = vst.msk [vmem:[#allocation2 + $0x48] sm:$0xff] %vm15, %v1096
  %1133 = vst.msk [vmem:[#allocation2 + $0x50] sm:$0xff] %vm15, %v1097
  %1134 = vst.msk [vmem:[#allocation2 + $0x58] sm:$0xff] %vm15, %v1098
  %1135 = vst.msk [vmem:[#allocation2 + $0x60] sm:$0xff] %vm15, %v1099
  %1136 = vst.msk [vmem:[#allocation2 + $0x68] sm:$0xff] %vm15, %v1100
  %1137 = vst.msk [vmem:[#allocation2 + $0x70] sm:$0xff] %vm15, %v1101
  %1138 = vst.msk [vmem:[#allocation2 + $0x78] sm:$0xff] %vm15, %v1102
  %1139 = vst.msk [vmem:[#allocation2 + $0x80] sm:$0xff] %vm15, %v1103
  %1140 = vst.msk [vmem:[#allocation2 + $0x88] sm:$0xff] %vm15, %v1104
  %1141 = vst.msk [vmem:[#allocation2 + $0x90] sm:$0xff] %vm15, %v1105
  %1142 = vst.msk [vmem:[#allocation2 + $0x98] sm:$0xff] %vm15, %v1106
  %1143 = vst.msk [vmem:[#allocation2 + $0xa0] sm:$0xff] %vm15, %v1107
  %1144 = vst.msk [vmem:[#allocation2 + $0xa8] sm:$0xff] %vm15, %v1108
  %1145 = vst.msk [vmem:[#allocation2 + $0xb0] sm:$0xff] %vm15, %v1109
  %1146 = vst.msk [vmem:[#allocation2 + $0xb8] sm:$0xff] %vm15, %v1110
  %1147 = vst.msk [vmem:[#allocation2 + $0xc0] sm:$0xff] %vm15, %v1111
  %1148 = vst.msk [vmem:[#allocation2 + $0xc8] sm:$0xff] %vm15, %v1112
  %1149 = vst.msk [vmem:[#allocation2 + $0xd0] sm:$0xff] %vm15, %v1113
  %1150 = vst.msk [vmem:[#allocation2 + $0xd8] sm:$0xff] %vm15, %v1114
  %1151 = vst.msk [vmem:[#allocation2 + $0xe0] sm:$0xff] %vm15, %v1115
  %1152 = vst.msk [vmem:[#allocation2 + $0xe8] sm:$0xff] %vm15, %v1116
  %1153 = vst.msk [vmem:[#allocation2 + $0xf0] sm:$0xff] %vm15, %v1117
  %1154 = vst.msk [vmem:[#allocation2 + $0xf8] sm:$0xff] %vm15, %v1118
  %1155 = vst.msk [vmem:[#allocation2 + $0x100] sm:$0xff] %vm15, %v1119
  %1156 = vst.msk [vmem:[#allocation2 + $0x108] sm:$0xff] %vm15, %v1120
  %1157 = vst.msk [vmem:[#allocation2 + $0x110] sm:$0xff] %vm15, %v1121
  %1158 = vst.msk [vmem:[#allocation2 + $0x118] sm:$0xff] %vm15, %v1122
  %v1159 = vld [vmem:[%s0] sm:$0xe]
  %v1160 = vld [vmem:[%s0 + $0x4] sm:$0xf]
  %v1161 = vld [vmem:[%s0 + $0x8] sm:$0xf]
  %v1162 = vld [vmem:[%s0 + $0xc] sm:$0xf]
  %v1163 = vld [vmem:[%s0 + $0x10] sm:$0xf]
  %v1164 = vld [vmem:[%s0 + $0x14] sm:$0xf]
  %v1165 = vld [vmem:[%s0 + $0x18] sm:$0xf]
  %v1166 = vld [vmem:[%s0 + $0x1c] sm:$0xf]
  %v1167 = vld [vmem:[%s0 + $0x20] sm:$0xf]
  %v1168 = vld [vmem:[%s0 + $0x24] sm:$0xf]
  %v1169 = vld [vmem:[%s0 + $0x28] sm:$0xf]
  %v1170 = vld [vmem:[%s0 + $0x2c] sm:$0xf]
  %v1171 = vld [vmem:[%s0 + $0x30] sm:$0xf]
  %v1172 = vld [vmem:[%s0 + $0x34] sm:$0xf]
  %v1173 = vld [vmem:[%s0 + $0x38] sm:$0xf]
  %v1174 = vld [vmem:[%s0 + $0x3c] sm:$0xf]
  %v1175 = vld [vmem:[%s0 + $0x40] sm:$0xf]
  %v1176 = vld [vmem:[%s0 + $0x44] sm:$0xf]
  %v1177 = vld [vmem:[%s0 + $0x48] sm:$0xf]
  %v1178 = vld [vmem:[%s0 + $0x4c] sm:$0xf]
  %v1179 = vld [vmem:[%s0 + $0x50] sm:$0xf]
  %v1180 = vld [vmem:[%s0 + $0x54] sm:$0xf]
  %v1181 = vld [vmem:[%s0 + $0x58] sm:$0xf]
  %v1182 = vld [vmem:[%s0 + $0x5c] sm:$0xf]
  %v1183 = vld [vmem:[%s0 + $0x60] sm:$0xf]
  %v1184 = vld [vmem:[%s0 + $0x64] sm:$0xf]
  %v1185 = vld [vmem:[%s0 + $0x68] sm:$0xf]
  %v1186 = vld [vmem:[%s0 + $0x6c] sm:$0xf]
  %v1187 = vld [vmem:[%s0 + $0x70] sm:$0xf]
  %v1188 = vld [vmem:[%s0 + $0x74] sm:$0xf]
  %v1189 = vld [vmem:[%s0 + $0x78] sm:$0xf]
  %v1190 = vld [vmem:[%s0 + $0x7c] sm:$0xf]
  %v1191 = vld [vmem:[%s0 + $0x80] sm:$0xf]
  %v1192 = vld [vmem:[%s0 + $0x84] sm:$0xf]
  %v1193 = vld [vmem:[%s0 + $0x88] sm:$0xf]
  %v1194 = vld [vmem:[%s0 + $0x8c] sm:$0xf]
  %v1195 = vld [vmem:[%s0 + $0x90] sm:$0x1]
  %v1196 = vld [vmem:[%s1] sm:$0x8]
  %v1197 = vld [vmem:[%s1 + $0x4] sm:$0x1]
  %v1198 = vld [vmem:[#allocation2] sm:$0xff]
  %v1199 = vld [vmem:[#allocation2 + $0x8] sm:$0xff]
  %v1200 = vld [vmem:[#allocation2 + $0x10] sm:$0xff]
  %v1201 = vld [vmem:[#allocation2 + $0x18] sm:$0xff]
  %v1202 = vld [vmem:[#allocation2 + $0x20] sm:$0xff]
  %v1203 = vld [vmem:[#allocation2 + $0x28] sm:$0xff]
  %v1204 = vld [vmem:[#allocation2 + $0x30] sm:$0xff]
  %v1205 = vld [vmem:[#allocation2 + $0x38] sm:$0xff]
  %v1206 = vld [vmem:[#allocation2 + $0x40] sm:$0xff]
  %v1207 = vld [vmem:[#allocation2 + $0x48] sm:$0xff]
  %v1208 = vld [vmem:[#allocation2 + $0x50] sm:$0xff]
  %v1209 = vld [vmem:[#allocation2 + $0x58] sm:$0xff]
  %v1210 = vld [vmem:[#allocation2 + $0x60] sm:$0xff]
  %v1211 = vld [vmem:[#allocation2 + $0x68] sm:$0xff]
  %v1212 = vld [vmem:[#allocation2 + $0x70] sm:$0xff]
  %v1213 = vld [vmem:[#allocation2 + $0x78] sm:$0xff]
  %v1214 = vld [vmem:[#allocation2 + $0x80] sm:$0xff]
  %v1215 = vld [vmem:[#allocation2 + $0x88] sm:$0xff]
  %v1216 = vld [vmem:[#allocation2 + $0x90] sm:$0xff]
  %v1217 = vld [vmem:[#allocation2 + $0x98] sm:$0xff]
  %v1218 = vld [vmem:[#allocation2 + $0xa0] sm:$0xff]
  %v1219 = vld [vmem:[#allocation2 + $0xa8] sm:$0xff]
  %v1220 = vld [vmem:[#allocation2 + $0xb0] sm:$0xff]
  %v1221 = vld [vmem:[#allocation2 + $0xb8] sm:$0xff]
  %v1222 = vld [vmem:[#allocation2 + $0xc0] sm:$0xff]
  %v1223 = vld [vmem:[#allocation2 + $0xc8] sm:$0xff]
  %v1224 = vld [vmem:[#allocation2 + $0xd0] sm:$0xff]
  %v1225 = vld [vmem:[#allocation2 + $0xd8] sm:$0xff]
  %v1226 = vld [vmem:[#allocation2 + $0xe0] sm:$0xff]
  %v1227 = vld [vmem:[#allocation2 + $0xe8] sm:$0xff]
  %v1228 = vld [vmem:[#allocation2 + $0xf0] sm:$0xff]
  %v1229 = vld [vmem:[#allocation2 + $0xf8] sm:$0xff]
  %v1230 = vld [vmem:[#allocation2 + $0x100] sm:$0xff]
  %v1231 = vld [vmem:[#allocation2 + $0x108] sm:$0xff]
  %v1232 = vld [vmem:[#allocation2 + $0x110] sm:$0xff]
  %v1233 = vld [vmem:[#allocation2 + $0x118] sm:$0xff]
  %v1271 = vunpack.c.l.b16 %v1159
  %v1272 = vunpack.c.l.b16 %v1160
  %v1273 = vunpack.c.l.b16 %v1161
  %v1274 = vunpack.c.l.b16 %v1162
  %v1275 = vunpack.c.l.b16 %v1163
  %v1276 = vunpack.c.l.b16 %v1164
  %v1277 = vunpack.c.l.b16 %v1165
  %v1278 = vunpack.c.l.b16 %v1166
  %v1279 = vunpack.c.l.b16 %v1167
  %v1280 = vunpack.c.l.b16 %v1168
  %v1281 = vunpack.c.l.b16 %v1169
  %v1282 = vunpack.c.l.b16 %v1170
  %v1283 = vunpack.c.l.b16 %v1171
  %v1284 = vunpack.c.l.b16 %v1172
  %v1285 = vunpack.c.l.b16 %v1173
  %v1286 = vunpack.c.l.b16 %v1174
  %v1287 = vunpack.c.l.b16 %v1175
  %v1288 = vunpack.c.l.b16 %v1176
  %v1289 = vunpack.c.l.b16 %v1177
  %v1290 = vunpack.c.l.b16 %v1178
  %v1291 = vunpack.c.l.b16 %v1179
  %v1292 = vunpack.c.l.b16 %v1180
  %v1293 = vunpack.c.l.b16 %v1181
  %v1294 = vunpack.c.l.b16 %v1182
  %v1295 = vunpack.c.l.b16 %v1183
  %v1296 = vunpack.c.l.b16 %v1184
  %v1297 = vunpack.c.l.b16 %v1185
  %v1298 = vunpack.c.l.b16 %v1186
  %v1299 = vunpack.c.l.b16 %v1187
  %v1300 = vunpack.c.l.b16 %v1188
  %v1301 = vunpack.c.l.b16 %v1189
  %v1302 = vunpack.c.l.b16 %v1190
  %v1303 = vunpack.c.l.b16 %v1191
  %v1304 = vunpack.c.l.b16 %v1192
  %v1305 = vunpack.c.l.b16 %v1193
  %v1306 = vunpack.c.l.b16 %v1194
  %v1307 = vunpack.c.l.b16 %v1195
  %v1308 = vpack.c.b16 %v1272, %v1271
  %v1309 = vpack.c.b16 %v1274, %v1273
  %v1310 = vpack.c.b16 %v1276, %v1275
  %v1311 = vpack.c.b16 %v1278, %v1277
  %v1312 = vpack.c.b16 %v1280, %v1279
  %v1313 = vpack.c.b16 %v1282, %v1281
  %v1314 = vpack.c.b16 %v1284, %v1283
  %v1315 = vpack.c.b16 %v1286, %v1285
  %v1316 = vpack.c.b16 %v1288, %v1287
  %v1317 = vpack.c.b16 %v1290, %v1289
  %v1318 = vpack.c.b16 %v1292, %v1291
  %v1319 = vpack.c.b16 %v1294, %v1293
  %v1320 = vpack.c.b16 %v1296, %v1295
  %v1321 = vpack.c.b16 %v1298, %v1297
  %v1322 = vpack.c.b16 %v1300, %v1299
  %v1323 = vpack.c.b16 %v1302, %v1301
  %v1324 = vpack.c.b16 %v1304, %v1303
  %v1325 = vpack.c.b16 %v1306, %v1305
  %v1326 = vpack.c.b16 %v1307, %v1307
  %vm1327 = vcmask 1046528
  %v1328 = vrot.slane %v1308, 1
  %v1329 = vrot.slane %v1309, 1
  %v1330 = vsel %vm1327, %v1328, %v1329
  %v1331 = vrot.slane %v1310, 1
  %v1332 = vsel %vm1327, %v1329, %v1331
  %v1333 = vrot.slane %v1311, 1
  %v1334 = vsel %vm1327, %v1331, %v1333
  %v1335 = vrot.slane %v1312, 1
  %v1336 = vsel %vm1327, %v1333, %v1335
  %v1337 = vrot.slane %v1313, 1
  %v1338 = vsel %vm1327, %v1335, %v1337
  %v1339 = vrot.slane %v1314, 1
  %v1340 = vsel %vm1327, %v1337, %v1339
  %v1341 = vrot.slane %v1315, 1
  %v1342 = vsel %vm1327, %v1339, %v1341
  %v1343 = vrot.slane %v1316, 1
  %v1344 = vsel %vm1327, %v1341, %v1343
  %v1345 = vrot.slane %v1317, 1
  %v1346 = vsel %vm1327, %v1343, %v1345
  %v1347 = vrot.slane %v1318, 1
  %v1348 = vsel %vm1327, %v1345, %v1347
  %v1349 = vrot.slane %v1319, 1
  %v1350 = vsel %vm1327, %v1347, %v1349
  %v1351 = vrot.slane %v1320, 1
  %v1352 = vsel %vm1327, %v1349, %v1351
  %v1353 = vrot.slane %v1321, 1
  %v1354 = vsel %vm1327, %v1351, %v1353
  %v1355 = vrot.slane %v1322, 1
  %v1356 = vsel %vm1327, %v1353, %v1355
  %v1357 = vrot.slane %v1323, 1
  %v1358 = vsel %vm1327, %v1355, %v1357
  %v1359 = vrot.slane %v1324, 1
  %v1360 = vsel %vm1327, %v1357, %v1359
  %v1361 = vrot.slane %v1325, 1
  %v1362 = vsel %vm1327, %v1359, %v1361
  %v1363 = vrot.slane %v1326, 1
  %v1364 = vsel %vm1327, %v1361, %v1363
  %v1367 = vunpack.c.l.b16 %v1196
  %v1368 = vunpack.c.l.b16 %v1197
  %v1369 = vpack.c.b16 %v1368, %v1367
  %v1370 = vrot.slane %v1369, 3
  %v1372 = vsel %vm215, %v1330, 0
  %v1375 = vsel %vm215, %v1332, 0
  %v1378 = vsel %vm215, %v1334, 0
  %v1381 = vsel %vm215, %v1336, 0
  %v1384 = vsel %vm215, %v1338, 0
  %v1387 = vsel %vm215, %v1340, 0
  %v1390 = vsel %vm215, %v1342, 0
  %v1393 = vsel %vm215, %v1344, 0
  %v1396 = vsel %vm215, %v1346, 0
  %v1399 = vsel %vm215, %v1348, 0
  %v1402 = vsel %vm215, %v1350, 0
  %v1405 = vsel %vm215, %v1352, 0
  %v1408 = vsel %vm215, %v1354, 0
  %v1411 = vsel %vm215, %v1356, 0
  %v1414 = vsel %vm215, %v1358, 0
  %v1417 = vsel %vm215, %v1360, 0
  %v1420 = vsel %vm215, %v1362, 0
  %v1423 = vsel %vm215, %v1364, 0
  %v1426 = vand.u32 %v1370, %v273
  %1428 = vmatprep.subr.bf16.mxu0 0
  %1429 = vmatpush1.bf16.msra.mxu0 0
  %1430 = vmatprep.subr.bf16.mxu0 0
  %1431 = vmatpush1.bf16.msra.mxu0 0
  %1432 = vmatprep.subr.bf16.mxu0 0
  %1433 = vmatpush1.bf16.msra.mxu0 0
  %1434 = vmatprep.subr.bf16.mxu0 0
  %1435 = vmatpush1.bf16.msra.mxu0 0
  %1436 = vmatprep.subr.bf16.mxu0 0
  %1437 = vmatpush1.bf16.msra.mxu0 0
  %1438 = vmatprep.subr.bf16.mxu0 0
  %1439 = vmatpush1.bf16.msra.mxu0 0
  %1440 = vmatprep.subr.bf16.mxu0 0
  %1441 = vmatpush1.bf16.msra.mxu0 0
  %1442 = vmatprep.subr.bf16.mxu0 0
  %1443 = vmatpush1.bf16.msra.mxu0 %v1426
  %1444 = vmatprep.subr.bf16.mxu0 0
  %1445 = vmatpush2.bf16.msra.mxu0 0
  %1446 = vmatprep.subr.bf16.mxu0 0
  %1447 = vmatpush2.bf16.msra.mxu0 0
  %1448 = vmatprep.subr.bf16.mxu0 0
  %1449 = vmatpush2.bf16.msra.mxu0 0
  %1450 = vmatprep.subr.bf16.mxu0 0
  %1451 = vmatpush2.bf16.msra.mxu0 0
  %1452 = vmatprep.subr.bf16.mxu0 0
  %1453 = vmatpush2.bf16.msra.mxu0 0
  %1454 = vmatprep.subr.bf16.mxu0 0
  %1455 = vmatpush2.bf16.msra.mxu0 0
  %1456 = vmatprep.subr.bf16.mxu0 0
  %1457 = vmatpush2.bf16.msra.mxu0 0
  %1458 = vmatprep.subr.bf16.mxu0 0
  %1459 = vmatpush2.bf16.msra.mxu0 0
  %1460 = vmatprep.mubr.bf16.mxu0 0
  %1461 = vmatmul.mubr.bf16.gmra.mxu0 %v1372
  %v1462 = vpop.f32.mrf.mxu0
  %v1463 = vadd.f32 0.0, %v1462
  %v1464 = vpop.f32.mrf.mxu0
  %v1465 = vpop.f32.mrf.mxu0
  %v1466 = vadd.f32 0.0, %v1465
  %v1467 = vpop.f32.mrf.mxu0
  %1468 = vmatprep.mubr.bf16.mxu0 0
  %1469 = vmatmul.mubr.bf16.gmra.mxu0 %v1375
  %v1470 = vpop.f32.mrf.mxu0
  %v1471 = vadd.f32 0.0, %v1470
  %v1472 = vpop.f32.mrf.mxu0
  %v1473 = vpop.f32.mrf.mxu0
  %v1474 = vadd.f32 0.0, %v1473
  %v1475 = vpop.f32.mrf.mxu0
  %1476 = vmatprep.mubr.bf16.mxu0 0
  %1477 = vmatmul.mubr.bf16.gmra.mxu0 %v1378
  %v1478 = vpop.f32.mrf.mxu0
  %v1479 = vadd.f32 0.0, %v1478
  %v1480 = vpop.f32.mrf.mxu0
  %v1481 = vpop.f32.mrf.mxu0
  %v1482 = vadd.f32 0.0, %v1481
  %v1483 = vpop.f32.mrf.mxu0
  %1484 = vmatprep.mubr.bf16.mxu0 0
  %1485 = vmatmul.mubr.bf16.gmra.mxu0 %v1381
  %v1486 = vpop.f32.mrf.mxu0
  %v1487 = vadd.f32 0.0, %v1486
  %v1488 = vpop.f32.mrf.mxu0
  %v1489 = vpop.f32.mrf.mxu0
  %v1490 = vadd.f32 0.0, %v1489
  %v1491 = vpop.f32.mrf.mxu0
  %1492 = vmatprep.mubr.bf16.mxu0 0
  %1493 = vmatmul.mubr.bf16.gmra.mxu0 %v1384
  %v1494 = vpop.f32.mrf.mxu0
  %v1495 = vadd.f32 0.0, %v1494
  %v1496 = vpop.f32.mrf.mxu0
  %v1497 = vpop.f32.mrf.mxu0
  %v1498 = vadd.f32 0.0, %v1497
  %v1499 = vpop.f32.mrf.mxu0
  %1500 = vmatprep.mubr.bf16.mxu0 0
  %1501 = vmatmul.mubr.bf16.gmra.mxu0 %v1387
  %v1502 = vpop.f32.mrf.mxu0
  %v1503 = vadd.f32 0.0, %v1502
  %v1504 = vpop.f32.mrf.mxu0
  %v1505 = vpop.f32.mrf.mxu0
  %v1506 = vadd.f32 0.0, %v1505
  %v1507 = vpop.f32.mrf.mxu0
  %1508 = vmatprep.mubr.bf16.mxu0 0
  %1509 = vmatmul.mubr.bf16.gmra.mxu0 %v1390
  %v1510 = vpop.f32.mrf.mxu0
  %v1511 = vadd.f32 0.0, %v1510
  %v1512 = vpop.f32.mrf.mxu0
  %v1513 = vpop.f32.mrf.mxu0
  %v1514 = vadd.f32 0.0, %v1513
  %v1515 = vpop.f32.mrf.mxu0
  %1516 = vmatprep.mubr.bf16.mxu0 0
  %1517 = vmatmul.mubr.bf16.gmra.mxu0 %v1393
  %v1518 = vpop.f32.mrf.mxu0
  %v1519 = vadd.f32 0.0, %v1518
  %v1520 = vpop.f32.mrf.mxu0
  %v1521 = vpop.f32.mrf.mxu0
  %v1522 = vadd.f32 0.0, %v1521
  %v1523 = vpop.f32.mrf.mxu0
  %1524 = vmatprep.mubr.bf16.mxu0 0
  %1525 = vmatmul.mubr.bf16.gmra.mxu0 %v1396
  %v1526 = vpop.f32.mrf.mxu0
  %v1527 = vadd.f32 0.0, %v1526
  %v1528 = vpop.f32.mrf.mxu0
  %v1529 = vpop.f32.mrf.mxu0
  %v1530 = vadd.f32 0.0, %v1529
  %v1531 = vpop.f32.mrf.mxu0
  %1532 = vmatprep.mubr.bf16.mxu0 0
  %1533 = vmatmul.mubr.bf16.gmra.mxu0 %v1399
  %v1534 = vpop.f32.mrf.mxu0
  %v1535 = vadd.f32 0.0, %v1534
  %v1536 = vpop.f32.mrf.mxu0
  %v1537 = vpop.f32.mrf.mxu0
  %v1538 = vadd.f32 0.0, %v1537
  %v1539 = vpop.f32.mrf.mxu0
  %1540 = vmatprep.mubr.bf16.mxu0 0
  %1541 = vmatmul.mubr.bf16.gmra.mxu0 %v1402
  %v1542 = vpop.f32.mrf.mxu0
  %v1543 = vadd.f32 0.0, %v1542
  %v1544 = vpop.f32.mrf.mxu0
  %v1545 = vpop.f32.mrf.mxu0
  %v1546 = vadd.f32 0.0, %v1545
  %v1547 = vpop.f32.mrf.mxu0
  %1548 = vmatprep.mubr.bf16.mxu0 0
  %1549 = vmatmul.mubr.bf16.gmra.mxu0 %v1405
  %v1550 = vpop.f32.mrf.mxu0
  %v1551 = vadd.f32 0.0, %v1550
  %v1552 = vpop.f32.mrf.mxu0
  %v1553 = vpop.f32.mrf.mxu0
  %v1554 = vadd.f32 0.0, %v1553
  %v1555 = vpop.f32.mrf.mxu0
  %1556 = vmatprep.mubr.bf16.mxu0 0
  %1557 = vmatmul.mubr.bf16.gmra.mxu0 %v1408
  %v1558 = vpop.f32.mrf.mxu0
  %v1559 = vadd.f32 0.0, %v1558
  %v1560 = vpop.f32.mrf.mxu0
  %v1561 = vpop.f32.mrf.mxu0
  %v1562 = vadd.f32 0.0, %v1561
  %v1563 = vpop.f32.mrf.mxu0
  %1564 = vmatprep.mubr.bf16.mxu0 0
  %1565 = vmatmul.mubr.bf16.gmra.mxu0 %v1411
  %v1566 = vpop.f32.mrf.mxu0
  %v1567 = vadd.f32 0.0, %v1566
  %v1568 = vpop.f32.mrf.mxu0
  %v1569 = vpop.f32.mrf.mxu0
  %v1570 = vadd.f32 0.0, %v1569
  %v1571 = vpop.f32.mrf.mxu0
  %1572 = vmatprep.mubr.bf16.mxu0 0
  %1573 = vmatmul.mubr.bf16.gmra.mxu0 %v1414
  %v1574 = vpop.f32.mrf.mxu0
  %v1575 = vadd.f32 0.0, %v1574
  %v1576 = vpop.f32.mrf.mxu0
  %v1577 = vpop.f32.mrf.mxu0
  %v1578 = vadd.f32 0.0, %v1577
  %v1579 = vpop.f32.mrf.mxu0
  %1580 = vmatprep.mubr.bf16.mxu0 0
  %1581 = vmatmul.mubr.bf16.gmra.mxu0 %v1417
  %v1582 = vpop.f32.mrf.mxu0
  %v1583 = vadd.f32 0.0, %v1582
  %v1584 = vpop.f32.mrf.mxu0
  %v1585 = vpop.f32.mrf.mxu0
  %v1586 = vadd.f32 0.0, %v1585
  %v1587 = vpop.f32.mrf.mxu0
  %1588 = vmatprep.mubr.bf16.mxu0 0
  %1589 = vmatmul.mubr.bf16.gmra.mxu0 %v1420
  %v1590 = vpop.f32.mrf.mxu0
  %v1591 = vadd.f32 0.0, %v1590
  %v1592 = vpop.f32.mrf.mxu0
  %v1593 = vpop.f32.mrf.mxu0
  %v1594 = vadd.f32 0.0, %v1593
  %v1595 = vpop.f32.mrf.mxu0
  %1596 = vmatprep.mubr.bf16.mxu0 0
  %1597 = vmatmul.mubr.bf16.gmra.mxu0 %v1423
  %v1598 = vpop.f32.mrf.mxu0
  %v1599 = vadd.f32 0.0, %v1598
  %v1600 = vpop.f32.mrf.mxu0
  %v1601 = vpop.f32.mrf.mxu0
  %v1602 = vadd.f32 0.0, %v1601
  %v1603 = vpop.f32.mrf.mxu0
  %1604 = vdwg.mxu0
  %v1605 = vadd.f32 %v1198, %v1463
  %v1606 = vadd.f32 %v1199, %v1466
  %v1607 = vadd.f32 %v1200, %v1471
  %v1608 = vadd.f32 %v1201, %v1474
  %v1609 = vadd.f32 %v1202, %v1479
  %v1610 = vadd.f32 %v1203, %v1482
  %v1611 = vadd.f32 %v1204, %v1487
  %v1612 = vadd.f32 %v1205, %v1490
  %v1613 = vadd.f32 %v1206, %v1495
  %v1614 = vadd.f32 %v1207, %v1498
  %v1615 = vadd.f32 %v1208, %v1503
  %v1616 = vadd.f32 %v1209, %v1506
  %v1617 = vadd.f32 %v1210, %v1511
  %v1618 = vadd.f32 %v1211, %v1514
  %v1619 = vadd.f32 %v1212, %v1519
  %v1620 = vadd.f32 %v1213, %v1522
  %v1621 = vadd.f32 %v1214, %v1527
  %v1622 = vadd.f32 %v1215, %v1530
  %v1623 = vadd.f32 %v1216, %v1535
  %v1624 = vadd.f32 %v1217, %v1538
  %v1625 = vadd.f32 %v1218, %v1543
  %v1626 = vadd.f32 %v1219, %v1546
  %v1627 = vadd.f32 %v1220, %v1551
  %v1628 = vadd.f32 %v1221, %v1554
  %v1629 = vadd.f32 %v1222, %v1559
  %v1630 = vadd.f32 %v1223, %v1562
  %v1631 = vadd.f32 %v1224, %v1567
  %v1632 = vadd.f32 %v1225, %v1570
  %v1633 = vadd.f32 %v1226, %v1575
  %v1634 = vadd.f32 %v1227, %v1578
  %v1635 = vadd.f32 %v1228, %v1583
  %v1636 = vadd.f32 %v1229, %v1586
  %v1637 = vadd.f32 %v1230, %v1591
  %v1638 = vadd.f32 %v1231, %v1594
  %v1639 = vadd.f32 %v1232, %v1599
  %v1640 = vadd.f32 %v1233, %v1602
  %1641 = vst.msk [vmem:[#allocation2] sm:$0xff] %vm15, %v1605
  %1642 = vst.msk [vmem:[#allocation2 + $0x8] sm:$0xff] %vm15, %v1606
  %1643 = vst.msk [vmem:[#allocation2 + $0x10] sm:$0xff] %vm15, %v1607
  %1644 = vst.msk [vmem:[#allocation2 + $0x18] sm:$0xff] %vm15, %v1608
  %1645 = vst.msk [vmem:[#allocation2 + $0x20] sm:$0xff] %vm15, %v1609
  %1646 = vst.msk [vmem:[#allocation2 + $0x28] sm:$0xff] %vm15, %v1610
  %1647 = vst.msk [vmem:[#allocation2 + $0x30] sm:$0xff] %vm15, %v1611
  %1648 = vst.msk [vmem:[#allocation2 + $0x38] sm:$0xff] %vm15, %v1612
  %1649 = vst.msk [vmem:[#allocation2 + $0x40] sm:$0xff] %vm15, %v1613
  %1650 = vst.msk [vmem:[#allocation2 + $0x48] sm:$0xff] %vm15, %v1614
  %1651 = vst.msk [vmem:[#allocation2 + $0x50] sm:$0xff] %vm15, %v1615
  %1652 = vst.msk [vmem:[#allocation2 + $0x58] sm:$0xff] %vm15, %v1616
  %1653 = vst.msk [vmem:[#allocation2 + $0x60] sm:$0xff] %vm15, %v1617
  %1654 = vst.msk [vmem:[#allocation2 + $0x68] sm:$0xff] %vm15, %v1618
  %1655 = vst.msk [vmem:[#allocation2 + $0x70] sm:$0xff] %vm15, %v1619
  %1656 = vst.msk [vmem:[#allocation2 + $0x78] sm:$0xff] %vm15, %v1620
  %1657 = vst.msk [vmem:[#allocation2 + $0x80] sm:$0xff] %vm15, %v1621
  %1658 = vst.msk [vmem:[#allocation2 + $0x88] sm:$0xff] %vm15, %v1622
  %1659 = vst.msk [vmem:[#allocation2 + $0x90] sm:$0xff] %vm15, %v1623
  %1660 = vst.msk [vmem:[#allocation2 + $0x98] sm:$0xff] %vm15, %v1624
  %1661 = vst.msk [vmem:[#allocation2 + $0xa0] sm:$0xff] %vm15, %v1625
  %1662 = vst.msk [vmem:[#allocation2 + $0xa8] sm:$0xff] %vm15, %v1626
  %1663 = vst.msk [vmem:[#allocation2 + $0xb0] sm:$0xff] %vm15, %v1627
  %1664 = vst.msk [vmem:[#allocation2 + $0xb8] sm:$0xff] %vm15, %v1628
  %1665 = vst.msk [vmem:[#allocation2 + $0xc0] sm:$0xff] %vm15, %v1629
  %1666 = vst.msk [vmem:[#allocation2 + $0xc8] sm:$0xff] %vm15, %v1630
  %1667 = vst.msk [vmem:[#allocation2 + $0xd0] sm:$0xff] %vm15, %v1631
  %1668 = vst.msk [vmem:[#allocation2 + $0xd8] sm:$0xff] %vm15, %v1632
  %1669 = vst.msk [vmem:[#allocation2 + $0xe0] sm:$0xff] %vm15, %v1633
  %1670 = vst.msk [vmem:[#allocation2 + $0xe8] sm:$0xff] %vm15, %v1634
  %1671 = vst.msk [vmem:[#allocation2 + $0xf0] sm:$0xff] %vm15, %v1635
  %1672 = vst.msk [vmem:[#allocation2 + $0xf8] sm:$0xff] %vm15, %v1636
  %1673 = vst.msk [vmem:[#allocation2 + $0x100] sm:$0xff] %vm15, %v1637
  %1674 = vst.msk [vmem:[#allocation2 + $0x108] sm:$0xff] %vm15, %v1638
  %1675 = vst.msk [vmem:[#allocation2 + $0x110] sm:$0xff] %vm15, %v1639
  %1676 = vst.msk [vmem:[#allocation2 + $0x118] sm:$0xff] %vm15, %v1640
  %v1677 = vld [vmem:[%s0 + $0x8] sm:$0xe]
  %v1678 = vld [vmem:[%s0 + $0xc] sm:$0xf]
  %v1679 = vld [vmem:[%s0 + $0x10] sm:$0xf]
  %v1680 = vld [vmem:[%s0 + $0x14] sm:$0xf]
  %v1681 = vld [vmem:[%s0 + $0x18] sm:$0xf]
  %v1682 = vld [vmem:[%s0 + $0x1c] sm:$0xf]
  %v1683 = vld [vmem:[%s0 + $0x20] sm:$0xf]
  %v1684 = vld [vmem:[%s0 + $0x24] sm:$0xf]
  %v1685 = vld [vmem:[%s0 + $0x28] sm:$0xf]
  %v1686 = vld [vmem:[%s0 + $0x2c] sm:$0xf]
  %v1687 = vld [vmem:[%s0 + $0x30] sm:$0xf]
  %v1688 = vld [vmem:[%s0 + $0x34] sm:$0xf]
  %v1689 = vld [vmem:[%s0 + $0x38] sm:$0xf]
  %v1690 = vld [vmem:[%s0 + $0x3c] sm:$0xf]
  %v1691 = vld [vmem:[%s0 + $0x40] sm:$0xf]
  %v1692 = vld [vmem:[%s0 + $0x44] sm:$0xf]
  %v1693 = vld [vmem:[%s0 + $0x48] sm:$0xf]
  %v1694 = vld [vmem:[%s0 + $0x4c] sm:$0xf]
  %v1695 = vld [vmem:[%s0 + $0x50] sm:$0xf]
  %v1696 = vld [vmem:[%s0 + $0x54] sm:$0xf]
  %v1697 = vld [vmem:[%s0 + $0x58] sm:$0xf]
  %v1698 = vld [vmem:[%s0 + $0x5c] sm:$0xf]
  %v1699 = vld [vmem:[%s0 + $0x60] sm:$0xf]
  %v1700 = vld [vmem:[%s0 + $0x64] sm:$0xf]
  %v1701 = vld [vmem:[%s0 + $0x68] sm:$0xf]
  %v1702 = vld [vmem:[%s0 + $0x6c] sm:$0xf]
  %v1703 = vld [vmem:[%s0 + $0x70] sm:$0xf]
  %v1704 = vld [vmem:[%s0 + $0x74] sm:$0xf]
  %v1705 = vld [vmem:[%s0 + $0x78] sm:$0xf]
  %v1706 = vld [vmem:[%s0 + $0x7c] sm:$0xf]
  %v1707 = vld [vmem:[%s0 + $0x80] sm:$0xf]
  %v1708 = vld [vmem:[%s0 + $0x84] sm:$0xf]
  %v1709 = vld [vmem:[%s0 + $0x88] sm:$0xf]
  %v1710 = vld [vmem:[%s0 + $0x8c] sm:$0xf]
  %v1711 = vld [vmem:[%s0 + $0x90] sm:$0xf]
  %v1712 = vld [vmem:[%s0 + $0x94] sm:$0xf]
  %v1713 = vld [vmem:[%s0 + $0x98] sm:$0x1]
  %v1714 = vld [vmem:[%s1 + $0x4] sm:$0x3]
  %v1715 = vld [vmem:[#allocation2] sm:$0xff]
  %v1716 = vld [vmem:[#allocation2 + $0x8] sm:$0xff]
  %v1717 = vld [vmem:[#allocation2 + $0x10] sm:$0xff]
  %v1718 = vld [vmem:[#allocation2 + $0x18] sm:$0xff]
  %v1719 = vld [vmem:[#allocation2 + $0x20] sm:$0xff]
  %v1720 = vld [vmem:[#allocation2 + $0x28] sm:$0xff]
  %v1721 = vld [vmem:[#allocation2 + $0x30] sm:$0xff]
  %v1722 = vld [vmem:[#allocation2 + $0x38] sm:$0xff]
  %v1723 = vld [vmem:[#allocation2 + $0x40] sm:$0xff]
  %v1724 = vld [vmem:[#allocation2 + $0x48] sm:$0xff]
  %v1725 = vld [vmem:[#allocation2 + $0x50] sm:$0xff]
  %v1726 = vld [vmem:[#allocation2 + $0x58] sm:$0xff]
  %v1727 = vld [vmem:[#allocation2 + $0x60] sm:$0xff]
  %v1728 = vld [vmem:[#allocation2 + $0x68] sm:$0xff]
  %v1729 = vld [vmem:[#allocation2 + $0x70] sm:$0xff]
  %v1730 = vld [vmem:[#allocation2 + $0x78] sm:$0xff]
  %v1731 = vld [vmem:[#allocation2 + $0x80] sm:$0xff]
  %v1732 = vld [vmem:[#allocation2 + $0x88] sm:$0xff]
  %v1733 = vld [vmem:[#allocation2 + $0x90] sm:$0xff]
  %v1734 = vld [vmem:[#allocation2 + $0x98] sm:$0xff]
  %v1735 = vld [vmem:[#allocation2 + $0xa0] sm:$0xff]
  %v1736 = vld [vmem:[#allocation2 + $0xa8] sm:$0xff]
  %v1737 = vld [vmem:[#allocation2 + $0xb0] sm:$0xff]
  %v1738 = vld [vmem:[#allocation2 + $0xb8] sm:$0xff]
  %v1739 = vld [vmem:[#allocation2 + $0xc0] sm:$0xff]
  %v1740 = vld [vmem:[#allocation2 + $0xc8] sm:$0xff]
  %v1741 = vld [vmem:[#allocation2 + $0xd0] sm:$0xff]
  %v1742 = vld [vmem:[#allocation2 + $0xd8] sm:$0xff]
  %v1743 = vld [vmem:[#allocation2 + $0xe0] sm:$0xff]
  %v1744 = vld [vmem:[#allocation2 + $0xe8] sm:$0xff]
  %v1745 = vld [vmem:[#allocation2 + $0xf0] sm:$0xff]
  %v1746 = vld [vmem:[#allocation2 + $0xf8] sm:$0xff]
  %v1747 = vld [vmem:[#allocation2 + $0x100] sm:$0xff]
  %v1748 = vld [vmem:[#allocation2 + $0x108] sm:$0xff]
  %v1749 = vld [vmem:[#allocation2 + $0x110] sm:$0xff]
  %v1750 = vld [vmem:[#allocation2 + $0x118] sm:$0xff]
  %v1788 = vunpack.c.l.b16 %v1677
  %v1789 = vunpack.c.l.b16 %v1678
  %v1790 = vunpack.c.l.b16 %v1679
  %v1791 = vunpack.c.l.b16 %v1680
  %v1792 = vunpack.c.l.b16 %v1681
  %v1793 = vunpack.c.l.b16 %v1682
  %v1794 = vunpack.c.l.b16 %v1683
  %v1795 = vunpack.c.l.b16 %v1684
  %v1796 = vunpack.c.l.b16 %v1685
  %v1797 = vunpack.c.l.b16 %v1686
  %v1798 = vunpack.c.l.b16 %v1687
  %v1799 = vunpack.c.l.b16 %v1688
  %v1800 = vunpack.c.l.b16 %v1689
  %v1801 = vunpack.c.l.b16 %v1690
  %v1802 = vunpack.c.l.b16 %v1691
  %v1803 = vunpack.c.l.b16 %v1692
  %v1804 = vunpack.c.l.b16 %v1693
  %v1805 = vunpack.c.l.b16 %v1694
  %v1806 = vunpack.c.l.b16 %v1695
  %v1807 = vunpack.c.l.b16 %v1696
  %v1808 = vunpack.c.l.b16 %v1697
  %v1809 = vunpack.c.l.b16 %v1698
  %v1810 = vunpack.c.l.b16 %v1699
  %v1811 = vunpack.c.l.b16 %v1700
  %v1812 = vunpack.c.l.b16 %v1701
  %v1813 = vunpack.c.l.b16 %v1702
  %v1814 = vunpack.c.l.b16 %v1703
  %v1815 = vunpack.c.l.b16 %v1704
  %v1816 = vunpack.c.l.b16 %v1705
  %v1817 = vunpack.c.l.b16 %v1706
  %v1818 = vunpack.c.l.b16 %v1707
  %v1819 = vunpack.c.l.b16 %v1708
  %v1820 = vunpack.c.l.b16 %v1709
  %v1821 = vunpack.c.l.b16 %v1710
  %v1822 = vunpack.c.l.b16 %v1711
  %v1823 = vunpack.c.l.b16 %v1712
  %v1824 = vunpack.c.l.b16 %v1713
  %v1825 = vpack.c.b16 %v1789, %v1788
  %v1826 = vpack.c.b16 %v1791, %v1790
  %v1827 = vpack.c.b16 %v1793, %v1792
  %v1828 = vpack.c.b16 %v1795, %v1794
  %v1829 = vpack.c.b16 %v1797, %v1796
  %v1830 = vpack.c.b16 %v1799, %v1798
  %v1831 = vpack.c.b16 %v1801, %v1800
  %v1832 = vpack.c.b16 %v1803, %v1802
  %v1833 = vpack.c.b16 %v1805, %v1804
  %v1834 = vpack.c.b16 %v1807, %v1806
  %v1835 = vpack.c.b16 %v1809, %v1808
  %v1836 = vpack.c.b16 %v1811, %v1810
  %v1837 = vpack.c.b16 %v1813, %v1812
  %v1838 = vpack.c.b16 %v1815, %v1814
  %v1839 = vpack.c.b16 %v1817, %v1816
  %v1840 = vpack.c.b16 %v1819, %v1818
  %v1841 = vpack.c.b16 %v1821, %v1820
  %v1842 = vpack.c.b16 %v1823, %v1822
  %v1843 = vpack.c.b16 %v1824, %v1824
  %v1844 = vrot.slane %v1825, 1
  %v1845 = vrot.slane %v1826, 1
  %v1846 = vsel %vm1327, %v1844, %v1845
  %v1847 = vrot.slane %v1827, 1
  %v1848 = vsel %vm1327, %v1845, %v1847
  %v1849 = vrot.slane %v1828, 1
  %v1850 = vsel %vm1327, %v1847, %v1849
  %v1851 = vrot.slane %v1829, 1
  %v1852 = vsel %vm1327, %v1849, %v1851
  %v1853 = vrot.slane %v1830, 1
  %v1854 = vsel %vm1327, %v1851, %v1853
  %v1855 = vrot.slane %v1831, 1
  %v1856 = vsel %vm1327, %v1853, %v1855
  %v1857 = vrot.slane %v1832, 1
  %v1858 = vsel %vm1327, %v1855, %v1857
  %v1859 = vrot.slane %v1833, 1
  %v1860 = vsel %vm1327, %v1857, %v1859
  %v1861 = vrot.slane %v1834, 1
  %v1862 = vsel %vm1327, %v1859, %v1861
  %v1863 = vrot.slane %v1835, 1
  %v1864 = vsel %vm1327, %v1861, %v1863
  %v1865 = vrot.slane %v1836, 1
  %v1866 = vsel %vm1327, %v1863, %v1865
  %v1867 = vrot.slane %v1837, 1
  %v1868 = vsel %vm1327, %v1865, %v1867
  %v1869 = vrot.slane %v1838, 1
  %v1870 = vsel %vm1327, %v1867, %v1869
  %v1871 = vrot.slane %v1839, 1
  %v1872 = vsel %vm1327, %v1869, %v1871
  %v1873 = vrot.slane %v1840, 1
  %v1874 = vsel %vm1327, %v1871, %v1873
  %v1875 = vrot.slane %v1841, 1
  %v1876 = vsel %vm1327, %v1873, %v1875
  %v1877 = vrot.slane %v1842, 1
  %v1878 = vsel %vm1327, %v1875, %v1877
  %v1879 = vrot.slane %v1843, 1
  %v1880 = vsel %vm1327, %v1877, %v1879
  %v1882 = vunpack.c.l.b16 %v1714
  %v1883 = vpack.c.b16 %v1882, %v1882
  %v1885 = vshrl.u32 %v1883, 16
  %v1887 = vshll.u32 %v1883, 16
  %v1889 = vrot.slane %v1887, 1
  %v1890 = vor.u32 %v1885, %v1889
  %v1892 = vsel %vm215, %v1846, 0
  %v1895 = vsel %vm215, %v1848, 0
  %v1898 = vsel %vm215, %v1850, 0
  %v1901 = vsel %vm215, %v1852, 0
  %v1904 = vsel %vm215, %v1854, 0
  %v1907 = vsel %vm215, %v1856, 0
  %v1910 = vsel %vm215, %v1858, 0
  %v1913 = vsel %vm215, %v1860, 0
  %v1916 = vsel %vm215, %v1862, 0
  %v1919 = vsel %vm215, %v1864, 0
  %v1922 = vsel %vm215, %v1866, 0
  %v1925 = vsel %vm215, %v1868, 0
  %v1928 = vsel %vm215, %v1870, 0
  %v1931 = vsel %vm215, %v1872, 0
  %v1934 = vsel %vm215, %v1874, 0
  %v1937 = vsel %vm215, %v1876, 0
  %v1940 = vsel %vm215, %v1878, 0
  %v1943 = vsel %vm215, %v1880, 0
  %v1946 = vand.u32 %v1890, %v273
  %1948 = vmatprep.subr.bf16.mxu0 0
  %1949 = vmatpush1.bf16.msra.mxu0 0
  %1950 = vmatprep.subr.bf16.mxu0 0
  %1951 = vmatpush1.bf16.msra.mxu0 0
  %1952 = vmatprep.subr.bf16.mxu0 0
  %1953 = vmatpush1.bf16.msra.mxu0 0
  %1954 = vmatprep.subr.bf16.mxu0 0
  %1955 = vmatpush1.bf16.msra.mxu0 0
  %1956 = vmatprep.subr.bf16.mxu0 0
  %1957 = vmatpush1.bf16.msra.mxu0 0
  %1958 = vmatprep.subr.bf16.mxu0 0
  %1959 = vmatpush1.bf16.msra.mxu0 0
  %1960 = vmatprep.subr.bf16.mxu0 0
  %1961 = vmatpush1.bf16.msra.mxu0 0
  %1962 = vmatprep.subr.bf16.mxu0 0
  %1963 = vmatpush1.bf16.msra.mxu0 %v1946
  %1964 = vmatprep.subr.bf16.mxu0 0
  %1965 = vmatpush2.bf16.msra.mxu0 0
  %1966 = vmatprep.subr.bf16.mxu0 0
  %1967 = vmatpush2.bf16.msra.mxu0 0
  %1968 = vmatprep.subr.bf16.mxu0 0
  %1969 = vmatpush2.bf16.msra.mxu0 0
  %1970 = vmatprep.subr.bf16.mxu0 0
  %1971 = vmatpush2.bf16.msra.mxu0 0
  %1972 = vmatprep.subr.bf16.mxu0 0
  %1973 = vmatpush2.bf16.msra.mxu0 0
  %1974 = vmatprep.subr.bf16.mxu0 0
  %1975 = vmatpush2.bf16.msra.mxu0 0
  %1976 = vmatprep.subr.bf16.mxu0 0
  %1977 = vmatpush2.bf16.msra.mxu0 0
  %1978 = vmatprep.subr.bf16.mxu0 0
  %1979 = vmatpush2.bf16.msra.mxu0 0
  %1980 = vmatprep.mubr.bf16.mxu0 0
  %1981 = vmatmul.mubr.bf16.gmra.mxu0 %v1892
  %v1982 = vpop.f32.mrf.mxu0
  %v1983 = vadd.f32 0.0, %v1982
  %v1984 = vpop.f32.mrf.mxu0
  %v1985 = vpop.f32.mrf.mxu0
  %v1986 = vadd.f32 0.0, %v1985
  %v1987 = vpop.f32.mrf.mxu0
  %1988 = vmatprep.mubr.bf16.mxu0 0
  %1989 = vmatmul.mubr.bf16.gmra.mxu0 %v1895
  %v1990 = vpop.f32.mrf.mxu0
  %v1991 = vadd.f32 0.0, %v1990
  %v1992 = vpop.f32.mrf.mxu0
  %v1993 = vpop.f32.mrf.mxu0
  %v1994 = vadd.f32 0.0, %v1993
  %v1995 = vpop.f32.mrf.mxu0
  %1996 = vmatprep.mubr.bf16.mxu0 0
  %1997 = vmatmul.mubr.bf16.gmra.mxu0 %v1898
  %v1998 = vpop.f32.mrf.mxu0
  %v1999 = vadd.f32 0.0, %v1998
  %v2000 = vpop.f32.mrf.mxu0
  %v2001 = vpop.f32.mrf.mxu0
  %v2002 = vadd.f32 0.0, %v2001
  %v2003 = vpop.f32.mrf.mxu0
  %2004 = vmatprep.mubr.bf16.mxu0 0
  %2005 = vmatmul.mubr.bf16.gmra.mxu0 %v1901
  %v2006 = vpop.f32.mrf.mxu0
  %v2007 = vadd.f32 0.0, %v2006
  %v2008 = vpop.f32.mrf.mxu0
  %v2009 = vpop.f32.mrf.mxu0
  %v2010 = vadd.f32 0.0, %v2009
  %v2011 = vpop.f32.mrf.mxu0
  %2012 = vmatprep.mubr.bf16.mxu0 0
  %2013 = vmatmul.mubr.bf16.gmra.mxu0 %v1904
  %v2014 = vpop.f32.mrf.mxu0
  %v2015 = vadd.f32 0.0, %v2014
  %v2016 = vpop.f32.mrf.mxu0
  %v2017 = vpop.f32.mrf.mxu0
  %v2018 = vadd.f32 0.0, %v2017
  %v2019 = vpop.f32.mrf.mxu0
  %2020 = vmatprep.mubr.bf16.mxu0 0
  %2021 = vmatmul.mubr.bf16.gmra.mxu0 %v1907
  %v2022 = vpop.f32.mrf.mxu0
  %v2023 = vadd.f32 0.0, %v2022
  %v2024 = vpop.f32.mrf.mxu0
  %v2025 = vpop.f32.mrf.mxu0
  %v2026 = vadd.f32 0.0, %v2025
  %v2027 = vpop.f32.mrf.mxu0
  %2028 = vmatprep.mubr.bf16.mxu0 0
  %2029 = vmatmul.mubr.bf16.gmra.mxu0 %v1910
  %v2030 = vpop.f32.mrf.mxu0
  %v2031 = vadd.f32 0.0, %v2030
  %v2032 = vpop.f32.mrf.mxu0
  %v2033 = vpop.f32.mrf.mxu0
  %v2034 = vadd.f32 0.0, %v2033
  %v2035 = vpop.f32.mrf.mxu0
  %2036 = vmatprep.mubr.bf16.mxu0 0
  %2037 = vmatmul.mubr.bf16.gmra.mxu0 %v1913
  %v2038 = vpop.f32.mrf.mxu0
  %v2039 = vadd.f32 0.0, %v2038
  %v2040 = vpop.f32.mrf.mxu0
  %v2041 = vpop.f32.mrf.mxu0
  %v2042 = vadd.f32 0.0, %v2041
  %v2043 = vpop.f32.mrf.mxu0
  %2044 = vmatprep.mubr.bf16.mxu0 0
  %2045 = vmatmul.mubr.bf16.gmra.mxu0 %v1916
  %v2046 = vpop.f32.mrf.mxu0
  %v2047 = vadd.f32 0.0, %v2046
  %v2048 = vpop.f32.mrf.mxu0
  %v2049 = vpop.f32.mrf.mxu0
  %v2050 = vadd.f32 0.0, %v2049
  %v2051 = vpop.f32.mrf.mxu0
  %2052 = vmatprep.mubr.bf16.mxu0 0
  %2053 = vmatmul.mubr.bf16.gmra.mxu0 %v1919
  %v2054 = vpop.f32.mrf.mxu0
  %v2055 = vadd.f32 0.0, %v2054
  %v2056 = vpop.f32.mrf.mxu0
  %v2057 = vpop.f32.mrf.mxu0
  %v2058 = vadd.f32 0.0, %v2057
  %v2059 = vpop.f32.mrf.mxu0
  %2060 = vmatprep.mubr.bf16.mxu0 0
  %2061 = vmatmul.mubr.bf16.gmra.mxu0 %v1922
  %v2062 = vpop.f32.mrf.mxu0
  %v2063 = vadd.f32 0.0, %v2062
  %v2064 = vpop.f32.mrf.mxu0
  %v2065 = vpop.f32.mrf.mxu0
  %v2066 = vadd.f32 0.0, %v2065
  %v2067 = vpop.f32.mrf.mxu0
  %2068 = vmatprep.mubr.bf16.mxu0 0
  %2069 = vmatmul.mubr.bf16.gmra.mxu0 %v1925
  %v2070 = vpop.f32.mrf.mxu0
  %v2071 = vadd.f32 0.0, %v2070
  %v2072 = vpop.f32.mrf.mxu0
  %v2073 = vpop.f32.mrf.mxu0
  %v2074 = vadd.f32 0.0, %v2073
  %v2075 = vpop.f32.mrf.mxu0
  %2076 = vmatprep.mubr.bf16.mxu0 0
  %2077 = vmatmul.mubr.bf16.gmra.mxu0 %v1928
  %v2078 = vpop.f32.mrf.mxu0
  %v2079 = vadd.f32 0.0, %v2078
  %v2080 = vpop.f32.mrf.mxu0
  %v2081 = vpop.f32.mrf.mxu0
  %v2082 = vadd.f32 0.0, %v2081
  %v2083 = vpop.f32.mrf.mxu0
  %2084 = vmatprep.mubr.bf16.mxu0 0
  %2085 = vmatmul.mubr.bf16.gmra.mxu0 %v1931
  %v2086 = vpop.f32.mrf.mxu0
  %v2087 = vadd.f32 0.0, %v2086
  %v2088 = vpop.f32.mrf.mxu0
  %v2089 = vpop.f32.mrf.mxu0
  %v2090 = vadd.f32 0.0, %v2089
  %v2091 = vpop.f32.mrf.mxu0
  %2092 = vmatprep.mubr.bf16.mxu0 0
  %2093 = vmatmul.mubr.bf16.gmra.mxu0 %v1934
  %v2094 = vpop.f32.mrf.mxu0
  %v2095 = vadd.f32 0.0, %v2094
  %v2096 = vpop.f32.mrf.mxu0
  %v2097 = vpop.f32.mrf.mxu0
  %v2098 = vadd.f32 0.0, %v2097
  %v2099 = vpop.f32.mrf.mxu0
  %2100 = vmatprep.mubr.bf16.mxu0 0
  %2101 = vmatmul.mubr.bf16.gmra.mxu0 %v1937
  %v2102 = vpop.f32.mrf.mxu0
  %v2103 = vadd.f32 0.0, %v2102
  %v2104 = vpop.f32.mrf.mxu0
  %v2105 = vpop.f32.mrf.mxu0
  %v2106 = vadd.f32 0.0, %v2105
  %v2107 = vpop.f32.mrf.mxu0
  %2108 = vmatprep.mubr.bf16.mxu0 0
  %2109 = vmatmul.mubr.bf16.gmra.mxu0 %v1940
  %v2110 = vpop.f32.mrf.mxu0
  %v2111 = vadd.f32 0.0, %v2110
  %v2112 = vpop.f32.mrf.mxu0
  %v2113 = vpop.f32.mrf.mxu0
  %v2114 = vadd.f32 0.0, %v2113
  %v2115 = vpop.f32.mrf.mxu0
  %2116 = vmatprep.mubr.bf16.mxu0 0
  %2117 = vmatmul.mubr.bf16.gmra.mxu0 %v1943
  %v2118 = vpop.f32.mrf.mxu0
  %v2119 = vadd.f32 0.0, %v2118
  %v2120 = vpop.f32.mrf.mxu0
  %v2121 = vpop.f32.mrf.mxu0
  %v2122 = vadd.f32 0.0, %v2121
  %v2123 = vpop.f32.mrf.mxu0
  %2124 = vdwg.mxu0
  %v2125 = vadd.f32 %v1715, %v1983
  %v2126 = vadd.f32 %v1716, %v1986
  %v2127 = vadd.f32 %v1717, %v1991
  %v2128 = vadd.f32 %v1718, %v1994
  %v2129 = vadd.f32 %v1719, %v1999
  %v2130 = vadd.f32 %v1720, %v2002
  %v2131 = vadd.f32 %v1721, %v2007
  %v2132 = vadd.f32 %v1722, %v2010
  %v2133 = vadd.f32 %v1723, %v2015
  %v2134 = vadd.f32 %v1724, %v2018
  %v2135 = vadd.f32 %v1725, %v2023
  %v2136 = vadd.f32 %v1726, %v2026
  %v2137 = vadd.f32 %v1727, %v2031
  %v2138 = vadd.f32 %v1728, %v2034
  %v2139 = vadd.f32 %v1729, %v2039
  %v2140 = vadd.f32 %v1730, %v2042
  %v2141 = vadd.f32 %v1731, %v2047
  %v2142 = vadd.f32 %v1732, %v2050
  %v2143 = vadd.f32 %v1733, %v2055
  %v2144 = vadd.f32 %v1734, %v2058
  %v2145 = vadd.f32 %v1735, %v2063
  %v2146 = vadd.f32 %v1736, %v2066
  %v2147 = vadd.f32 %v1737, %v2071
  %v2148 = vadd.f32 %v1738, %v2074
  %v2149 = vadd.f32 %v1739, %v2079
  %v2150 = vadd.f32 %v1740, %v2082
  %v2151 = vadd.f32 %v1741, %v2087
  %v2152 = vadd.f32 %v1742, %v2090
  %v2153 = vadd.f32 %v1743, %v2095
  %v2154 = vadd.f32 %v1744, %v2098
  %v2155 = vadd.f32 %v1745, %v2103
  %v2156 = vadd.f32 %v1746, %v2106
  %v2157 = vadd.f32 %v1747, %v2111
  %v2158 = vadd.f32 %v1748, %v2114
  %v2159 = vadd.f32 %v1749, %v2119
  %v2160 = vadd.f32 %v1750, %v2122
  %2161 = vst.msk [vmem:[#allocation2] sm:$0xff] %vm15, %v2125
  %2162 = vst.msk [vmem:[#allocation2 + $0x8] sm:$0xff] %vm15, %v2126
  %2163 = vst.msk [vmem:[#allocation2 + $0x10] sm:$0xff] %vm15, %v2127
  %2164 = vst.msk [vmem:[#allocation2 + $0x18] sm:$0xff] %vm15, %v2128
  %2165 = vst.msk [vmem:[#allocation2 + $0x20] sm:$0xff] %vm15, %v2129
  %2166 = vst.msk [vmem:[#allocation2 + $0x28] sm:$0xff] %vm15, %v2130
  %2167 = vst.msk [vmem:[#allocation2 + $0x30] sm:$0xff] %vm15, %v2131
  %2168 = vst.msk [vmem:[#allocation2 + $0x38] sm:$0xff] %vm15, %v2132
  %2169 = vst.msk [vmem:[#allocation2 + $0x40] sm:$0xff] %vm15, %v2133
  %2170 = vst.msk [vmem:[#allocation2 + $0x48] sm:$0xff] %vm15, %v2134
  %2171 = vst.msk [vmem:[#allocation2 + $0x50] sm:$0xff] %vm15, %v2135
  %2172 = vst.msk [vmem:[#allocation2 + $0x58] sm:$0xff] %vm15, %v2136
  %2173 = vst.msk [vmem:[#allocation2 + $0x60] sm:$0xff] %vm15, %v2137
  %2174 = vst.msk [vmem:[#allocation2 + $0x68] sm:$0xff] %vm15, %v2138
  %2175 = vst.msk [vmem:[#allocation2 + $0x70] sm:$0xff] %vm15, %v2139
  %2176 = vst.msk [vmem:[#allocation2 + $0x78] sm:$0xff] %vm15, %v2140
  %2177 = vst.msk [vmem:[#allocation2 + $0x80] sm:$0xff] %vm15, %v2141
  %2178 = vst.msk [vmem:[#allocation2 + $0x88] sm:$0xff] %vm15, %v2142
  %2179 = vst.msk [vmem:[#allocation2 + $0x90] sm:$0xff] %vm15, %v2143
  %2180 = vst.msk [vmem:[#allocation2 + $0x98] sm:$0xff] %vm15, %v2144
  %2181 = vst.msk [vmem:[#allocation2 + $0xa0] sm:$0xff] %vm15, %v2145
  %2182 = vst.msk [vmem:[#allocation2 + $0xa8] sm:$0xff] %vm15, %v2146
  %2183 = vst.msk [vmem:[#allocation2 + $0xb0] sm:$0xff] %vm15, %v2147
  %2184 = vst.msk [vmem:[#allocation2 + $0xb8] sm:$0xff] %vm15, %v2148
  %2185 = vst.msk [vmem:[#allocation2 + $0xc0] sm:$0xff] %vm15, %v2149
  %2186 = vst.msk [vmem:[#allocation2 + $0xc8] sm:$0xff] %vm15, %v2150
  %2187 = vst.msk [vmem:[#allocation2 + $0xd0] sm:$0xff] %vm15, %v2151
  %2188 = vst.msk [vmem:[#allocation2 + $0xd8] sm:$0xff] %vm15, %v2152
  %2189 = vst.msk [vmem:[#allocation2 + $0xe0] sm:$0xff] %vm15, %v2153
  %2190 = vst.msk [vmem:[#allocation2 + $0xe8] sm:$0xff] %vm15, %v2154
  %2191 = vst.msk [vmem:[#allocation2 + $0xf0] sm:$0xff] %vm15, %v2155
  %2192 = vst.msk [vmem:[#allocation2 + $0xf8] sm:$0xff] %vm15, %v2156
  %2193 = vst.msk [vmem:[#allocation2 + $0x100] sm:$0xff] %vm15, %v2157
  %2194 = vst.msk [vmem:[#allocation2 + $0x108] sm:$0xff] %vm15, %v2158
  %2195 = vst.msk [vmem:[#allocation2 + $0x110] sm:$0xff] %vm15, %v2159
  %2196 = vst.msk [vmem:[#allocation2 + $0x118] sm:$0xff] %vm15, %v2160
  %v2197 = vld [vmem:[%s0 + $0x8] sm:$0xe]
  %v2198 = vld [vmem:[%s0 + $0xc] sm:$0xf]
  %v2199 = vld [vmem:[%s0 + $0x10] sm:$0xf]
  %v2200 = vld [vmem:[%s0 + $0x14] sm:$0xf]
  %v2201 = vld [vmem:[%s0 + $0x18] sm:$0xf]
  %v2202 = vld [vmem:[%s0 + $0x1c] sm:$0xf]
  %v2203 = vld [vmem:[%s0 + $0x20] sm:$0xf]
  %v2204 = vld [vmem:[%s0 + $0x24] sm:$0xf]
  %v2205 = vld [vmem:[%s0 + $0x28] sm:$0xf]
  %v2206 = vld [vmem:[%s0 + $0x2c] sm:$0xf]
  %v2207 = vld [vmem:[%s0 + $0x30] sm:$0xf]
  %v2208 = vld [vmem:[%s0 + $0x34] sm:$0xf]
  %v2209 = vld [vmem:[%s0 + $0x38] sm:$0xf]
  %v2210 = vld [vmem:[%s0 + $0x3c] sm:$0xf]
  %v2211 = vld [vmem:[%s0 + $0x40] sm:$0xf]
  %v2212 = vld [vmem:[%s0 + $0x44] sm:$0xf]
  %v2213 = vld [vmem:[%s0 + $0x48] sm:$0xf]
  %v2214 = vld [vmem:[%s0 + $0x4c] sm:$0xf]
  %v2215 = vld [vmem:[%s0 + $0x50] sm:$0xf]
  %v2216 = vld [vmem:[%s0 + $0x54] sm:$0xf]
  %v2217 = vld [vmem:[%s0 + $0x58] sm:$0xf]
  %v2218 = vld [vmem:[%s0 + $0x5c] sm:$0xf]
  %v2219 = vld [vmem:[%s0 + $0x60] sm:$0xf]
  %v2220 = vld [vmem:[%s0 + $0x64] sm:$0xf]
  %v2221 = vld [vmem:[%s0 + $0x68] sm:$0xf]
  %v2222 = vld [vmem:[%s0 + $0x6c] sm:$0xf]
  %v2223 = vld [vmem:[%s0 + $0x70] sm:$0xf]
  %v2224 = vld [vmem:[%s0 + $0x74] sm:$0xf]
  %v2225 = vld [vmem:[%s0 + $0x78] sm:$0xf]
  %v2226 = vld [vmem:[%s0 + $0x7c] sm:$0xf]
  %v2227 = vld [vmem:[%s0 + $0x80] sm:$0xf]
  %v2228 = vld [vmem:[%s0 + $0x84] sm:$0xf]
  %v2229 = vld [vmem:[%s0 + $0x88] sm:$0xf]
  %v2230 = vld [vmem:[%s0 + $0x8c] sm:$0xf]
  %v2231 = vld [vmem:[%s0 + $0x90] sm:$0xf]
  %v2232 = vld [vmem:[%s0 + $0x94] sm:$0xf]
  %v2233 = vld [vmem:[%s0 + $0x98] sm:$0x3]
  %v2234 = vld [vmem:[%s1 + $0x4] sm:$0xc]
  %v2235 = vld [vmem:[#allocation2] sm:$0xff]
  %v2236 = vld [vmem:[#allocation2 + $0x8] sm:$0xff]
  %v2237 = vld [vmem:[#allocation2 + $0x10] sm:$0xff]
  %v2238 = vld [vmem:[#allocation2 + $0x18] sm:$0xff]
  %v2239 = vld [vmem:[#allocation2 + $0x20] sm:$0xff]
  %v2240 = vld [vmem:[#allocation2 + $0x28] sm:$0xff]
  %v2241 = vld [vmem:[#allocation2 + $0x30] sm:$0xff]
  %v2242 = vld [vmem:[#allocation2 + $0x38] sm:$0xff]
  %v2243 = vld [vmem:[#allocation2 + $0x40] sm:$0xff]
  %v2244 = vld [vmem:[#allocation2 + $0x48] sm:$0xff]
  %v2245 = vld [vmem:[#allocation2 + $0x50] sm:$0xff]
  %v2246 = vld [vmem:[#allocation2 + $0x58] sm:$0xff]
  %v2247 = vld [vmem:[#allocation2 + $0x60] sm:$0xff]
  %v2248 = vld [vmem:[#allocation2 + $0x68] sm:$0xff]
  %v2249 = vld [vmem:[#allocation2 + $0x70] sm:$0xff]
  %v2250 = vld [vmem:[#allocation2 + $0x78] sm:$0xff]
  %v2251 = vld [vmem:[#allocation2 + $0x80] sm:$0xff]
  %v2252 = vld [vmem:[#allocation2 + $0x88] sm:$0xff]
  %v2253 = vld [vmem:[#allocation2 + $0x90] sm:$0xff]
  %v2254 = vld [vmem:[#allocation2 + $0x98] sm:$0xff]
  %v2255 = vld [vmem:[#allocation2 + $0xa0] sm:$0xff]
  %v2256 = vld [vmem:[#allocation2 + $0xa8] sm:$0xff]
  %v2257 = vld [vmem:[#allocation2 + $0xb0] sm:$0xff]
  %v2258 = vld [vmem:[#allocation2 + $0xb8] sm:$0xff]
  %v2259 = vld [vmem:[#allocation2 + $0xc0] sm:$0xff]
  %v2260 = vld [vmem:[#allocation2 + $0xc8] sm:$0xff]
  %v2261 = vld [vmem:[#allocation2 + $0xd0] sm:$0xff]
  %v2262 = vld [vmem:[#allocation2 + $0xd8] sm:$0xff]
  %v2263 = vld [vmem:[#allocation2 + $0xe0] sm:$0xff]
  %v2264 = vld [vmem:[#allocation2 + $0xe8] sm:$0xff]
  %v2265 = vld [vmem:[#allocation2 + $0xf0] sm:$0xff]
  %v2266 = vld [vmem:[#allocation2 + $0xf8] sm:$0xff]
  %v2267 = vld [vmem:[#allocation2 + $0x100] sm:$0xff]
  %v2268 = vld [vmem:[#allocation2 + $0x108] sm:$0xff]
  %v2269 = vld [vmem:[#allocation2 + $0x110] sm:$0xff]
  %v2270 = vld [vmem:[#allocation2 + $0x118] sm:$0xff]
  %v2308 = vunpack.c.l.b16 %v2197
  %v2309 = vunpack.c.l.b16 %v2198
  %v2310 = vunpack.c.l.b16 %v2199
  %v2311 = vunpack.c.l.b16 %v2200
  %v2312 = vunpack.c.l.b16 %v2201
  %v2313 = vunpack.c.l.b16 %v2202
  %v2314 = vunpack.c.l.b16 %v2203
  %v2315 = vunpack.c.l.b16 %v2204
  %v2316 = vunpack.c.l.b16 %v2205
  %v2317 = vunpack.c.l.b16 %v2206
  %v2318 = vunpack.c.l.b16 %v2207
  %v2319 = vunpack.c.l.b16 %v2208
  %v2320 = vunpack.c.l.b16 %v2209
  %v2321 = vunpack.c.l.b16 %v2210
  %v2322 = vunpack.c.l.b16 %v2211
  %v2323 = vunpack.c.l.b16 %v2212
  %v2324 = vunpack.c.l.b16 %v2213
  %v2325 = vunpack.c.l.b16 %v2214
  %v2326 = vunpack.c.l.b16 %v2215
  %v2327 = vunpack.c.l.b16 %v2216
  %v2328 = vunpack.c.l.b16 %v2217
  %v2329 = vunpack.c.l.b16 %v2218
  %v2330 = vunpack.c.l.b16 %v2219
  %v2331 = vunpack.c.l.b16 %v2220
  %v2332 = vunpack.c.l.b16 %v2221
  %v2333 = vunpack.c.l.b16 %v2222
  %v2334 = vunpack.c.l.b16 %v2223
  %v2335 = vunpack.c.l.b16 %v2224
  %v2336 = vunpack.c.l.b16 %v2225
  %v2337 = vunpack.c.l.b16 %v2226
  %v2338 = vunpack.c.l.b16 %v2227
  %v2339 = vunpack.c.l.b16 %v2228
  %v2340 = vunpack.c.l.b16 %v2229
  %v2341 = vunpack.c.l.b16 %v2230
  %v2342 = vunpack.c.l.b16 %v2231
  %v2343 = vunpack.c.l.b16 %v2232
  %v2344 = vunpack.c.l.b16 %v2233
  %v2345 = vpack.c.b16 %v2309, %v2308
  %v2346 = vpack.c.b16 %v2311, %v2310
  %v2347 = vpack.c.b16 %v2313, %v2312
  %v2348 = vpack.c.b16 %v2315, %v2314
  %v2349 = vpack.c.b16 %v2317, %v2316
  %v2350 = vpack.c.b16 %v2319, %v2318
  %v2351 = vpack.c.b16 %v2321, %v2320
  %v2352 = vpack.c.b16 %v2323, %v2322
  %v2353 = vpack.c.b16 %v2325, %v2324
  %v2354 = vpack.c.b16 %v2327, %v2326
  %v2355 = vpack.c.b16 %v2329, %v2328
  %v2356 = vpack.c.b16 %v2331, %v2330
  %v2357 = vpack.c.b16 %v2333, %v2332
  %v2358 = vpack.c.b16 %v2335, %v2334
  %v2359 = vpack.c.b16 %v2337, %v2336
  %v2360 = vpack.c.b16 %v2339, %v2338
  %v2361 = vpack.c.b16 %v2341, %v2340
  %v2362 = vpack.c.b16 %v2343, %v2342
  %v2363 = vpack.c.b16 %v2344, %v2344
  %vm2364 = vsmask.f32 6400
  %v2366 = vshrl.u32 %v2345, 16
  %v2368 = vrot.slane %v2366, 1
  %v2369 = vshll.u32 %v2345, 16
  %v2371 = vrot.slane %v2369, 2
  %v2372 = vor.u32 %v2368, %v2371
  %v2374 = vshrl.u32 %v2346, 16
  %v2376 = vrot.slane %v2374, 1
  %v2377 = vshll.u32 %v2346, 16
  %v2379 = vrot.slane %v2377, 2
  %v2380 = vor.u32 %v2376, %v2379
  %v2381 = vsel %vm2364, %v2372, %v2380
  %v2383 = vshrl.u32 %v2347, 16
  %v2385 = vrot.slane %v2383, 1
  %v2386 = vshll.u32 %v2347, 16
  %v2388 = vrot.slane %v2386, 2
  %v2389 = vor.u32 %v2385, %v2388
  %v2390 = vsel %vm2364, %v2380, %v2389
  %v2392 = vshrl.u32 %v2348, 16
  %v2394 = vrot.slane %v2392, 1
  %v2395 = vshll.u32 %v2348, 16
  %v2397 = vrot.slane %v2395, 2
  %v2398 = vor.u32 %v2394, %v2397
  %v2399 = vsel %vm2364, %v2389, %v2398
  %v2401 = vshrl.u32 %v2349, 16
  %v2403 = vrot.slane %v2401, 1
  %v2404 = vshll.u32 %v2349, 16
  %v2406 = vrot.slane %v2404, 2
  %v2407 = vor.u32 %v2403, %v2406
  %v2408 = vsel %vm2364, %v2398, %v2407
  %v2410 = vshrl.u32 %v2350, 16
  %v2412 = vrot.slane %v2410, 1
  %v2413 = vshll.u32 %v2350, 16
  %v2415 = vrot.slane %v2413, 2
  %v2416 = vor.u32 %v2412, %v2415
  %v2417 = vsel %vm2364, %v2407, %v2416
  %v2419 = vshrl.u32 %v2351, 16
  %v2421 = vrot.slane %v2419, 1
  %v2422 = vshll.u32 %v2351, 16
  %v2424 = vrot.slane %v2422, 2
  %v2425 = vor.u32 %v2421, %v2424
  %v2426 = vsel %vm2364, %v2416, %v2425
  %v2428 = vshrl.u32 %v2352, 16
  %v2430 = vrot.slane %v2428, 1
  %v2431 = vshll.u32 %v2352, 16
  %v2433 = vrot.slane %v2431, 2
  %v2434 = vor.u32 %v2430, %v2433
  %v2435 = vsel %vm2364, %v2425, %v2434
  %v2437 = vshrl.u32 %v2353, 16
  %v2439 = vrot.slane %v2437, 1
  %v2440 = vshll.u32 %v2353, 16
  %v2442 = vrot.slane %v2440, 2
  %v2443 = vor.u32 %v2439, %v2442
  %v2444 = vsel %vm2364, %v2434, %v2443
  %v2446 = vshrl.u32 %v2354, 16
  %v2448 = vrot.slane %v2446, 1
  %v2449 = vshll.u32 %v2354, 16
  %v2451 = vrot.slane %v2449, 2
  %v2452 = vor.u32 %v2448, %v2451
  %v2453 = vsel %vm2364, %v2443, %v2452
  %v2455 = vshrl.u32 %v2355, 16
  %v2457 = vrot.slane %v2455, 1
  %v2458 = vshll.u32 %v2355, 16
  %v2460 = vrot.slane %v2458, 2
  %v2461 = vor.u32 %v2457, %v2460
  %v2462 = vsel %vm2364, %v2452, %v2461
  %v2464 = vshrl.u32 %v2356, 16
  %v2466 = vrot.slane %v2464, 1
  %v2467 = vshll.u32 %v2356, 16
  %v2469 = vrot.slane %v2467, 2
  %v2470 = vor.u32 %v2466, %v2469
  %v2471 = vsel %vm2364, %v2461, %v2470
  %v2473 = vshrl.u32 %v2357, 16
  %v2475 = vrot.slane %v2473, 1
  %v2476 = vshll.u32 %v2357, 16
  %v2478 = vrot.slane %v2476, 2
  %v2479 = vor.u32 %v2475, %v2478
  %v2480 = vsel %vm2364, %v2470, %v2479
  %v2482 = vshrl.u32 %v2358, 16
  %v2484 = vrot.slane %v2482, 1
  %v2485 = vshll.u32 %v2358, 16
  %v2487 = vrot.slane %v2485, 2
  %v2488 = vor.u32 %v2484, %v2487
  %v2489 = vsel %vm2364, %v2479, %v2488
  %v2491 = vshrl.u32 %v2359, 16
  %v2493 = vrot.slane %v2491, 1
  %v2494 = vshll.u32 %v2359, 16
  %v2496 = vrot.slane %v2494, 2
  %v2497 = vor.u32 %v2493, %v2496
  %v2498 = vsel %vm2364, %v2488, %v2497
  %v2500 = vshrl.u32 %v2360, 16
  %v2502 = vrot.slane %v2500, 1
  %v2503 = vshll.u32 %v2360, 16
  %v2505 = vrot.slane %v2503, 2
  %v2506 = vor.u32 %v2502, %v2505
  %v2507 = vsel %vm2364, %v2497, %v2506
  %v2509 = vshrl.u32 %v2361, 16
  %v2511 = vrot.slane %v2509, 1
  %v2512 = vshll.u32 %v2361, 16
  %v2514 = vrot.slane %v2512, 2
  %v2515 = vor.u32 %v2511, %v2514
  %v2516 = vsel %vm2364, %v2506, %v2515
  %v2518 = vshrl.u32 %v2362, 16
  %v2520 = vrot.slane %v2518, 1
  %v2521 = vshll.u32 %v2362, 16
  %v2523 = vrot.slane %v2521, 2
  %v2524 = vor.u32 %v2520, %v2523
  %v2525 = vsel %vm2364, %v2515, %v2524
  %v2527 = vshrl.u32 %v2363, 16
  %v2529 = vrot.slane %v2527, 1
  %v2530 = vshll.u32 %v2363, 16
  %v2532 = vrot.slane %v2530, 2
  %v2533 = vor.u32 %v2529, %v2532
  %v2534 = vsel %vm2364, %v2524, %v2533
  %v2536 = vunpack.c.l.b16 %v2234
  %v2537 = vpack.c.b16 %v2536, %v2536
  %v2538 = vrot.slane %v2537, 2
  %v2540 = vsel %vm215, %v2381, 0
  %v2543 = vsel %vm215, %v2390, 0
  %v2546 = vsel %vm215, %v2399, 0
  %v2549 = vsel %vm215, %v2408, 0
  %v2552 = vsel %vm215, %v2417, 0
  %v2555 = vsel %vm215, %v2426, 0
  %v2558 = vsel %vm215, %v2435, 0
  %v2561 = vsel %vm215, %v2444, 0
  %v2564 = vsel %vm215, %v2453, 0
  %v2567 = vsel %vm215, %v2462, 0
  %v2570 = vsel %vm215, %v2471, 0
  %v2573 = vsel %vm215, %v2480, 0
  %v2576 = vsel %vm215, %v2489, 0
  %v2579 = vsel %vm215, %v2498, 0
  %v2582 = vsel %vm215, %v2507, 0
  %v2585 = vsel %vm215, %v2516, 0
  %v2588 = vsel %vm215, %v2525, 0
  %v2591 = vsel %vm215, %v2534, 0
  %v2594 = vand.u32 %v2538, %v273
  %2596 = vmatprep.subr.bf16.mxu0 0
  %2597 = vmatpush1.bf16.msra.mxu0 0
  %2598 = vmatprep.subr.bf16.mxu0 0
  %2599 = vmatpush1.bf16.msra.mxu0 0
  %2600 = vmatprep.subr.bf16.mxu0 0
  %2601 = vmatpush1.bf16.msra.mxu0 0
  %2602 = vmatprep.subr.bf16.mxu0 0
  %2603 = vmatpush1.bf16.msra.mxu0 0
  %2604 = vmatprep.subr.bf16.mxu0 0
  %2605 = vmatpush1.bf16.msra.mxu0 0
  %2606 = vmatprep.subr.bf16.mxu0 0
  %2607 = vmatpush1.bf16.msra.mxu0 0
  %2608 = vmatprep.subr.bf16.mxu0 0
  %2609 = vmatpush1.bf16.msra.mxu0 0
  %2610 = vmatprep.subr.bf16.mxu0 0
  %2611 = vmatpush1.bf16.msra.mxu0 %v2594
  %2612 = vmatprep.subr.bf16.mxu0 0
  %2613 = vmatpush2.bf16.msra.mxu0 0
  %2614 = vmatprep.subr.bf16.mxu0 0
  %2615 = vmatpush2.bf16.msra.mxu0 0
  %2616 = vmatprep.subr.bf16.mxu0 0
  %2617 = vmatpush2.bf16.msra.mxu0 0
  %2618 = vmatprep.subr.bf16.mxu0 0
  %2619 = vmatpush2.bf16.msra.mxu0 0
  %2620 = vmatprep.subr.bf16.mxu0 0
  %2621 = vmatpush2.bf16.msra.mxu0 0
  %2622 = vmatprep.subr.bf16.mxu0 0
  %2623 = vmatpush2.bf16.msra.mxu0 0
  %2624 = vmatprep.subr.bf16.mxu0 0
  %2625 = vmatpush2.bf16.msra.mxu0 0
  %2626 = vmatprep.subr.bf16.mxu0 0
  %2627 = vmatpush2.bf16.msra.mxu0 0
  %2628 = vmatprep.mubr.bf16.mxu0 0
  %2629 = vmatmul.mubr.bf16.gmra.mxu0 %v2540
  %v2630 = vpop.f32.mrf.mxu0
  %v2631 = vadd.f32 0.0, %v2630
  %v2632 = vpop.f32.mrf.mxu0
  %v2633 = vpop.f32.mrf.mxu0
  %v2634 = vadd.f32 0.0, %v2633
  %v2635 = vpop.f32.mrf.mxu0
  %2636 = vmatprep.mubr.bf16.mxu0 0
  %2637 = vmatmul.mubr.bf16.gmra.mxu0 %v2543
  %v2638 = vpop.f32.mrf.mxu0
  %v2639 = vadd.f32 0.0, %v2638
  %v2640 = vpop.f32.mrf.mxu0
  %v2641 = vpop.f32.mrf.mxu0
  %v2642 = vadd.f32 0.0, %v2641
  %v2643 = vpop.f32.mrf.mxu0
  %2644 = vmatprep.mubr.bf16.mxu0 0
  %2645 = vmatmul.mubr.bf16.gmra.mxu0 %v2546
  %v2646 = vpop.f32.mrf.mxu0
  %v2647 = vadd.f32 0.0, %v2646
  %v2648 = vpop.f32.mrf.mxu0
  %v2649 = vpop.f32.mrf.mxu0
  %v2650 = vadd.f32 0.0, %v2649
  %v2651 = vpop.f32.mrf.mxu0
  %2652 = vmatprep.mubr.bf16.mxu0 0
  %2653 = vmatmul.mubr.bf16.gmra.mxu0 %v2549
  %v2654 = vpop.f32.mrf.mxu0
  %v2655 = vadd.f32 0.0, %v2654
  %v2656 = vpop.f32.mrf.mxu0
  %v2657 = vpop.f32.mrf.mxu0
  %v2658 = vadd.f32 0.0, %v2657
  %v2659 = vpop.f32.mrf.mxu0
  %2660 = vmatprep.mubr.bf16.mxu0 0
  %2661 = vmatmul.mubr.bf16.gmra.mxu0 %v2552
  %v2662 = vpop.f32.mrf.mxu0
  %v2663 = vadd.f32 0.0, %v2662
  %v2664 = vpop.f32.mrf.mxu0
  %v2665 = vpop.f32.mrf.mxu0
  %v2666 = vadd.f32 0.0, %v2665
  %v2667 = vpop.f32.mrf.mxu0
  %2668 = vmatprep.mubr.bf16.mxu0 0
  %2669 = vmatmul.mubr.bf16.gmra.mxu0 %v2555
  %v2670 = vpop.f32.mrf.mxu0
  %v2671 = vadd.f32 0.0, %v2670
  %v2672 = vpop.f32.mrf.mxu0
  %v2673 = vpop.f32.mrf.mxu0
  %v2674 = vadd.f32 0.0, %v2673
  %v2675 = vpop.f32.mrf.mxu0
  %2676 = vmatprep.mubr.bf16.mxu0 0
  %2677 = vmatmul.mubr.bf16.gmra.mxu0 %v2558
  %v2678 = vpop.f32.mrf.mxu0
  %v2679 = vadd.f32 0.0, %v2678
  %v2680 = vpop.f32.mrf.mxu0
  %v2681 = vpop.f32.mrf.mxu0
  %v2682 = vadd.f32 0.0, %v2681
  %v2683 = vpop.f32.mrf.mxu0
  %2684 = vmatprep.mubr.bf16.mxu0 0
  %2685 = vmatmul.mubr.bf16.gmra.mxu0 %v2561
  %v2686 = vpop.f32.mrf.mxu0
  %v2687 = vadd.f32 0.0, %v2686
  %v2688 = vpop.f32.mrf.mxu0
  %v2689 = vpop.f32.mrf.mxu0
  %v2690 = vadd.f32 0.0, %v2689
  %v2691 = vpop.f32.mrf.mxu0
  %2692 = vmatprep.mubr.bf16.mxu0 0
  %2693 = vmatmul.mubr.bf16.gmra.mxu0 %v2564
  %v2694 = vpop.f32.mrf.mxu0
  %v2695 = vadd.f32 0.0, %v2694
  %v2696 = vpop.f32.mrf.mxu0
  %v2697 = vpop.f32.mrf.mxu0
  %v2698 = vadd.f32 0.0, %v2697
  %v2699 = vpop.f32.mrf.mxu0
  %2700 = vmatprep.mubr.bf16.mxu0 0
  %2701 = vmatmul.mubr.bf16.gmra.mxu0 %v2567
  %v2702 = vpop.f32.mrf.mxu0
  %v2703 = vadd.f32 0.0, %v2702
  %v2704 = vpop.f32.mrf.mxu0
  %v2705 = vpop.f32.mrf.mxu0
  %v2706 = vadd.f32 0.0, %v2705
  %v2707 = vpop.f32.mrf.mxu0
  %2708 = vmatprep.mubr.bf16.mxu0 0
  %2709 = vmatmul.mubr.bf16.gmra.mxu0 %v2570
  %v2710 = vpop.f32.mrf.mxu0
  %v2711 = vadd.f32 0.0, %v2710
  %v2712 = vpop.f32.mrf.mxu0
  %v2713 = vpop.f32.mrf.mxu0
  %v2714 = vadd.f32 0.0, %v2713
  %v2715 = vpop.f32.mrf.mxu0
  %2716 = vmatprep.mubr.bf16.mxu0 0
  %2717 = vmatmul.mubr.bf16.gmra.mxu0 %v2573
  %v2718 = vpop.f32.mrf.mxu0
  %v2719 = vadd.f32 0.0, %v2718
  %v2720 = vpop.f32.mrf.mxu0
  %v2721 = vpop.f32.mrf.mxu0
  %v2722 = vadd.f32 0.0, %v2721
  %v2723 = vpop.f32.mrf.mxu0
  %2724 = vmatprep.mubr.bf16.mxu0 0
  %2725 = vmatmul.mubr.bf16.gmra.mxu0 %v2576
  %v2726 = vpop.f32.mrf.mxu0
  %v2727 = vadd.f32 0.0, %v2726
  %v2728 = vpop.f32.mrf.mxu0
  %v2729 = vpop.f32.mrf.mxu0
  %v2730 = vadd.f32 0.0, %v2729
  %v2731 = vpop.f32.mrf.mxu0
  %2732 = vmatprep.mubr.bf16.mxu0 0
  %2733 = vmatmul.mubr.bf16.gmra.mxu0 %v2579
  %v2734 = vpop.f32.mrf.mxu0
  %v2735 = vadd.f32 0.0, %v2734
  %v2736 = vpop.f32.mrf.mxu0
  %v2737 = vpop.f32.mrf.mxu0
  %v2738 = vadd.f32 0.0, %v2737
  %v2739 = vpop.f32.mrf.mxu0
  %2740 = vmatprep.mubr.bf16.mxu0 0
  %2741 = vmatmul.mubr.bf16.gmra.mxu0 %v2582
  %v2742 = vpop.f32.mrf.mxu0
  %v2743 = vadd.f32 0.0, %v2742
  %v2744 = vpop.f32.mrf.mxu0
  %v2745 = vpop.f32.mrf.mxu0
  %v2746 = vadd.f32 0.0, %v2745
  %v2747 = vpop.f32.mrf.mxu0
  %2748 = vmatprep.mubr.bf16.mxu0 0
  %2749 = vmatmul.mubr.bf16.gmra.mxu0 %v2585
  %v2750 = vpop.f32.mrf.mxu0
  %v2751 = vadd.f32 0.0, %v2750
  %v2752 = vpop.f32.mrf.mxu0
  %v2753 = vpop.f32.mrf.mxu0
  %v2754 = vadd.f32 0.0, %v2753
  %v2755 = vpop.f32.mrf.mxu0
  %2756 = vmatprep.mubr.bf16.mxu0 0
  %2757 = vmatmul.mubr.bf16.gmra.mxu0 %v2588
  %v2758 = vpop.f32.mrf.mxu0
  %v2759 = vadd.f32 0.0, %v2758
  %v2760 = vpop.f32.mrf.mxu0
  %v2761 = vpop.f32.mrf.mxu0
  %v2762 = vadd.f32 0.0, %v2761
  %v2763 = vpop.f32.mrf.mxu0
  %2764 = vmatprep.mubr.bf16.mxu0 0
  %2765 = vmatmul.mubr.bf16.gmra.mxu0 %v2591
  %v2766 = vpop.f32.mrf.mxu0
  %v2767 = vadd.f32 0.0, %v2766
  %v2768 = vpop.f32.mrf.mxu0
  %v2769 = vpop.f32.mrf.mxu0
  %v2770 = vadd.f32 0.0, %v2769
  %v2771 = vpop.f32.mrf.mxu0
  %2772 = vdwg.mxu0
  %v2773 = vadd.f32 %v2235, %v2631
  %v2774 = vadd.f32 %v2236, %v2634
  %v2775 = vadd.f32 %v2237, %v2639
  %v2776 = vadd.f32 %v2238, %v2642
  %v2777 = vadd.f32 %v2239, %v2647
  %v2778 = vadd.f32 %v2240, %v2650
  %v2779 = vadd.f32 %v2241, %v2655
  %v2780 = vadd.f32 %v2242, %v2658
  %v2781 = vadd.f32 %v2243, %v2663
  %v2782 = vadd.f32 %v2244, %v2666
  %v2783 = vadd.f32 %v2245, %v2671
  %v2784 = vadd.f32 %v2246, %v2674
  %v2785 = vadd.f32 %v2247, %v2679
  %v2786 = vadd.f32 %v2248, %v2682
  %v2787 = vadd.f32 %v2249, %v2687
  %v2788 = vadd.f32 %v2250, %v2690
  %v2789 = vadd.f32 %v2251, %v2695
  %v2790 = vadd.f32 %v2252, %v2698
  %v2791 = vadd.f32 %v2253, %v2703
  %v2792 = vadd.f32 %v2254, %v2706
  %v2793 = vadd.f32 %v2255, %v2711
  %v2794 = vadd.f32 %v2256, %v2714
  %v2795 = vadd.f32 %v2257, %v2719
  %v2796 = vadd.f32 %v2258, %v2722
  %v2797 = vadd.f32 %v2259, %v2727
  %v2798 = vadd.f32 %v2260, %v2730
  %v2799 = vadd.f32 %v2261, %v2735
  %v2800 = vadd.f32 %v2262, %v2738
  %v2801 = vadd.f32 %v2263, %v2743
  %v2802 = vadd.f32 %v2264, %v2746
  %v2803 = vadd.f32 %v2265, %v2751
  %v2804 = vadd.f32 %v2266, %v2754
  %v2805 = vadd.f32 %v2267, %v2759
  %v2806 = vadd.f32 %v2268, %v2762
  %v2807 = vadd.f32 %v2269, %v2767
  %v2808 = vadd.f32 %v2270, %v2770
  %2809 = vst.msk [vmem:[#allocation2] sm:$0xff] %vm15, %v2773
  %2810 = vst.msk [vmem:[#allocation2 + $0x8] sm:$0xff] %vm15, %v2774
  %2811 = vst.msk [vmem:[#allocation2 + $0x10] sm:$0xff] %vm15, %v2775
  %2812 = vst.msk [vmem:[#allocation2 + $0x18] sm:$0xff] %vm15, %v2776
  %2813 = vst.msk [vmem:[#allocation2 + $0x20] sm:$0xff] %vm15, %v2777
  %2814 = vst.msk [vmem:[#allocation2 + $0x28] sm:$0xff] %vm15, %v2778
  %2815 = vst.msk [vmem:[#allocation2 + $0x30] sm:$0xff] %vm15, %v2779
  %2816 = vst.msk [vmem:[#allocation2 + $0x38] sm:$0xff] %vm15, %v2780
  %2817 = vst.msk [vmem:[#allocation2 + $0x40] sm:$0xff] %vm15, %v2781
  %2818 = vst.msk [vmem:[#allocation2 + $0x48] sm:$0xff] %vm15, %v2782
  %2819 = vst.msk [vmem:[#allocation2 + $0x50] sm:$0xff] %vm15, %v2783
  %2820 = vst.msk [vmem:[#allocation2 + $0x58] sm:$0xff] %vm15, %v2784
  %2821 = vst.msk [vmem:[#allocation2 + $0x60] sm:$0xff] %vm15, %v2785
  %2822 = vst.msk [vmem:[#allocation2 + $0x68] sm:$0xff] %vm15, %v2786
  %2823 = vst.msk [vmem:[#allocation2 + $0x70] sm:$0xff] %vm15, %v2787
  %2824 = vst.msk [vmem:[#allocation2 + $0x78] sm:$0xff] %vm15, %v2788
  %2825 = vst.msk [vmem:[#allocation2 + $0x80] sm:$0xff] %vm15, %v2789
  %2826 = vst.msk [vmem:[#allocation2 + $0x88] sm:$0xff] %vm15, %v2790
  %2827 = vst.msk [vmem:[#allocation2 + $0x90] sm:$0xff] %vm15, %v2791
  %2828 = vst.msk [vmem:[#allocation2 + $0x98] sm:$0xff] %vm15, %v2792
  %2829 = vst.msk [vmem:[#allocation2 + $0xa0] sm:$0xff] %vm15, %v2793
  %2830 = vst.msk [vmem:[#allocation2 + $0xa8] sm:$0xff] %vm15, %v2794
  %2831 = vst.msk [vmem:[#allocation2 + $0xb0] sm:$0xff] %vm15, %v2795
  %2832 = vst.msk [vmem:[#allocation2 + $0xb8] sm:$0xff] %vm15, %v2796
  %2833 = vst.msk [vmem:[#allocation2 + $0xc0] sm:$0xff] %vm15, %v2797
  %2834 = vst.msk [vmem:[#allocation2 + $0xc8] sm:$0xff] %vm15, %v2798
  %2835 = vst.msk [vmem:[#allocation2 + $0xd0] sm:$0xff] %vm15, %v2799
  %2836 = vst.msk [vmem:[#allocation2 + $0xd8] sm:$0xff] %vm15, %v2800
  %2837 = vst.msk [vmem:[#allocation2 + $0xe0] sm:$0xff] %vm15, %v2801
  %2838 = vst.msk [vmem:[#allocation2 + $0xe8] sm:$0xff] %vm15, %v2802
  %2839 = vst.msk [vmem:[#allocation2 + $0xf0] sm:$0xff] %vm15, %v2803
  %2840 = vst.msk [vmem:[#allocation2 + $0xf8] sm:$0xff] %vm15, %v2804
  %2841 = vst.msk [vmem:[#allocation2 + $0x100] sm:$0xff] %vm15, %v2805
  %2842 = vst.msk [vmem:[#allocation2 + $0x108] sm:$0xff] %vm15, %v2806
  %2843 = vst.msk [vmem:[#allocation2 + $0x110] sm:$0xff] %vm15, %v2807
  %2844 = vst.msk [vmem:[#allocation2 + $0x118] sm:$0xff] %vm15, %v2808
  %v2845 = vld [vmem:[%s0 + $0x8] sm:$0xc]
  %v2846 = vld [vmem:[%s0 + $0xc] sm:$0xf]
  %v2847 = vld [vmem:[%s0 + $0x10] sm:$0xf]
  %v2848 = vld [vmem:[%s0 + $0x14] sm:$0xf]
  %v2849 = vld [vmem:[%s0 + $0x18] sm:$0xf]
  %v2850 = vld [vmem:[%s0 + $0x1c] sm:$0xf]
  %v2851 = vld [vmem:[%s0 + $0x20] sm:$0xf]
  %v2852 = vld [vmem:[%s0 + $0x24] sm:$0xf]
  %v2853 = vld [vmem:[%s0 + $0x28] sm:$0xf]
  %v2854 = vld [vmem:[%s0 + $0x2c] sm:$0xf]
  %v2855 = vld [vmem:[%s0 + $0x30] sm:$0xf]
  %v2856 = vld [vmem:[%s0 + $0x34] sm:$0xf]
  %v2857 = vld [vmem:[%s0 + $0x38] sm:$0xf]
  %v2858 = vld [vmem:[%s0 + $0x3c] sm:$0xf]
  %v2859 = vld [vmem:[%s0 + $0x40] sm:$0xf]
  %v2860 = vld [vmem:[%s0 + $0x44] sm:$0xf]
  %v2861 = vld [vmem:[%s0 + $0x48] sm:$0xf]
  %v2862 = vld [vmem:[%s0 + $0x4c] sm:$0xf]
  %v2863 = vld [vmem:[%s0 + $0x50] sm:$0xf]
  %v2864 = vld [vmem:[%s0 + $0x54] sm:$0xf]
  %v2865 = vld [vmem:[%s0 + $0x58] sm:$0xf]
  %v2866 = vld [vmem:[%s0 + $0x5c] sm:$0xf]
  %v2867 = vld [vmem:[%s0 + $0x60] sm:$0xf]
  %v2868 = vld [vmem:[%s0 + $0x64] sm:$0xf]
  %v2869 = vld [vmem:[%s0 + $0x68] sm:$0xf]
  %v2870 = vld [vmem:[%s0 + $0x6c] sm:$0xf]
  %v2871 = vld [vmem:[%s0 + $0x70] sm:$0xf]
  %v2872 = vld [vmem:[%s0 + $0x74] sm:$0xf]
  %v2873 = vld [vmem:[%s0 + $0x78] sm:$0xf]
  %v2874 = vld [vmem:[%s0 + $0x7c] sm:$0xf]
  %v2875 = vld [vmem:[%s0 + $0x80] sm:$0xf]
  %v2876 = vld [vmem:[%s0 + $0x84] sm:$0xf]
  %v2877 = vld [vmem:[%s0 + $0x88] sm:$0xf]
  %v2878 = vld [vmem:[%s0 + $0x8c] sm:$0xf]
  %v2879 = vld [vmem:[%s0 + $0x90] sm:$0xf]
  %v2880 = vld [vmem:[%s0 + $0x94] sm:$0xf]
  %v2881 = vld [vmem:[%s0 + $0x98] sm:$0x3]
  %v2882 = vld [vmem:[%s1 + $0x4] sm:$0x8]
  %v2883 = vld [vmem:[%s1 + $0x8] sm:$0x1]
  %v2884 = vld [vmem:[#allocation2] sm:$0xff]
  %v2885 = vld [vmem:[#allocation2 + $0x8] sm:$0xff]
  %v2886 = vld [vmem:[#allocation2 + $0x10] sm:$0xff]
  %v2887 = vld [vmem:[#allocation2 + $0x18] sm:$0xff]
  %v2888 = vld [vmem:[#allocation2 + $0x20] sm:$0xff]
  %v2889 = vld [vmem:[#allocation2 + $0x28] sm:$0xff]
  %v2890 = vld [vmem:[#allocation2 + $0x30] sm:$0xff]
  %v2891 = vld [vmem:[#allocation2 + $0x38] sm:$0xff]
  %v2892 = vld [vmem:[#allocation2 + $0x40] sm:$0xff]
  %v2893 = vld [vmem:[#allocation2 + $0x48] sm:$0xff]
  %v2894 = vld [vmem:[#allocation2 + $0x50] sm:$0xff]
  %v2895 = vld [vmem:[#allocation2 + $0x58] sm:$0xff]
  %v2896 = vld [vmem:[#allocation2 + $0x60] sm:$0xff]
  %v2897 = vld [vmem:[#allocation2 + $0x68] sm:$0xff]
  %v2898 = vld [vmem:[#allocation2 + $0x70] sm:$0xff]
  %v2899 = vld [vmem:[#allocation2 + $0x78] sm:$0xff]
  %v2900 = vld [vmem:[#allocation2 + $0x80] sm:$0xff]
  %v2901 = vld [vmem:[#allocation2 + $0x88] sm:$0xff]
  %v2902 = vld [vmem:[#allocation2 + $0x90] sm:$0xff]
  %v2903 = vld [vmem:[#allocation2 + $0x98] sm:$0xff]
  %v2904 = vld [vmem:[#allocation2 + $0xa0] sm:$0xff]
  %v2905 = vld [vmem:[#allocation2 + $0xa8] sm:$0xff]
  %v2906 = vld [vmem:[#allocation2 + $0xb0] sm:$0xff]
  %v2907 = vld [vmem:[#allocation2 + $0xb8] sm:$0xff]
  %v2908 = vld [vmem:[#allocation2 + $0xc0] sm:$0xff]
  %v2909 = vld [vmem:[#allocation2 + $0xc8] sm:$0xff]
  %v2910 = vld [vmem:[#allocation2 + $0xd0] sm:$0xff]
  %v2911 = vld [vmem:[#allocation2 + $0xd8] sm:$0xff]
  %v2912 = vld [vmem:[#allocation2 + $0xe0] sm:$0xff]
  %v2913 = vld [vmem:[#allocation2 + $0xe8] sm:$0xff]
  %v2914 = vld [vmem:[#allocation2 + $0xf0] sm:$0xff]
  %v2915 = vld [vmem:[#allocation2 + $0xf8] sm:$0xff]
  %v2916 = vld [vmem:[#allocation2 + $0x100] sm:$0xff]
  %v2917 = vld [vmem:[#allocation2 + $0x108] sm:$0xff]
  %v2918 = vld [vmem:[#allocation2 + $0x110] sm:$0xff]
  %v2919 = vld [vmem:[#allocation2 + $0x118] sm:$0xff]
  %v2957 = vunpack.c.l.b16 %v2845
  %v2958 = vunpack.c.l.b16 %v2846
  %v2959 = vunpack.c.l.b16 %v2847
  %v2960 = vunpack.c.l.b16 %v2848
  %v2961 = vunpack.c.l.b16 %v2849
  %v2962 = vunpack.c.l.b16 %v2850
  %v2963 = vunpack.c.l.b16 %v2851
  %v2964 = vunpack.c.l.b16 %v2852
  %v2965 = vunpack.c.l.b16 %v2853
  %v2966 = vunpack.c.l.b16 %v2854
  %v2967 = vunpack.c.l.b16 %v2855
  %v2968 = vunpack.c.l.b16 %v2856
  %v2969 = vunpack.c.l.b16 %v2857
  %v2970 = vunpack.c.l.b16 %v2858
  %v2971 = vunpack.c.l.b16 %v2859
  %v2972 = vunpack.c.l.b16 %v2860
  %v2973 = vunpack.c.l.b16 %v2861
  %v2974 = vunpack.c.l.b16 %v2862
  %v2975 = vunpack.c.l.b16 %v2863
  %v2976 = vunpack.c.l.b16 %v2864
  %v2977 = vunpack.c.l.b16 %v2865
  %v2978 = vunpack.c.l.b16 %v2866
  %v2979 = vunpack.c.l.b16 %v2867
  %v2980 = vunpack.c.l.b16 %v2868
  %v2981 = vunpack.c.l.b16 %v2869
  %v2982 = vunpack.c.l.b16 %v2870
  %v2983 = vunpack.c.l.b16 %v2871
  %v2984 = vunpack.c.l.b16 %v2872
  %v2985 = vunpack.c.l.b16 %v2873
  %v2986 = vunpack.c.l.b16 %v2874
  %v2987 = vunpack.c.l.b16 %v2875
  %v2988 = vunpack.c.l.b16 %v2876
  %v2989 = vunpack.c.l.b16 %v2877
  %v2990 = vunpack.c.l.b16 %v2878
  %v2991 = vunpack.c.l.b16 %v2879
  %v2992 = vunpack.c.l.b16 %v2880
  %v2993 = vunpack.c.l.b16 %v2881
  %v2994 = vpack.c.b16 %v2958, %v2957
  %v2995 = vpack.c.b16 %v2960, %v2959
  %v2996 = vpack.c.b16 %v2962, %v2961
  %v2997 = vpack.c.b16 %v2964, %v2963
  %v2998 = vpack.c.b16 %v2966, %v2965
  %v2999 = vpack.c.b16 %v2968, %v2967
  %v3000 = vpack.c.b16 %v2970, %v2969
  %v3001 = vpack.c.b16 %v2972, %v2971
  %v3002 = vpack.c.b16 %v2974, %v2973
  %v3003 = vpack.c.b16 %v2976, %v2975
  %v3004 = vpack.c.b16 %v2978, %v2977
  %v3005 = vpack.c.b16 %v2980, %v2979
  %v3006 = vpack.c.b16 %v2982, %v2981
  %v3007 = vpack.c.b16 %v2984, %v2983
  %v3008 = vpack.c.b16 %v2986, %v2985
  %v3009 = vpack.c.b16 %v2988, %v2987
  %v3010 = vpack.c.b16 %v2990, %v2989
  %v3011 = vpack.c.b16 %v2992, %v2991
  %v3012 = vpack.c.b16 %v2993, %v2993
  %vm3013 = vcmask 1045504
  %v3014 = vrot.slane %v2994, 2
  %v3015 = vrot.slane %v2995, 2
  %v3016 = vsel %vm3013, %v3014, %v3015
  %v3017 = vrot.slane %v2996, 2
  %v3018 = vsel %vm3013, %v3015, %v3017
  %v3019 = vrot.slane %v2997, 2
  %v3020 = vsel %vm3013, %v3017, %v3019
  %v3021 = vrot.slane %v2998, 2
  %v3022 = vsel %vm3013, %v3019, %v3021
  %v3023 = vrot.slane %v2999, 2
  %v3024 = vsel %vm3013, %v3021, %v3023
  %v3025 = vrot.slane %v3000, 2
  %v3026 = vsel %vm3013, %v3023, %v3025
  %v3027 = vrot.slane %v3001, 2
  %v3028 = vsel %vm3013, %v3025, %v3027
  %v3029 = vrot.slane %v3002, 2
  %v3030 = vsel %vm3013, %v3027, %v3029
  %v3031 = vrot.slane %v3003, 2
  %v3032 = vsel %vm3013, %v3029, %v3031
  %v3033 = vrot.slane %v3004, 2
  %v3034 = vsel %vm3013, %v3031, %v3033
  %v3035 = vrot.slane %v3005, 2
  %v3036 = vsel %vm3013, %v3033, %v3035
  %v3037 = vrot.slane %v3006, 2
  %v3038 = vsel %vm3013, %v3035, %v3037
  %v3039 = vrot.slane %v3007, 2
  %v3040 = vsel %vm3013, %v3037, %v3039
  %v3041 = vrot.slane %v3008, 2
  %v3042 = vsel %vm3013, %v3039, %v3041
  %v3043 = vrot.slane %v3009, 2
  %v3044 = vsel %vm3013, %v3041, %v3043
  %v3045 = vrot.slane %v3010, 2
  %v3046 = vsel %vm3013, %v3043, %v3045
  %v3047 = vrot.slane %v3011, 2
  %v3048 = vsel %vm3013, %v3045, %v3047
  %v3049 = vrot.slane %v3012, 2
  %v3050 = vsel %vm3013, %v3047, %v3049
  %v3053 = vunpack.c.l.b16 %v2882
  %v3054 = vunpack.c.l.b16 %v2883
  %v3055 = vpack.c.b16 %v3054, %v3053
  %v3057 = vshrl.u32 %v3055, 16
  %v3059 = vrot.slane %v3057, 3
  %v3060 = vshll.u32 %v3055, 16
  %v3062 = vrot.slane %v3060, 4
  %v3063 = vor.u32 %v3059, %v3062
  %v3065 = vsel %vm215, %v3016, 0
  %v3068 = vsel %vm215, %v3018, 0
  %v3071 = vsel %vm215, %v3020, 0
  %v3074 = vsel %vm215, %v3022, 0
  %v3077 = vsel %vm215, %v3024, 0
  %v3080 = vsel %vm215, %v3026, 0
  %v3083 = vsel %vm215, %v3028, 0
  %v3086 = vsel %vm215, %v3030, 0
  %v3089 = vsel %vm215, %v3032, 0
  %v3092 = vsel %vm215, %v3034, 0
  %v3095 = vsel %vm215, %v3036, 0
  %v3098 = vsel %vm215, %v3038, 0
  %v3101 = vsel %vm215, %v3040, 0
  %v3104 = vsel %vm215, %v3042, 0
  %v3107 = vsel %vm215, %v3044, 0
  %v3110 = vsel %vm215, %v3046, 0
  %v3113 = vsel %vm215, %v3048, 0
  %v3116 = vsel %vm215, %v3050, 0
  %v3119 = vand.u32 %v3063, %v273
  %3121 = vmatprep.subr.bf16.mxu0 0
  %3122 = vmatpush1.bf16.msra.mxu0 0
  %3123 = vmatprep.subr.bf16.mxu0 0
  %3124 = vmatpush1.bf16.msra.mxu0 0
  %3125 = vmatprep.subr.bf16.mxu0 0
  %3126 = vmatpush1.bf16.msra.mxu0 0
  %3127 = vmatprep.subr.bf16.mxu0 0
  %3128 = vmatpush1.bf16.msra.mxu0 0
  %3129 = vmatprep.subr.bf16.mxu0 0
  %3130 = vmatpush1.bf16.msra.mxu0 0
  %3131 = vmatprep.subr.bf16.mxu0 0
  %3132 = vmatpush1.bf16.msra.mxu0 0
  %3133 = vmatprep.subr.bf16.mxu0 0
  %3134 = vmatpush1.bf16.msra.mxu0 0
  %3135 = vmatprep.subr.bf16.mxu0 0
  %3136 = vmatpush1.bf16.msra.mxu0 %v3119
  %3137 = vmatprep.subr.bf16.mxu0 0
  %3138 = vmatpush2.bf16.msra.mxu0 0
  %3139 = vmatprep.subr.bf16.mxu0 0
  %3140 = vmatpush2.bf16.msra.mxu0 0
  %3141 = vmatprep.subr.bf16.mxu0 0
  %3142 = vmatpush2.bf16.msra.mxu0 0
  %3143 = vmatprep.subr.bf16.mxu0 0
  %3144 = vmatpush2.bf16.msra.mxu0 0
  %3145 = vmatprep.subr.bf16.mxu0 0
  %3146 = vmatpush2.bf16.msra.mxu0 0
  %3147 = vmatprep.subr.bf16.mxu0 0
  %3148 = vmatpush2.bf16.msra.mxu0 0
  %3149 = vmatprep.subr.bf16.mxu0 0
  %3150 = vmatpush2.bf16.msra.mxu0 0
  %3151 = vmatprep.subr.bf16.mxu0 0
  %3152 = vmatpush2.bf16.msra.mxu0 0
  %3153 = vmatprep.mubr.bf16.mxu0 0
  %3154 = vmatmul.mubr.bf16.gmra.mxu0 %v3065
  %v3155 = vpop.f32.mrf.mxu0
  %v3156 = vadd.f32 0.0, %v3155
  %v3157 = vpop.f32.mrf.mxu0
  %v3158 = vpop.f32.mrf.mxu0
  %v3159 = vadd.f32 0.0, %v3158
  %v3160 = vpop.f32.mrf.mxu0
  %3161 = vmatprep.mubr.bf16.mxu0 0
  %3162 = vmatmul.mubr.bf16.gmra.mxu0 %v3068
  %v3163 = vpop.f32.mrf.mxu0
  %v3164 = vadd.f32 0.0, %v3163
  %v3165 = vpop.f32.mrf.mxu0
  %v3166 = vpop.f32.mrf.mxu0
  %v3167 = vadd.f32 0.0, %v3166
  %v3168 = vpop.f32.mrf.mxu0
  %3169 = vmatprep.mubr.bf16.mxu0 0
  %3170 = vmatmul.mubr.bf16.gmra.mxu0 %v3071
  %v3171 = vpop.f32.mrf.mxu0
  %v3172 = vadd.f32 0.0, %v3171
  %v3173 = vpop.f32.mrf.mxu0
  %v3174 = vpop.f32.mrf.mxu0
  %v3175 = vadd.f32 0.0, %v3174
  %v3176 = vpop.f32.mrf.mxu0
  %3177 = vmatprep.mubr.bf16.mxu0 0
  %3178 = vmatmul.mubr.bf16.gmra.mxu0 %v3074
  %v3179 = vpop.f32.mrf.mxu0
  %v3180 = vadd.f32 0.0, %v3179
  %v3181 = vpop.f32.mrf.mxu0
  %v3182 = vpop.f32.mrf.mxu0
  %v3183 = vadd.f32 0.0, %v3182
  %v3184 = vpop.f32.mrf.mxu0
  %3185 = vmatprep.mubr.bf16.mxu0 0
  %3186 = vmatmul.mubr.bf16.gmra.mxu0 %v3077
  %v3187 = vpop.f32.mrf.mxu0
  %v3188 = vadd.f32 0.0, %v3187
  %v3189 = vpop.f32.mrf.mxu0
  %v3190 = vpop.f32.mrf.mxu0
  %v3191 = vadd.f32 0.0, %v3190
  %v3192 = vpop.f32.mrf.mxu0
  %3193 = vmatprep.mubr.bf16.mxu0 0
  %3194 = vmatmul.mubr.bf16.gmra.mxu0 %v3080
  %v3195 = vpop.f32.mrf.mxu0
  %v3196 = vadd.f32 0.0, %v3195
  %v3197 = vpop.f32.mrf.mxu0
  %v3198 = vpop.f32.mrf.mxu0
  %v3199 = vadd.f32 0.0, %v3198
  %v3200 = vpop.f32.mrf.mxu0
  %3201 = vmatprep.mubr.bf16.mxu0 0
  %3202 = vmatmul.mubr.bf16.gmra.mxu0 %v3083
  %v3203 = vpop.f32.mrf.mxu0
  %v3204 = vadd.f32 0.0, %v3203
  %v3205 = vpop.f32.mrf.mxu0
  %v3206 = vpop.f32.mrf.mxu0
  %v3207 = vadd.f32 0.0, %v3206
  %v3208 = vpop.f32.mrf.mxu0
  %3209 = vmatprep.mubr.bf16.mxu0 0
  %3210 = vmatmul.mubr.bf16.gmra.mxu0 %v3086
  %v3211 = vpop.f32.mrf.mxu0
  %v3212 = vadd.f32 0.0, %v3211
  %v3213 = vpop.f32.mrf.mxu0
  %v3214 = vpop.f32.mrf.mxu0
  %v3215 = vadd.f32 0.0, %v3214
  %v3216 = vpop.f32.mrf.mxu0
  %3217 = vmatprep.mubr.bf16.mxu0 0
  %3218 = vmatmul.mubr.bf16.gmra.mxu0 %v3089
  %v3219 = vpop.f32.mrf.mxu0
  %v3220 = vadd.f32 0.0, %v3219
  %v3221 = vpop.f32.mrf.mxu0
  %v3222 = vpop.f32.mrf.mxu0
  %v3223 = vadd.f32 0.0, %v3222
  %v3224 = vpop.f32.mrf.mxu0
  %3225 = vmatprep.mubr.bf16.mxu0 0
  %3226 = vmatmul.mubr.bf16.gmra.mxu0 %v3092
  %v3227 = vpop.f32.mrf.mxu0
  %v3228 = vadd.f32 0.0, %v3227
  %v3229 = vpop.f32.mrf.mxu0
  %v3230 = vpop.f32.mrf.mxu0
  %v3231 = vadd.f32 0.0, %v3230
  %v3232 = vpop.f32.mrf.mxu0
  %3233 = vmatprep.mubr.bf16.mxu0 0
  %3234 = vmatmul.mubr.bf16.gmra.mxu0 %v3095
  %v3235 = vpop.f32.mrf.mxu0
  %v3236 = vadd.f32 0.0, %v3235
  %v3237 = vpop.f32.mrf.mxu0
  %v3238 = vpop.f32.mrf.mxu0
  %v3239 = vadd.f32 0.0, %v3238
  %v3240 = vpop.f32.mrf.mxu0
  %3241 = vmatprep.mubr.bf16.mxu0 0
  %3242 = vmatmul.mubr.bf16.gmra.mxu0 %v3098
  %v3243 = vpop.f32.mrf.mxu0
  %v3244 = vadd.f32 0.0, %v3243
  %v3245 = vpop.f32.mrf.mxu0
  %v3246 = vpop.f32.mrf.mxu0
  %v3247 = vadd.f32 0.0, %v3246
  %v3248 = vpop.f32.mrf.mxu0
  %3249 = vmatprep.mubr.bf16.mxu0 0
  %3250 = vmatmul.mubr.bf16.gmra.mxu0 %v3101
  %v3251 = vpop.f32.mrf.mxu0
  %v3252 = vadd.f32 0.0, %v3251
  %v3253 = vpop.f32.mrf.mxu0
  %v3254 = vpop.f32.mrf.mxu0
  %v3255 = vadd.f32 0.0, %v3254
  %v3256 = vpop.f32.mrf.mxu0
  %3257 = vmatprep.mubr.bf16.mxu0 0
  %3258 = vmatmul.mubr.bf16.gmra.mxu0 %v3104
  %v3259 = vpop.f32.mrf.mxu0
  %v3260 = vadd.f32 0.0, %v3259
  %v3261 = vpop.f32.mrf.mxu0
  %v3262 = vpop.f32.mrf.mxu0
  %v3263 = vadd.f32 0.0, %v3262
  %v3264 = vpop.f32.mrf.mxu0
  %3265 = vmatprep.mubr.bf16.mxu0 0
  %3266 = vmatmul.mubr.bf16.gmra.mxu0 %v3107
  %v3267 = vpop.f32.mrf.mxu0
  %v3268 = vadd.f32 0.0, %v3267
  %v3269 = vpop.f32.mrf.mxu0
  %v3270 = vpop.f32.mrf.mxu0
  %v3271 = vadd.f32 0.0, %v3270
  %v3272 = vpop.f32.mrf.mxu0
  %3273 = vmatprep.mubr.bf16.mxu0 0
  %3274 = vmatmul.mubr.bf16.gmra.mxu0 %v3110
  %v3275 = vpop.f32.mrf.mxu0
  %v3276 = vadd.f32 0.0, %v3275
  %v3277 = vpop.f32.mrf.mxu0
  %v3278 = vpop.f32.mrf.mxu0
  %v3279 = vadd.f32 0.0, %v3278
  %v3280 = vpop.f32.mrf.mxu0
  %3281 = vmatprep.mubr.bf16.mxu0 0
  %3282 = vmatmul.mubr.bf16.gmra.mxu0 %v3113
  %v3283 = vpop.f32.mrf.mxu0
  %v3284 = vadd.f32 0.0, %v3283
  %v3285 = vpop.f32.mrf.mxu0
  %v3286 = vpop.f32.mrf.mxu0
  %v3287 = vadd.f32 0.0, %v3286
  %v3288 = vpop.f32.mrf.mxu0
  %3289 = vmatprep.mubr.bf16.mxu0 0
  %3290 = vmatmul.mubr.bf16.gmra.mxu0 %v3116
  %v3291 = vpop.f32.mrf.mxu0
  %v3292 = vadd.f32 0.0, %v3291
  %v3293 = vpop.f32.mrf.mxu0
  %v3294 = vpop.f32.mrf.mxu0
  %v3295 = vadd.f32 0.0, %v3294
  %v3296 = vpop.f32.mrf.mxu0
  %3297 = vdwg.mxu0
  %v3298 = vadd.f32 %v2884, %v3156
  %v3299 = vadd.f32 %v2885, %v3159
  %v3300 = vadd.f32 %v2886, %v3164
  %v3301 = vadd.f32 %v2887, %v3167
  %v3302 = vadd.f32 %v2888, %v3172
  %v3303 = vadd.f32 %v2889, %v3175
  %v3304 = vadd.f32 %v2890, %v3180
  %v3305 = vadd.f32 %v2891, %v3183
  %v3306 = vadd.f32 %v2892, %v3188
  %v3307 = vadd.f32 %v2893, %v3191
  %v3308 = vadd.f32 %v2894, %v3196
  %v3309 = vadd.f32 %v2895, %v3199
  %v3310 = vadd.f32 %v2896, %v3204
  %v3311 = vadd.f32 %v2897, %v3207
  %v3312 = vadd.f32 %v2898, %v3212
  %v3313 = vadd.f32 %v2899, %v3215
  %v3314 = vadd.f32 %v2900, %v3220
  %v3315 = vadd.f32 %v2901, %v3223
  %v3316 = vadd.f32 %v2902, %v3228
  %v3317 = vadd.f32 %v2903, %v3231
  %v3318 = vadd.f32 %v2904, %v3236
  %v3319 = vadd.f32 %v2905, %v3239
  %v3320 = vadd.f32 %v2906, %v3244
  %v3321 = vadd.f32 %v2907, %v3247
  %v3322 = vadd.f32 %v2908, %v3252
  %v3323 = vadd.f32 %v2909, %v3255
  %v3324 = vadd.f32 %v2910, %v3260
  %v3325 = vadd.f32 %v2911, %v3263
  %v3326 = vadd.f32 %v2912, %v3268
  %v3327 = vadd.f32 %v2913, %v3271
  %v3328 = vadd.f32 %v2914, %v3276
  %v3329 = vadd.f32 %v2915, %v3279
  %v3330 = vadd.f32 %v2916, %v3284
  %v3331 = vadd.f32 %v2917, %v3287
  %v3332 = vadd.f32 %v2918, %v3292
  %v3333 = vadd.f32 %v2919, %v3295
  %3334 = vst.msk [vmem:[#allocation2] sm:$0xff] %vm15, %v3298
  %3335 = vst.msk [vmem:[#allocation2 + $0x8] sm:$0xff] %vm15, %v3299
  %3336 = vst.msk [vmem:[#allocation2 + $0x10] sm:$0xff] %vm15, %v3300
  %3337 = vst.msk [vmem:[#allocation2 + $0x18] sm:$0xff] %vm15, %v3301
  %3338 = vst.msk [vmem:[#allocation2 + $0x20] sm:$0xff] %vm15, %v3302
  %3339 = vst.msk [vmem:[#allocation2 + $0x28] sm:$0xff] %vm15, %v3303
  %3340 = vst.msk [vmem:[#allocation2 + $0x30] sm:$0xff] %vm15, %v3304
  %3341 = vst.msk [vmem:[#allocation2 + $0x38] sm:$0xff] %vm15, %v3305
  %3342 = vst.msk [vmem:[#allocation2 + $0x40] sm:$0xff] %vm15, %v3306
  %3343 = vst.msk [vmem:[#allocation2 + $0x48] sm:$0xff] %vm15, %v3307
  %3344 = vst.msk [vmem:[#allocation2 + $0x50] sm:$0xff] %vm15, %v3308
  %3345 = vst.msk [vmem:[#allocation2 + $0x58] sm:$0xff] %vm15, %v3309
  %3346 = vst.msk [vmem:[#allocation2 + $0x60] sm:$0xff] %vm15, %v3310
  %3347 = vst.msk [vmem:[#allocation2 + $0x68] sm:$0xff] %vm15, %v3311
  %3348 = vst.msk [vmem:[#allocation2 + $0x70] sm:$0xff] %vm15, %v3312
  %3349 = vst.msk [vmem:[#allocation2 + $0x78] sm:$0xff] %vm15, %v3313
  %3350 = vst.msk [vmem:[#allocation2 + $0x80] sm:$0xff] %vm15, %v3314
  %3351 = vst.msk [vmem:[#allocation2 + $0x88] sm:$0xff] %vm15, %v3315
  %3352 = vst.msk [vmem:[#allocation2 + $0x90] sm:$0xff] %vm15, %v3316
  %3353 = vst.msk [vmem:[#allocation2 + $0x98] sm:$0xff] %vm15, %v3317
  %3354 = vst.msk [vmem:[#allocation2 + $0xa0] sm:$0xff] %vm15, %v3318
  %3355 = vst.msk [vmem:[#allocation2 + $0xa8] sm:$0xff] %vm15, %v3319
  %3356 = vst.msk [vmem:[#allocation2 + $0xb0] sm:$0xff] %vm15, %v3320
  %3357 = vst.msk [vmem:[#allocation2 + $0xb8] sm:$0xff] %vm15, %v3321
  %3358 = vst.msk [vmem:[#allocation2 + $0xc0] sm:$0xff] %vm15, %v3322
  %3359 = vst.msk [vmem:[#allocation2 + $0xc8] sm:$0xff] %vm15, %v3323
  %3360 = vst.msk [vmem:[#allocation2 + $0xd0] sm:$0xff] %vm15, %v3324
  %3361 = vst.msk [vmem:[#allocation2 + $0xd8] sm:$0xff] %vm15, %v3325
  %3362 = vst.msk [vmem:[#allocation2 + $0xe0] sm:$0xff] %vm15, %v3326
  %3363 = vst.msk [vmem:[#allocation2 + $0xe8] sm:$0xff] %vm15, %v3327
  %3364 = vst.msk [vmem:[#allocation2 + $0xf0] sm:$0xff] %vm15, %v3328
  %3365 = vst.msk [vmem:[#allocation2 + $0xf8] sm:$0xff] %vm15, %v3329
  %3366 = vst.msk [vmem:[#allocation2 + $0x100] sm:$0xff] %vm15, %v3330
  %3367 = vst.msk [vmem:[#allocation2 + $0x108] sm:$0xff] %vm15, %v3331
  %3368 = vst.msk [vmem:[#allocation2 + $0x110] sm:$0xff] %vm15, %v3332
  %3369 = vst.msk [vmem:[#allocation2 + $0x118] sm:$0xff] %vm15, %v3333
  %v3370 = vld [vmem:[%s0 + $0x10] sm:$0xc]
  %v3371 = vld [vmem:[%s0 + $0x14] sm:$0xf]
  %v3372 = vld [vmem:[%s0 + $0x18] sm:$0xf]
  %v3373 = vld [vmem:[%s0 + $0x1c] sm:$0xf]
  %v3374 = vld [vmem:[%s0 + $0x20] sm:$0xf]
  %v3375 = vld [vmem:[%s0 + $0x24] sm:$0xf]
  %v3376 = vld [vmem:[%s0 + $0x28] sm:$0xf]
  %v3377 = vld [vmem:[%s0 + $0x2c] sm:$0xf]
  %v3378 = vld [vmem:[%s0 + $0x30] sm:$0xf]
  %v3379 = vld [vmem:[%s0 + $0x34] sm:$0xf]
  %v3380 = vld [vmem:[%s0 + $0x38] sm:$0xf]
  %v3381 = vld [vmem:[%s0 + $0x3c] sm:$0xf]
  %v3382 = vld [vmem:[%s0 + $0x40] sm:$0xf]
  %v3383 = vld [vmem:[%s0 + $0x44] sm:$0xf]
  %v3384 = vld [vmem:[%s0 + $0x48] sm:$0xf]
  %v3385 = vld [vmem:[%s0 + $0x4c] sm:$0xf]
  %v3386 = vld [vmem:[%s0 + $0x50] sm:$0xf]
  %v3387 = vld [vmem:[%s0 + $0x54] sm:$0xf]
  %v3388 = vld [vmem:[%s0 + $0x58] sm:$0xf]
  %v3389 = vld [vmem:[%s0 + $0x5c] sm:$0xf]
  %v3390 = vld [vmem:[%s0 + $0x60] sm:$0xf]
  %v3391 = vld [vmem:[%s0 + $0x64] sm:$0xf]
  %v3392 = vld [vmem:[%s0 + $0x68] sm:$0xf]
  %v3393 = vld [vmem:[%s0 + $0x6c] sm:$0xf]
  %v3394 = vld [vmem:[%s0 + $0x70] sm:$0xf]
  %v3395 = vld [vmem:[%s0 + $0x74] sm:$0xf]
  %v3396 = vld [vmem:[%s0 + $0x78] sm:$0xf]
  %v3397 = vld [vmem:[%s0 + $0x7c] sm:$0xf]
  %v3398 = vld [vmem:[%s0 + $0x80] sm:$0xf]
  %v3399 = vld [vmem:[%s0 + $0x84] sm:$0xf]
  %v3400 = vld [vmem:[%s0 + $0x88] sm:$0xf]
  %v3401 = vld [vmem:[%s0 + $0x8c] sm:$0xf]
  %v3402 = vld [vmem:[%s0 + $0x90] sm:$0xf]
  %v3403 = vld [vmem:[%s0 + $0x94] sm:$0xf]
  %v3404 = vld [vmem:[%s0 + $0x98] sm:$0xf]
  %v3405 = vld [vmem:[%s0 + $0x9c] sm:$0xf]
  %v3406 = vld [vmem:[%s0 + $0xa0] sm:$0x3]
  %v3407 = vld [vmem:[%s1 + $0x8] sm:$0x6]
  %v3408 = vld [vmem:[#allocation2] sm:$0xff]
  %v3409 = vld [vmem:[#allocation2 + $0x8] sm:$0xff]
  %v3410 = vld [vmem:[#allocation2 + $0x10] sm:$0xff]
  %v3411 = vld [vmem:[#allocation2 + $0x18] sm:$0xff]
  %v3412 = vld [vmem:[#allocation2 + $0x20] sm:$0xff]
  %v3413 = vld [vmem:[#allocation2 + $0x28] sm:$0xff]
  %v3414 = vld [vmem:[#allocation2 + $0x30] sm:$0xff]
  %v3415 = vld [vmem:[#allocation2 + $0x38] sm:$0xff]
  %v3416 = vld [vmem:[#allocation2 + $0x40] sm:$0xff]
  %v3417 = vld [vmem:[#allocation2 + $0x48] sm:$0xff]
  %v3418 = vld [vmem:[#allocation2 + $0x50] sm:$0xff]
  %v3419 = vld [vmem:[#allocation2 + $0x58] sm:$0xff]
  %v3420 = vld [vmem:[#allocation2 + $0x60] sm:$0xff]
  %v3421 = vld [vmem:[#allocation2 + $0x68] sm:$0xff]
  %v3422 = vld [vmem:[#allocation2 + $0x70] sm:$0xff]
  %v3423 = vld [vmem:[#allocation2 + $0x78] sm:$0xff]
  %v3424 = vld [vmem:[#allocation2 + $0x80] sm:$0xff]
  %v3425 = vld [vmem:[#allocation2 + $0x88] sm:$0xff]
  %v3426 = vld [vmem:[#allocation2 + $0x90] sm:$0xff]
  %v3427 = vld [vmem:[#allocation2 + $0x98] sm:$0xff]
  %v3428 = vld [vmem:[#allocation2 + $0xa0] sm:$0xff]
  %v3429 = vld [vmem:[#allocation2 + $0xa8] sm:$0xff]
  %v3430 = vld [vmem:[#allocation2 + $0xb0] sm:$0xff]
  %v3431 = vld [vmem:[#allocation2 + $0xb8] sm:$0xff]
  %v3432 = vld [vmem:[#allocation2 + $0xc0] sm:$0xff]
  %v3433 = vld [vmem:[#allocation2 + $0xc8] sm:$0xff]
  %v3434 = vld [vmem:[#allocation2 + $0xd0] sm:$0xff]
  %v3435 = vld [vmem:[#allocation2 + $0xd8] sm:$0xff]
  %v3436 = vld [vmem:[#allocation2 + $0xe0] sm:$0xff]
  %v3437 = vld [vmem:[#allocation2 + $0xe8] sm:$0xff]
  %v3438 = vld [vmem:[#allocation2 + $0xf0] sm:$0xff]
  %v3439 = vld [vmem:[#allocation2 + $0xf8] sm:$0xff]
  %v3440 = vld [vmem:[#allocation2 + $0x100] sm:$0xff]
  %v3441 = vld [vmem:[#allocation2 + $0x108] sm:$0xff]
  %v3442 = vld [vmem:[#allocation2 + $0x110] sm:$0xff]
  %v3443 = vld [vmem:[#allocation2 + $0x118] sm:$0xff]
  %v3481 = vunpack.c.l.b16 %v3370
  %v3482 = vunpack.c.l.b16 %v3371
  %v3483 = vunpack.c.l.b16 %v3372
  %v3484 = vunpack.c.l.b16 %v3373
  %v3485 = vunpack.c.l.b16 %v3374
  %v3486 = vunpack.c.l.b16 %v3375
  %v3487 = vunpack.c.l.b16 %v3376
  %v3488 = vunpack.c.l.b16 %v3377
  %v3489 = vunpack.c.l.b16 %v3378
  %v3490 = vunpack.c.l.b16 %v3379
  %v3491 = vunpack.c.l.b16 %v3380
  %v3492 = vunpack.c.l.b16 %v3381
  %v3493 = vunpack.c.l.b16 %v3382
  %v3494 = vunpack.c.l.b16 %v3383
  %v3495 = vunpack.c.l.b16 %v3384
  %v3496 = vunpack.c.l.b16 %v3385
  %v3497 = vunpack.c.l.b16 %v3386
  %v3498 = vunpack.c.l.b16 %v3387
  %v3499 = vunpack.c.l.b16 %v3388
  %v3500 = vunpack.c.l.b16 %v3389
  %v3501 = vunpack.c.l.b16 %v3390
  %v3502 = vunpack.c.l.b16 %v3391
  %v3503 = vunpack.c.l.b16 %v3392
  %v3504 = vunpack.c.l.b16 %v3393
  %v3505 = vunpack.c.l.b16 %v3394
  %v3506 = vunpack.c.l.b16 %v3395
  %v3507 = vunpack.c.l.b16 %v3396
  %v3508 = vunpack.c.l.b16 %v3397
  %v3509 = vunpack.c.l.b16 %v3398
  %v3510 = vunpack.c.l.b16 %v3399
  %v3511 = vunpack.c.l.b16 %v3400
  %v3512 = vunpack.c.l.b16 %v3401
  %v3513 = vunpack.c.l.b16 %v3402
  %v3514 = vunpack.c.l.b16 %v3403
  %v3515 = vunpack.c.l.b16 %v3404
  %v3516 = vunpack.c.l.b16 %v3405
  %v3517 = vunpack.c.l.b16 %v3406
  %v3518 = vpack.c.b16 %v3482, %v3481
  %v3519 = vpack.c.b16 %v3484, %v3483
  %v3520 = vpack.c.b16 %v3486, %v3485
  %v3521 = vpack.c.b16 %v3488, %v3487
  %v3522 = vpack.c.b16 %v3490, %v3489
  %v3523 = vpack.c.b16 %v3492, %v3491
  %v3524 = vpack.c.b16 %v3494, %v3493
  %v3525 = vpack.c.b16 %v3496, %v3495
  %v3526 = vpack.c.b16 %v3498, %v3497
  %v3527 = vpack.c.b16 %v3500, %v3499
  %v3528 = vpack.c.b16 %v3502, %v3501
  %v3529 = vpack.c.b16 %v3504, %v3503
  %v3530 = vpack.c.b16 %v3506, %v3505
  %v3531 = vpack.c.b16 %v3508, %v3507
  %v3532 = vpack.c.b16 %v3510, %v3509
  %v3533 = vpack.c.b16 %v3512, %v3511
  %v3534 = vpack.c.b16 %v3514, %v3513
  %v3535 = vpack.c.b16 %v3516, %v3515
  %v3536 = vpack.c.b16 %v3517, %v3517
  %v3537 = vrot.slane %v3518, 2
  %v3538 = vrot.slane %v3519, 2
  %v3539 = vsel %vm3013, %v3537, %v3538
  %v3540 = vrot.slane %v3520, 2
  %v3541 = vsel %vm3013, %v3538, %v3540
  %v3542 = vrot.slane %v3521, 2
  %v3543 = vsel %vm3013, %v3540, %v3542
  %v3544 = vrot.slane %v3522, 2
  %v3545 = vsel %vm3013, %v3542, %v3544
  %v3546 = vrot.slane %v3523, 2
  %v3547 = vsel %vm3013, %v3544, %v3546
  %v3548 = vrot.slane %v3524, 2
  %v3549 = vsel %vm3013, %v3546, %v3548
  %v3550 = vrot.slane %v3525, 2
  %v3551 = vsel %vm3013, %v3548, %v3550
  %v3552 = vrot.slane %v3526, 2
  %v3553 = vsel %vm3013, %v3550, %v3552
  %v3554 = vrot.slane %v3527, 2
  %v3555 = vsel %vm3013, %v3552, %v3554
  %v3556 = vrot.slane %v3528, 2
  %v3557 = vsel %vm3013, %v3554, %v3556
  %v3558 = vrot.slane %v3529, 2
  %v3559 = vsel %vm3013, %v3556, %v3558
  %v3560 = vrot.slane %v3530, 2
  %v3561 = vsel %vm3013, %v3558, %v3560
  %v3562 = vrot.slane %v3531, 2
  %v3563 = vsel %vm3013, %v3560, %v3562
  %v3564 = vrot.slane %v3532, 2
  %v3565 = vsel %vm3013, %v3562, %v3564
  %v3566 = vrot.slane %v3533, 2
  %v3567 = vsel %vm3013, %v3564, %v3566
  %v3568 = vrot.slane %v3534, 2
  %v3569 = vsel %vm3013, %v3566, %v3568
  %v3570 = vrot.slane %v3535, 2
  %v3571 = vsel %vm3013, %v3568, %v3570
  %v3572 = vrot.slane %v3536, 2
  %v3573 = vsel %vm3013, %v3570, %v3572
  %v3575 = vunpack.c.l.b16 %v3407
  %v3576 = vpack.c.b16 %v3575, %v3575
  %v3577 = vrot.slane %v3576, 1
  %v3579 = vsel %vm215, %v3539, 0
  %v3582 = vsel %vm215, %v3541, 0
  %v3585 = vsel %vm215, %v3543, 0
  %v3588 = vsel %vm215, %v3545, 0
  %v3591 = vsel %vm215, %v3547, 0
  %v3594 = vsel %vm215, %v3549, 0
  %v3597 = vsel %vm215, %v3551, 0
  %v3600 = vsel %vm215, %v3553, 0
  %v3603 = vsel %vm215, %v3555, 0
  %v3606 = vsel %vm215, %v3557, 0
  %v3609 = vsel %vm215, %v3559, 0
  %v3612 = vsel %vm215, %v3561, 0
  %v3615 = vsel %vm215, %v3563, 0
  %v3618 = vsel %vm215, %v3565, 0
  %v3621 = vsel %vm215, %v3567, 0
  %v3624 = vsel %vm215, %v3569, 0
  %v3627 = vsel %vm215, %v3571, 0
  %v3630 = vsel %vm215, %v3573, 0
  %v3633 = vand.u32 %v3577, %v273
  %3635 = vmatprep.subr.bf16.mxu0 0
  %3636 = vmatpush1.bf16.msra.mxu0 0
  %3637 = vmatprep.subr.bf16.mxu0 0
  %3638 = vmatpush1.bf16.msra.mxu0 0
  %3639 = vmatprep.subr.bf16.mxu0 0
  %3640 = vmatpush1.bf16.msra.mxu0 0
  %3641 = vmatprep.subr.bf16.mxu0 0
  %3642 = vmatpush1.bf16.msra.mxu0 0
  %3643 = vmatprep.subr.bf16.mxu0 0
  %3644 = vmatpush1.bf16.msra.mxu0 0
  %3645 = vmatprep.subr.bf16.mxu0 0
  %3646 = vmatpush1.bf16.msra.mxu0 0
  %3647 = vmatprep.subr.bf16.mxu0 0
  %3648 = vmatpush1.bf16.msra.mxu0 0
  %3649 = vmatprep.subr.bf16.mxu0 0
  %3650 = vmatpush1.bf16.msra.mxu0 %v3633
  %3651 = vmatprep.subr.bf16.mxu0 0
  %3652 = vmatpush2.bf16.msra.mxu0 0
  %3653 = vmatprep.subr.bf16.mxu0 0
  %3654 = vmatpush2.bf16.msra.mxu0 0
  %3655 = vmatprep.subr.bf16.mxu0 0
  %3656 = vmatpush2.bf16.msra.mxu0 0
  %3657 = vmatprep.subr.bf16.mxu0 0
  %3658 = vmatpush2.bf16.msra.mxu0 0
  %3659 = vmatprep.subr.bf16.mxu0 0
  %3660 = vmatpush2.bf16.msra.mxu0 0
  %3661 = vmatprep.subr.bf16.mxu0 0
  %3662 = vmatpush2.bf16.msra.mxu0 0
  %3663 = vmatprep.subr.bf16.mxu0 0
  %3664 = vmatpush2.bf16.msra.mxu0 0
  %3665 = vmatprep.subr.bf16.mxu0 0
  %3666 = vmatpush2.bf16.msra.mxu0 0
  %3667 = vmatprep.mubr.bf16.mxu0 0
  %3668 = vmatmul.mubr.bf16.gmra.mxu0 %v3579
  %v3669 = vpop.f32.mrf.mxu0
  %v3670 = vadd.f32 0.0, %v3669
  %v3671 = vpop.f32.mrf.mxu0
  %v3672 = vpop.f32.mrf.mxu0
  %v3673 = vadd.f32 0.0, %v3672
  %v3674 = vpop.f32.mrf.mxu0
  %3675 = vmatprep.mubr.bf16.mxu0 0
  %3676 = vmatmul.mubr.bf16.gmra.mxu0 %v3582
  %v3677 = vpop.f32.mrf.mxu0
  %v3678 = vadd.f32 0.0, %v3677
  %v3679 = vpop.f32.mrf.mxu0
  %v3680 = vpop.f32.mrf.mxu0
  %v3681 = vadd.f32 0.0, %v3680
  %v3682 = vpop.f32.mrf.mxu0
  %3683 = vmatprep.mubr.bf16.mxu0 0
  %3684 = vmatmul.mubr.bf16.gmra.mxu0 %v3585
  %v3685 = vpop.f32.mrf.mxu0
  %v3686 = vadd.f32 0.0, %v3685
  %v3687 = vpop.f32.mrf.mxu0
  %v3688 = vpop.f32.mrf.mxu0
  %v3689 = vadd.f32 0.0, %v3688
  %v3690 = vpop.f32.mrf.mxu0
  %3691 = vmatprep.mubr.bf16.mxu0 0
  %3692 = vmatmul.mubr.bf16.gmra.mxu0 %v3588
  %v3693 = vpop.f32.mrf.mxu0
  %v3694 = vadd.f32 0.0, %v3693
  %v3695 = vpop.f32.mrf.mxu0
  %v3696 = vpop.f32.mrf.mxu0
  %v3697 = vadd.f32 0.0, %v3696
  %v3698 = vpop.f32.mrf.mxu0
  %3699 = vmatprep.mubr.bf16.mxu0 0
  %3700 = vmatmul.mubr.bf16.gmra.mxu0 %v3591
  %v3701 = vpop.f32.mrf.mxu0
  %v3702 = vadd.f32 0.0, %v3701
  %v3703 = vpop.f32.mrf.mxu0
  %v3704 = vpop.f32.mrf.mxu0
  %v3705 = vadd.f32 0.0, %v3704
  %v3706 = vpop.f32.mrf.mxu0
  %3707 = vmatprep.mubr.bf16.mxu0 0
  %3708 = vmatmul.mubr.bf16.gmra.mxu0 %v3594
  %v3709 = vpop.f32.mrf.mxu0
  %v3710 = vadd.f32 0.0, %v3709
  %v3711 = vpop.f32.mrf.mxu0
  %v3712 = vpop.f32.mrf.mxu0
  %v3713 = vadd.f32 0.0, %v3712
  %v3714 = vpop.f32.mrf.mxu0
  %3715 = vmatprep.mubr.bf16.mxu0 0
  %3716 = vmatmul.mubr.bf16.gmra.mxu0 %v3597
  %v3717 = vpop.f32.mrf.mxu0
  %v3718 = vadd.f32 0.0, %v3717
  %v3719 = vpop.f32.mrf.mxu0
  %v3720 = vpop.f32.mrf.mxu0
  %v3721 = vadd.f32 0.0, %v3720
  %v3722 = vpop.f32.mrf.mxu0
  %3723 = vmatprep.mubr.bf16.mxu0 0
  %3724 = vmatmul.mubr.bf16.gmra.mxu0 %v3600
  %v3725 = vpop.f32.mrf.mxu0
  %v3726 = vadd.f32 0.0, %v3725
  %v3727 = vpop.f32.mrf.mxu0
  %v3728 = vpop.f32.mrf.mxu0
  %v3729 = vadd.f32 0.0, %v3728
  %v3730 = vpop.f32.mrf.mxu0
  %3731 = vmatprep.mubr.bf16.mxu0 0
  %3732 = vmatmul.mubr.bf16.gmra.mxu0 %v3603
  %v3733 = vpop.f32.mrf.mxu0
  %v3734 = vadd.f32 0.0, %v3733
  %v3735 = vpop.f32.mrf.mxu0
  %v3736 = vpop.f32.mrf.mxu0
  %v3737 = vadd.f32 0.0, %v3736
  %v3738 = vpop.f32.mrf.mxu0
  %3739 = vmatprep.mubr.bf16.mxu0 0
  %3740 = vmatmul.mubr.bf16.gmra.mxu0 %v3606
  %v3741 = vpop.f32.mrf.mxu0
  %v3742 = vadd.f32 0.0, %v3741
  %v3743 = vpop.f32.mrf.mxu0
  %v3744 = vpop.f32.mrf.mxu0
  %v3745 = vadd.f32 0.0, %v3744
  %v3746 = vpop.f32.mrf.mxu0
  %3747 = vmatprep.mubr.bf16.mxu0 0
  %3748 = vmatmul.mubr.bf16.gmra.mxu0 %v3609
  %v3749 = vpop.f32.mrf.mxu0
  %v3750 = vadd.f32 0.0, %v3749
  %v3751 = vpop.f32.mrf.mxu0
  %v3752 = vpop.f32.mrf.mxu0
  %v3753 = vadd.f32 0.0, %v3752
  %v3754 = vpop.f32.mrf.mxu0
  %3755 = vmatprep.mubr.bf16.mxu0 0
  %3756 = vmatmul.mubr.bf16.gmra.mxu0 %v3612
  %v3757 = vpop.f32.mrf.mxu0
  %v3758 = vadd.f32 0.0, %v3757
  %v3759 = vpop.f32.mrf.mxu0
  %v3760 = vpop.f32.mrf.mxu0
  %v3761 = vadd.f32 0.0, %v3760
  %v3762 = vpop.f32.mrf.mxu0
  %3763 = vmatprep.mubr.bf16.mxu0 0
  %3764 = vmatmul.mubr.bf16.gmra.mxu0 %v3615
  %v3765 = vpop.f32.mrf.mxu0
  %v3766 = vadd.f32 0.0, %v3765
  %v3767 = vpop.f32.mrf.mxu0
  %v3768 = vpop.f32.mrf.mxu0
  %v3769 = vadd.f32 0.0, %v3768
  %v3770 = vpop.f32.mrf.mxu0
  %3771 = vmatprep.mubr.bf16.mxu0 0
  %3772 = vmatmul.mubr.bf16.gmra.mxu0 %v3618
  %v3773 = vpop.f32.mrf.mxu0
  %v3774 = vadd.f32 0.0, %v3773
  %v3775 = vpop.f32.mrf.mxu0
  %v3776 = vpop.f32.mrf.mxu0
  %v3777 = vadd.f32 0.0, %v3776
  %v3778 = vpop.f32.mrf.mxu0
  %3779 = vmatprep.mubr.bf16.mxu0 0
  %3780 = vmatmul.mubr.bf16.gmra.mxu0 %v3621
  %v3781 = vpop.f32.mrf.mxu0
  %v3782 = vadd.f32 0.0, %v3781
  %v3783 = vpop.f32.mrf.mxu0
  %v3784 = vpop.f32.mrf.mxu0
  %v3785 = vadd.f32 0.0, %v3784
  %v3786 = vpop.f32.mrf.mxu0
  %3787 = vmatprep.mubr.bf16.mxu0 0
  %3788 = vmatmul.mubr.bf16.gmra.mxu0 %v3624
  %v3789 = vpop.f32.mrf.mxu0
  %v3790 = vadd.f32 0.0, %v3789
  %v3791 = vpop.f32.mrf.mxu0
  %v3792 = vpop.f32.mrf.mxu0
  %v3793 = vadd.f32 0.0, %v3792
  %v3794 = vpop.f32.mrf.mxu0
  %3795 = vmatprep.mubr.bf16.mxu0 0
  %3796 = vmatmul.mubr.bf16.gmra.mxu0 %v3627
  %v3797 = vpop.f32.mrf.mxu0
  %v3798 = vadd.f32 0.0, %v3797
  %v3799 = vpop.f32.mrf.mxu0
  %v3800 = vpop.f32.mrf.mxu0
  %v3801 = vadd.f32 0.0, %v3800
  %v3802 = vpop.f32.mrf.mxu0
  %3803 = vmatprep.mubr.bf16.mxu0 0
  %3804 = vmatmul.mubr.bf16.gmra.mxu0 %v3630
  %v3805 = vpop.f32.mrf.mxu0
  %v3806 = vadd.f32 0.0, %v3805
  %v3807 = vpop.f32.mrf.mxu0
  %v3808 = vpop.f32.mrf.mxu0
  %v3809 = vadd.f32 0.0, %v3808
  %v3810 = vpop.f32.mrf.mxu0
  %3811 = vdwg.mxu0
  %v3812 = vadd.f32 %v3408, %v3670
  %v3813 = vadd.f32 %v3409, %v3673
  %v3814 = vadd.f32 %v3410, %v3678
  %v3815 = vadd.f32 %v3411, %v3681
  %v3816 = vadd.f32 %v3412, %v3686
  %v3817 = vadd.f32 %v3413, %v3689
  %v3818 = vadd.f32 %v3414, %v3694
  %v3819 = vadd.f32 %v3415, %v3697
  %v3820 = vadd.f32 %v3416, %v3702
  %v3821 = vadd.f32 %v3417, %v3705
  %v3822 = vadd.f32 %v3418, %v3710
  %v3823 = vadd.f32 %v3419, %v3713
  %v3824 = vadd.f32 %v3420, %v3718
  %v3825 = vadd.f32 %v3421, %v3721
  %v3826 = vadd.f32 %v3422, %v3726
  %v3827 = vadd.f32 %v3423, %v3729
  %v3828 = vadd.f32 %v3424, %v3734
  %v3829 = vadd.f32 %v3425, %v3737
  %v3830 = vadd.f32 %v3426, %v3742
  %v3831 = vadd.f32 %v3427, %v3745
  %v3832 = vadd.f32 %v3428, %v3750
  %v3833 = vadd.f32 %v3429, %v3753
  %v3834 = vadd.f32 %v3430, %v3758
  %v3835 = vadd.f32 %v3431, %v3761
  %v3836 = vadd.f32 %v3432, %v3766
  %v3837 = vadd.f32 %v3433, %v3769
  %v3838 = vadd.f32 %v3434, %v3774
  %v3839 = vadd.f32 %v3435, %v3777
  %v3840 = vadd.f32 %v3436, %v3782
  %v3841 = vadd.f32 %v3437, %v3785
  %v3842 = vadd.f32 %v3438, %v3790
  %v3843 = vadd.f32 %v3439, %v3793
  %v3844 = vadd.f32 %v3440, %v3798
  %v3845 = vadd.f32 %v3441, %v3801
  %v3846 = vadd.f32 %v3442, %v3806
  %v3847 = vadd.f32 %v3443, %v3809
  %3848 = vst.msk [vmem:[#allocation2] sm:$0xff] %vm15, %v3812
  %3849 = vst.msk [vmem:[#allocation2 + $0x8] sm:$0xff] %vm15, %v3813
  %3850 = vst.msk [vmem:[#allocation2 + $0x10] sm:$0xff] %vm15, %v3814
  %3851 = vst.msk [vmem:[#allocation2 + $0x18] sm:$0xff] %vm15, %v3815
  %3852 = vst.msk [vmem:[#allocation2 + $0x20] sm:$0xff] %vm15, %v3816
  %3853 = vst.msk [vmem:[#allocation2 + $0x28] sm:$0xff] %vm15, %v3817
  %3854 = vst.msk [vmem:[#allocation2 + $0x30] sm:$0xff] %vm15, %v3818
  %3855 = vst.msk [vmem:[#allocation2 + $0x38] sm:$0xff] %vm15, %v3819
  %3856 = vst.msk [vmem:[#allocation2 + $0x40] sm:$0xff] %vm15, %v3820
  %3857 = vst.msk [vmem:[#allocation2 + $0x48] sm:$0xff] %vm15, %v3821
  %3858 = vst.msk [vmem:[#allocation2 + $0x50] sm:$0xff] %vm15, %v3822
  %3859 = vst.msk [vmem:[#allocation2 + $0x58] sm:$0xff] %vm15, %v3823
  %3860 = vst.msk [vmem:[#allocation2 + $0x60] sm:$0xff] %vm15, %v3824
  %3861 = vst.msk [vmem:[#allocation2 + $0x68] sm:$0xff] %vm15, %v3825
  %3862 = vst.msk [vmem:[#allocation2 + $0x70] sm:$0xff] %vm15, %v3826
  %3863 = vst.msk [vmem:[#allocation2 + $0x78] sm:$0xff] %vm15, %v3827
  %3864 = vst.msk [vmem:[#allocation2 + $0x80] sm:$0xff] %vm15, %v3828
  %3865 = vst.msk [vmem:[#allocation2 + $0x88] sm:$0xff] %vm15, %v3829
  %3866 = vst.msk [vmem:[#allocation2 + $0x90] sm:$0xff] %vm15, %v3830
  %3867 = vst.msk [vmem:[#allocation2 + $0x98] sm:$0xff] %vm15, %v3831
  %3868 = vst.msk [vmem:[#allocation2 + $0xa0] sm:$0xff] %vm15, %v3832
  %3869 = vst.msk [vmem:[#allocation2 + $0xa8] sm:$0xff] %vm15, %v3833
  %3870 = vst.msk [vmem:[#allocation2 + $0xb0] sm:$0xff] %vm15, %v3834
  %3871 = vst.msk [vmem:[#allocation2 + $0xb8] sm:$0xff] %vm15, %v3835
  %3872 = vst.msk [vmem:[#allocation2 + $0xc0] sm:$0xff] %vm15, %v3836
  %3873 = vst.msk [vmem:[#allocation2 + $0xc8] sm:$0xff] %vm15, %v3837
  %3874 = vst.msk [vmem:[#allocation2 + $0xd0] sm:$0xff] %vm15, %v3838
  %3875 = vst.msk [vmem:[#allocation2 + $0xd8] sm:$0xff] %vm15, %v3839
  %3876 = vst.msk [vmem:[#allocation2 + $0xe0] sm:$0xff] %vm15, %v3840
  %3877 = vst.msk [vmem:[#allocation2 + $0xe8] sm:$0xff] %vm15, %v3841
  %3878 = vst.msk [vmem:[#allocation2 + $0xf0] sm:$0xff] %vm15, %v3842
  %3879 = vst.msk [vmem:[#allocation2 + $0xf8] sm:$0xff] %vm15, %v3843
  %3880 = vst.msk [vmem:[#allocation2 + $0x100] sm:$0xff] %vm15, %v3844
  %3881 = vst.msk [vmem:[#allocation2 + $0x108] sm:$0xff] %vm15, %v3845
  %3882 = vst.msk [vmem:[#allocation2 + $0x110] sm:$0xff] %vm15, %v3846
  %3883 = vst.msk [vmem:[#allocation2 + $0x118] sm:$0xff] %vm15, %v3847
  %v3884 = vld [vmem:[%s0 + $0x10] sm:$0xc]
  %v3885 = vld [vmem:[%s0 + $0x14] sm:$0xf]
  %v3886 = vld [vmem:[%s0 + $0x18] sm:$0xf]
  %v3887 = vld [vmem:[%s0 + $0x1c] sm:$0xf]
  %v3888 = vld [vmem:[%s0 + $0x20] sm:$0xf]
  %v3889 = vld [vmem:[%s0 + $0x24] sm:$0xf]
  %v3890 = vld [vmem:[%s0 + $0x28] sm:$0xf]
  %v3891 = vld [vmem:[%s0 + $0x2c] sm:$0xf]
  %v3892 = vld [vmem:[%s0 + $0x30] sm:$0xf]
  %v3893 = vld [vmem:[%s0 + $0x34] sm:$0xf]
  %v3894 = vld [vmem:[%s0 + $0x38] sm:$0xf]
  %v3895 = vld [vmem:[%s0 + $0x3c] sm:$0xf]
  %v3896 = vld [vmem:[%s0 + $0x40] sm:$0xf]
  %v3897 = vld [vmem:[%s0 + $0x44] sm:$0xf]
  %v3898 = vld [vmem:[%s0 + $0x48] sm:$0xf]
  %v3899 = vld [vmem:[%s0 + $0x4c] sm:$0xf]
  %v3900 = vld [vmem:[%s0 + $0x50] sm:$0xf]
  %v3901 = vld [vmem:[%s0 + $0x54] sm:$0xf]
  %v3902 = vld [vmem:[%s0 + $0x58] sm:$0xf]
  %v3903 = vld [vmem:[%s0 + $0x5c] sm:$0xf]
  %v3904 = vld [vmem:[%s0 + $0x60] sm:$0xf]
  %v3905 = vld [vmem:[%s0 + $0x64] sm:$0xf]
  %v3906 = vld [vmem:[%s0 + $0x68] sm:$0xf]
  %v3907 = vld [vmem:[%s0 + $0x6c] sm:$0xf]
  %v3908 = vld [vmem:[%s0 + $0x70] sm:$0xf]
  %v3909 = vld [vmem:[%s0 + $0x74] sm:$0xf]
  %v3910 = vld [vmem:[%s0 + $0x78] sm:$0xf]
  %v3911 = vld [vmem:[%s0 + $0x7c] sm:$0xf]
  %v3912 = vld [vmem:[%s0 + $0x80] sm:$0xf]
  %v3913 = vld [vmem:[%s0 + $0x84] sm:$0xf]
  %v3914 = vld [vmem:[%s0 + $0x88] sm:$0xf]
  %v3915 = vld [vmem:[%s0 + $0x8c] sm:$0xf]
  %v3916 = vld [vmem:[%s0 + $0x90] sm:$0xf]
  %v3917 = vld [vmem:[%s0 + $0x94] sm:$0xf]
  %v3918 = vld [vmem:[%s0 + $0x98] sm:$0xf]
  %v3919 = vld [vmem:[%s0 + $0x9c] sm:$0xf]
  %v3920 = vld [vmem:[%s0 + $0xa0] sm:$0x7]
  %v3921 = vld [vmem:[%s1 + $0x8] sm:$0xc]
  %v3922 = vld [vmem:[#allocation2] sm:$0xff]
  %v3923 = vld [vmem:[#allocation2 + $0x8] sm:$0xff]
  %v3924 = vld [vmem:[#allocation2 + $0x10] sm:$0xff]
  %v3925 = vld [vmem:[#allocation2 + $0x18] sm:$0xff]
  %v3926 = vld [vmem:[#allocation2 + $0x20] sm:$0xff]
  %v3927 = vld [vmem:[#allocation2 + $0x28] sm:$0xff]
  %v3928 = vld [vmem:[#allocation2 + $0x30] sm:$0xff]
  %v3929 = vld [vmem:[#allocation2 + $0x38] sm:$0xff]
  %v3930 = vld [vmem:[#allocation2 + $0x40] sm:$0xff]
  %v3931 = vld [vmem:[#allocation2 + $0x48] sm:$0xff]
  %v3932 = vld [vmem:[#allocation2 + $0x50] sm:$0xff]
  %v3933 = vld [vmem:[#allocation2 + $0x58] sm:$0xff]
  %v3934 = vld [vmem:[#allocation2 + $0x60] sm:$0xff]
  %v3935 = vld [vmem:[#allocation2 + $0x68] sm:$0xff]
  %v3936 = vld [vmem:[#allocation2 + $0x70] sm:$0xff]
  %v3937 = vld [vmem:[#allocation2 + $0x78] sm:$0xff]
  %v3938 = vld [vmem:[#allocation2 + $0x80] sm:$0xff]
  %v3939 = vld [vmem:[#allocation2 + $0x88] sm:$0xff]
  %v3940 = vld [vmem:[#allocation2 + $0x90] sm:$0xff]
  %v3941 = vld [vmem:[#allocation2 + $0x98] sm:$0xff]
  %v3942 = vld [vmem:[#allocation2 + $0xa0] sm:$0xff]
  %v3943 = vld [vmem:[#allocation2 + $0xa8] sm:$0xff]
  %v3944 = vld [vmem:[#allocation2 + $0xb0] sm:$0xff]
  %v3945 = vld [vmem:[#allocation2 + $0xb8] sm:$0xff]
  %v3946 = vld [vmem:[#allocation2 + $0xc0] sm:$0xff]
  %v3947 = vld [vmem:[#allocation2 + $0xc8] sm:$0xff]
  %v3948 = vld [vmem:[#allocation2 + $0xd0] sm:$0xff]
  %v3949 = vld [vmem:[#allocation2 + $0xd8] sm:$0xff]
  %v3950 = vld [vmem:[#allocation2 + $0xe0] sm:$0xff]
  %v3951 = vld [vmem:[#allocation2 + $0xe8] sm:$0xff]
  %v3952 = vld [vmem:[#allocation2 + $0xf0] sm:$0xff]
  %v3953 = vld [vmem:[#allocation2 + $0xf8] sm:$0xff]
  %v3954 = vld [vmem:[#allocation2 + $0x100] sm:$0xff]
  %v3955 = vld [vmem:[#allocation2 + $0x108] sm:$0xff]
  %v3956 = vld [vmem:[#allocation2 + $0x110] sm:$0xff]
  %v3957 = vld [vmem:[#allocation2 + $0x118] sm:$0xff]
  %v3995 = vunpack.c.l.b16 %v3884
  %v3996 = vunpack.c.l.b16 %v3885
  %v3997 = vunpack.c.l.b16 %v3886
  %v3998 = vunpack.c.l.b16 %v3887
  %v3999 = vunpack.c.l.b16 %v3888
  %v4000 = vunpack.c.l.b16 %v3889
  %v4001 = vunpack.c.l.b16 %v3890
  %v4002 = vunpack.c.l.b16 %v3891
  %v4003 = vunpack.c.l.b16 %v3892
  %v4004 = vunpack.c.l.b16 %v3893
  %v4005 = vunpack.c.l.b16 %v3894
  %v4006 = vunpack.c.l.b16 %v3895
  %v4007 = vunpack.c.l.b16 %v3896
  %v4008 = vunpack.c.l.b16 %v3897
  %v4009 = vunpack.c.l.b16 %v3898
  %v4010 = vunpack.c.l.b16 %v3899
  %v4011 = vunpack.c.l.b16 %v3900
  %v4012 = vunpack.c.l.b16 %v3901
  %v4013 = vunpack.c.l.b16 %v3902
  %v4014 = vunpack.c.l.b16 %v3903
  %v4015 = vunpack.c.l.b16 %v3904
  %v4016 = vunpack.c.l.b16 %v3905
  %v4017 = vunpack.c.l.b16 %v3906
  %v4018 = vunpack.c.l.b16 %v3907
  %v4019 = vunpack.c.l.b16 %v3908
  %v4020 = vunpack.c.l.b16 %v3909
  %v4021 = vunpack.c.l.b16 %v3910
  %v4022 = vunpack.c.l.b16 %v3911
  %v4023 = vunpack.c.l.b16 %v3912
  %v4024 = vunpack.c.l.b16 %v3913
  %v4025 = vunpack.c.l.b16 %v3914
  %v4026 = vunpack.c.l.b16 %v3915
  %v4027 = vunpack.c.l.b16 %v3916
  %v4028 = vunpack.c.l.b16 %v3917
  %v4029 = vunpack.c.l.b16 %v3918
  %v4030 = vunpack.c.l.b16 %v3919
  %v4031 = vunpack.c.l.b16 %v3920
  %v4032 = vpack.c.b16 %v3996, %v3995
  %v4033 = vpack.c.b16 %v3998, %v3997
  %v4034 = vpack.c.b16 %v4000, %v3999
  %v4035 = vpack.c.b16 %v4002, %v4001
  %v4036 = vpack.c.b16 %v4004, %v4003
  %v4037 = vpack.c.b16 %v4006, %v4005
  %v4038 = vpack.c.b16 %v4008, %v4007
  %v4039 = vpack.c.b16 %v4010, %v4009
  %v4040 = vpack.c.b16 %v4012, %v4011
  %v4041 = vpack.c.b16 %v4014, %v4013
  %v4042 = vpack.c.b16 %v4016, %v4015
  %v4043 = vpack.c.b16 %v4018, %v4017
  %v4044 = vpack.c.b16 %v4020, %v4019
  %v4045 = vpack.c.b16 %v4022, %v4021
  %v4046 = vpack.c.b16 %v4024, %v4023
  %v4047 = vpack.c.b16 %v4026, %v4025
  %v4048 = vpack.c.b16 %v4028, %v4027
  %v4049 = vpack.c.b16 %v4030, %v4029
  %v4050 = vpack.c.b16 %v4031, %v4031
  %vm4051 = vsmask.f32 5376
  %v4053 = vshrl.u32 %v4032, 16
  %v4055 = vrot.slane %v4053, 2
  %v4056 = vshll.u32 %v4032, 16
  %v4058 = vrot.slane %v4056, 3
  %v4059 = vor.u32 %v4055, %v4058
  %v4061 = vshrl.u32 %v4033, 16
  %v4063 = vrot.slane %v4061, 2
  %v4064 = vshll.u32 %v4033, 16
  %v4066 = vrot.slane %v4064, 3
  %v4067 = vor.u32 %v4063, %v4066
  %v4068 = vsel %vm4051, %v4059, %v4067
  %v4070 = vshrl.u32 %v4034, 16
  %v4072 = vrot.slane %v4070, 2
  %v4073 = vshll.u32 %v4034, 16
  %v4075 = vrot.slane %v4073, 3
  %v4076 = vor.u32 %v4072, %v4075
  %v4077 = vsel %vm4051, %v4067, %v4076
  %v4079 = vshrl.u32 %v4035, 16
  %v4081 = vrot.slane %v4079, 2
  %v4082 = vshll.u32 %v4035, 16
  %v4084 = vrot.slane %v4082, 3
  %v4085 = vor.u32 %v4081, %v4084
  %v4086 = vsel %vm4051, %v4076, %v4085
  %v4088 = vshrl.u32 %v4036, 16
  %v4090 = vrot.slane %v4088, 2
  %v4091 = vshll.u32 %v4036, 16
  %v4093 = vrot.slane %v4091, 3
  %v4094 = vor.u32 %v4090, %v4093
  %v4095 = vsel %vm4051, %v4085, %v4094
  %v4097 = vshrl.u32 %v4037, 16
  %v4099 = vrot.slane %v4097, 2
  %v4100 = vshll.u32 %v4037, 16
  %v4102 = vrot.slane %v4100, 3
  %v4103 = vor.u32 %v4099, %v4102
  %v4104 = vsel %vm4051, %v4094, %v4103
  %v4106 = vshrl.u32 %v4038, 16
  %v4108 = vrot.slane %v4106, 2
  %v4109 = vshll.u32 %v4038, 16
  %v4111 = vrot.slane %v4109, 3
  %v4112 = vor.u32 %v4108, %v4111
  %v4113 = vsel %vm4051, %v4103, %v4112
  %v4115 = vshrl.u32 %v4039, 16
  %v4117 = vrot.slane %v4115, 2
  %v4118 = vshll.u32 %v4039, 16
  %v4120 = vrot.slane %v4118, 3
  %v4121 = vor.u32 %v4117, %v4120
  %v4122 = vsel %vm4051, %v4112, %v4121
  %v4124 = vshrl.u32 %v4040, 16
  %v4126 = vrot.slane %v4124, 2
  %v4127 = vshll.u32 %v4040, 16
  %v4129 = vrot.slane %v4127, 3
  %v4130 = vor.u32 %v4126, %v4129
  %v4131 = vsel %vm4051, %v4121, %v4130
  %v4133 = vshrl.u32 %v4041, 16
  %v4135 = vrot.slane %v4133, 2
  %v4136 = vshll.u32 %v4041, 16
  %v4138 = vrot.slane %v4136, 3
  %v4139 = vor.u32 %v4135, %v4138
  %v4140 = vsel %vm4051, %v4130, %v4139
  %v4142 = vshrl.u32 %v4042, 16
  %v4144 = vrot.slane %v4142, 2
  %v4145 = vshll.u32 %v4042, 16
  %v4147 = vrot.slane %v4145, 3
  %v4148 = vor.u32 %v4144, %v4147
  %v4149 = vsel %vm4051, %v4139, %v4148
  %v4151 = vshrl.u32 %v4043, 16
  %v4153 = vrot.slane %v4151, 2
  %v4154 = vshll.u32 %v4043, 16
  %v4156 = vrot.slane %v4154, 3
  %v4157 = vor.u32 %v4153, %v4156
  %v4158 = vsel %vm4051, %v4148, %v4157
  %v4160 = vshrl.u32 %v4044, 16
  %v4162 = vrot.slane %v4160, 2
  %v4163 = vshll.u32 %v4044, 16
  %v4165 = vrot.slane %v4163, 3
  %v4166 = vor.u32 %v4162, %v4165
  %v4167 = vsel %vm4051, %v4157, %v4166
  %v4169 = vshrl.u32 %v4045, 16
  %v4171 = vrot.slane %v4169, 2
  %v4172 = vshll.u32 %v4045, 16
  %v4174 = vrot.slane %v4172, 3
  %v4175 = vor.u32 %v4171, %v4174
  %v4176 = vsel %vm4051, %v4166, %v4175
  %v4178 = vshrl.u32 %v4046, 16
  %v4180 = vrot.slane %v4178, 2
  %v4181 = vshll.u32 %v4046, 16
  %v4183 = vrot.slane %v4181, 3
  %v4184 = vor.u32 %v4180, %v4183
  %v4185 = vsel %vm4051, %v4175, %v4184
  %v4187 = vshrl.u32 %v4047, 16
  %v4189 = vrot.slane %v4187, 2
  %v4190 = vshll.u32 %v4047, 16
  %v4192 = vrot.slane %v4190, 3
  %v4193 = vor.u32 %v4189, %v4192
  %v4194 = vsel %vm4051, %v4184, %v4193
  %v4196 = vshrl.u32 %v4048, 16
  %v4198 = vrot.slane %v4196, 2
  %v4199 = vshll.u32 %v4048, 16
  %v4201 = vrot.slane %v4199, 3
  %v4202 = vor.u32 %v4198, %v4201
  %v4203 = vsel %vm4051, %v4193, %v4202
  %v4205 = vshrl.u32 %v4049, 16
  %v4207 = vrot.slane %v4205, 2
  %v4208 = vshll.u32 %v4049, 16
  %v4210 = vrot.slane %v4208, 3
  %v4211 = vor.u32 %v4207, %v4210
  %v4212 = vsel %vm4051, %v4202, %v4211
  %v4214 = vshrl.u32 %v4050, 16
  %v4216 = vrot.slane %v4214, 2
  %v4217 = vshll.u32 %v4050, 16
  %v4219 = vrot.slane %v4217, 3
  %v4220 = vor.u32 %v4216, %v4219
  %v4221 = vsel %vm4051, %v4211, %v4220
  %v4223 = vunpack.c.l.b16 %v3921
  %v4224 = vpack.c.b16 %v4223, %v4223
  %v4226 = vshrl.u32 %v4224, 16
  %v4228 = vrot.slane %v4226, 2
  %v4229 = vshll.u32 %v4224, 16
  %v4231 = vrot.slane %v4229, 3
  %v4232 = vor.u32 %v4228, %v4231
  %v4234 = vsel %vm215, %v4068, 0
  %v4237 = vsel %vm215, %v4077, 0
  %v4240 = vsel %vm215, %v4086, 0
  %v4243 = vsel %vm215, %v4095, 0
  %v4246 = vsel %vm215, %v4104, 0
  %v4249 = vsel %vm215, %v4113, 0
  %v4252 = vsel %vm215, %v4122, 0
  %v4255 = vsel %vm215, %v4131, 0
  %v4258 = vsel %vm215, %v4140, 0
  %v4261 = vsel %vm215, %v4149, 0
  %v4264 = vsel %vm215, %v4158, 0
  %v4267 = vsel %vm215, %v4167, 0
  %v4270 = vsel %vm215, %v4176, 0
  %v4273 = vsel %vm215, %v4185, 0
  %v4276 = vsel %vm215, %v4194, 0
  %v4279 = vsel %vm215, %v4203, 0
  %v4282 = vsel %vm215, %v4212, 0
  %v4285 = vsel %vm215, %v4221, 0
  %v4288 = vand.u32 %v4232, %v273
  %4290 = vmatprep.subr.bf16.mxu0 0
  %4291 = vmatpush1.bf16.msra.mxu0 0
  %4292 = vmatprep.subr.bf16.mxu0 0
  %4293 = vmatpush1.bf16.msra.mxu0 0
  %4294 = vmatprep.subr.bf16.mxu0 0
  %4295 = vmatpush1.bf16.msra.mxu0 0
  %4296 = vmatprep.subr.bf16.mxu0 0
  %4297 = vmatpush1.bf16.msra.mxu0 0
  %4298 = vmatprep.subr.bf16.mxu0 0
  %4299 = vmatpush1.bf16.msra.mxu0 0
  %4300 = vmatprep.subr.bf16.mxu0 0
  %4301 = vmatpush1.bf16.msra.mxu0 0
  %4302 = vmatprep.subr.bf16.mxu0 0
  %4303 = vmatpush1.bf16.msra.mxu0 0
  %4304 = vmatprep.subr.bf16.mxu0 0
  %4305 = vmatpush1.bf16.msra.mxu0 %v4288
  %4306 = vmatprep.subr.bf16.mxu0 0
  %4307 = vmatpush2.bf16.msra.mxu0 0
  %4308 = vmatprep.subr.bf16.mxu0 0
  %4309 = vmatpush2.bf16.msra.mxu0 0
  %4310 = vmatprep.subr.bf16.mxu0 0
  %4311 = vmatpush2.bf16.msra.mxu0 0
  %4312 = vmatprep.subr.bf16.mxu0 0
  %4313 = vmatpush2.bf16.msra.mxu0 0
  %4314 = vmatprep.subr.bf16.mxu0 0
  %4315 = vmatpush2.bf16.msra.mxu0 0
  %4316 = vmatprep.subr.bf16.mxu0 0
  %4317 = vmatpush2.bf16.msra.mxu0 0
  %4318 = vmatprep.subr.bf16.mxu0 0
  %4319 = vmatpush2.bf16.msra.mxu0 0
  %4320 = vmatprep.subr.bf16.mxu0 0
  %4321 = vmatpush2.bf16.msra.mxu0 0
  %4322 = vmatprep.mubr.bf16.mxu0 0
  %4323 = vmatmul.mubr.bf16.gmra.mxu0 %v4234
  %v4324 = vpop.f32.mrf.mxu0
  %v4325 = vadd.f32 0.0, %v4324
  %v4326 = vpop.f32.mrf.mxu0
  %v4327 = vpop.f32.mrf.mxu0
  %v4328 = vadd.f32 0.0, %v4327
  %v4329 = vpop.f32.mrf.mxu0
  %4330 = vmatprep.mubr.bf16.mxu0 0
  %4331 = vmatmul.mubr.bf16.gmra.mxu0 %v4237
  %v4332 = vpop.f32.mrf.mxu0
  %v4333 = vadd.f32 0.0, %v4332
  %v4334 = vpop.f32.mrf.mxu0
  %v4335 = vpop.f32.mrf.mxu0
  %v4336 = vadd.f32 0.0, %v4335
  %v4337 = vpop.f32.mrf.mxu0
  %4338 = vmatprep.mubr.bf16.mxu0 0
  %4339 = vmatmul.mubr.bf16.gmra.mxu0 %v4240
  %v4340 = vpop.f32.mrf.mxu0
  %v4341 = vadd.f32 0.0, %v4340
  %v4342 = vpop.f32.mrf.mxu0
  %v4343 = vpop.f32.mrf.mxu0
  %v4344 = vadd.f32 0.0, %v4343
  %v4345 = vpop.f32.mrf.mxu0
  %4346 = vmatprep.mubr.bf16.mxu0 0
  %4347 = vmatmul.mubr.bf16.gmra.mxu0 %v4243
  %v4348 = vpop.f32.mrf.mxu0
  %v4349 = vadd.f32 0.0, %v4348
  %v4350 = vpop.f32.mrf.mxu0
  %v4351 = vpop.f32.mrf.mxu0
  %v4352 = vadd.f32 0.0, %v4351
  %v4353 = vpop.f32.mrf.mxu0
  %4354 = vmatprep.mubr.bf16.mxu0 0
  %4355 = vmatmul.mubr.bf16.gmra.mxu0 %v4246
  %v4356 = vpop.f32.mrf.mxu0
  %v4357 = vadd.f32 0.0, %v4356
  %v4358 = vpop.f32.mrf.mxu0
  %v4359 = vpop.f32.mrf.mxu0
  %v4360 = vadd.f32 0.0, %v4359
  %v4361 = vpop.f32.mrf.mxu0
  %4362 = vmatprep.mubr.bf16.mxu0 0
  %4363 = vmatmul.mubr.bf16.gmra.mxu0 %v4249
  %v4364 = vpop.f32.mrf.mxu0
  %v4365 = vadd.f32 0.0, %v4364
  %v4366 = vpop.f32.mrf.mxu0
  %v4367 = vpop.f32.mrf.mxu0
  %v4368 = vadd.f32 0.0, %v4367
  %v4369 = vpop.f32.mrf.mxu0
  %4370 = vmatprep.mubr.bf16.mxu0 0
  %4371 = vmatmul.mubr.bf16.gmra.mxu0 %v4252
  %v4372 = vpop.f32.mrf.mxu0
  %v4373 = vadd.f32 0.0, %v4372
  %v4374 = vpop.f32.mrf.mxu0
  %v4375 = vpop.f32.mrf.mxu0
  %v4376 = vadd.f32 0.0, %v4375
  %v4377 = vpop.f32.mrf.mxu0
  %4378 = vmatprep.mubr.bf16.mxu0 0
  %4379 = vmatmul.mubr.bf16.gmra.mxu0 %v4255
  %v4380 = vpop.f32.mrf.mxu0
  %v4381 = vadd.f32 0.0, %v4380
  %v4382 = vpop.f32.mrf.mxu0
  %v4383 = vpop.f32.mrf.mxu0
  %v4384 = vadd.f32 0.0, %v4383
  %v4385 = vpop.f32.mrf.mxu0
  %4386 = vmatprep.mubr.bf16.mxu0 0
  %4387 = vmatmul.mubr.bf16.gmra.mxu0 %v4258
  %v4388 = vpop.f32.mrf.mxu0
  %v4389 = vadd.f32 0.0, %v4388
  %v4390 = vpop.f32.mrf.mxu0
  %v4391 = vpop.f32.mrf.mxu0
  %v4392 = vadd.f32 0.0, %v4391
  %v4393 = vpop.f32.mrf.mxu0
  %4394 = vmatprep.mubr.bf16.mxu0 0
  %4395 = vmatmul.mubr.bf16.gmra.mxu0 %v4261
  %v4396 = vpop.f32.mrf.mxu0
  %v4397 = vadd.f32 0.0, %v4396
  %v4398 = vpop.f32.mrf.mxu0
  %v4399 = vpop.f32.mrf.mxu0
  %v4400 = vadd.f32 0.0, %v4399
  %v4401 = vpop.f32.mrf.mxu0
  %4402 = vmatprep.mubr.bf16.mxu0 0
  %4403 = vmatmul.mubr.bf16.gmra.mxu0 %v4264
  %v4404 = vpop.f32.mrf.mxu0
  %v4405 = vadd.f32 0.0, %v4404
  %v4406 = vpop.f32.mrf.mxu0
  %v4407 = vpop.f32.mrf.mxu0
  %v4408 = vadd.f32 0.0, %v4407
  %v4409 = vpop.f32.mrf.mxu0
  %4410 = vmatprep.mubr.bf16.mxu0 0
  %4411 = vmatmul.mubr.bf16.gmra.mxu0 %v4267
  %v4412 = vpop.f32.mrf.mxu0
  %v4413 = vadd.f32 0.0, %v4412
  %v4414 = vpop.f32.mrf.mxu0
  %v4415 = vpop.f32.mrf.mxu0
  %v4416 = vadd.f32 0.0, %v4415
  %v4417 = vpop.f32.mrf.mxu0
  %4418 = vmatprep.mubr.bf16.mxu0 0
  %4419 = vmatmul.mubr.bf16.gmra.mxu0 %v4270
  %v4420 = vpop.f32.mrf.mxu0
  %v4421 = vadd.f32 0.0, %v4420
  %v4422 = vpop.f32.mrf.mxu0
  %v4423 = vpop.f32.mrf.mxu0
  %v4424 = vadd.f32 0.0, %v4423
  %v4425 = vpop.f32.mrf.mxu0
  %4426 = vmatprep.mubr.bf16.mxu0 0
  %4427 = vmatmul.mubr.bf16.gmra.mxu0 %v4273
  %v4428 = vpop.f32.mrf.mxu0
  %v4429 = vadd.f32 0.0, %v4428
  %v4430 = vpop.f32.mrf.mxu0
  %v4431 = vpop.f32.mrf.mxu0
  %v4432 = vadd.f32 0.0, %v4431
  %v4433 = vpop.f32.mrf.mxu0
  %4434 = vmatprep.mubr.bf16.mxu0 0
  %4435 = vmatmul.mubr.bf16.gmra.mxu0 %v4276
  %v4436 = vpop.f32.mrf.mxu0
  %v4437 = vadd.f32 0.0, %v4436
  %v4438 = vpop.f32.mrf.mxu0
  %v4439 = vpop.f32.mrf.mxu0
  %v4440 = vadd.f32 0.0, %v4439
  %v4441 = vpop.f32.mrf.mxu0
  %4442 = vmatprep.mubr.bf16.mxu0 0
  %4443 = vmatmul.mubr.bf16.gmra.mxu0 %v4279
  %v4444 = vpop.f32.mrf.mxu0
  %v4445 = vadd.f32 0.0, %v4444
  %v4446 = vpop.f32.mrf.mxu0
  %v4447 = vpop.f32.mrf.mxu0
  %v4448 = vadd.f32 0.0, %v4447
  %v4449 = vpop.f32.mrf.mxu0
  %4450 = vmatprep.mubr.bf16.mxu0 0
  %4451 = vmatmul.mubr.bf16.gmra.mxu0 %v4282
  %v4452 = vpop.f32.mrf.mxu0
  %v4453 = vadd.f32 0.0, %v4452
  %v4454 = vpop.f32.mrf.mxu0
  %v4455 = vpop.f32.mrf.mxu0
  %v4456 = vadd.f32 0.0, %v4455
  %v4457 = vpop.f32.mrf.mxu0
  %4458 = vmatprep.mubr.bf16.mxu0 0
  %4459 = vmatmul.mubr.bf16.gmra.mxu0 %v4285
  %v4460 = vpop.f32.mrf.mxu0
  %v4461 = vadd.f32 0.0, %v4460
  %v4462 = vpop.f32.mrf.mxu0
  %v4463 = vpop.f32.mrf.mxu0
  %v4464 = vadd.f32 0.0, %v4463
  %v4465 = vpop.f32.mrf.mxu0
  %4466 = vdwg.mxu0
  %v4467 = vadd.f32 %v3922, %v4325
  %v4468 = vadd.f32 %v3923, %v4328
  %v4469 = vadd.f32 %v3924, %v4333
  %v4470 = vadd.f32 %v3925, %v4336
  %v4471 = vadd.f32 %v3926, %v4341
  %v4472 = vadd.f32 %v3927, %v4344
  %v4473 = vadd.f32 %v3928, %v4349
  %v4474 = vadd.f32 %v3929, %v4352
  %v4475 = vadd.f32 %v3930, %v4357
  %v4476 = vadd.f32 %v3931, %v4360
  %v4477 = vadd.f32 %v3932, %v4365
  %v4478 = vadd.f32 %v3933, %v4368
  %v4479 = vadd.f32 %v3934, %v4373
  %v4480 = vadd.f32 %v3935, %v4376
  %v4481 = vadd.f32 %v3936, %v4381
  %v4482 = vadd.f32 %v3937, %v4384
  %v4483 = vadd.f32 %v3938, %v4389
  %v4484 = vadd.f32 %v3939, %v4392
  %v4485 = vadd.f32 %v3940, %v4397
  %v4486 = vadd.f32 %v3941, %v4400
  %v4487 = vadd.f32 %v3942, %v4405
  %v4488 = vadd.f32 %v3943, %v4408
  %v4489 = vadd.f32 %v3944, %v4413
  %v4490 = vadd.f32 %v3945, %v4416
  %v4491 = vadd.f32 %v3946, %v4421
  %v4492 = vadd.f32 %v3947, %v4424
  %v4493 = vadd.f32 %v3948, %v4429
  %v4494 = vadd.f32 %v3949, %v4432
  %v4495 = vadd.f32 %v3950, %v4437
  %v4496 = vadd.f32 %v3951, %v4440
  %v4497 = vadd.f32 %v3952, %v4445
  %v4498 = vadd.f32 %v3953, %v4448
  %v4499 = vadd.f32 %v3954, %v4453
  %v4500 = vadd.f32 %v3955, %v4456
  %v4501 = vadd.f32 %v3956, %v4461
  %v4502 = vadd.f32 %v3957, %v4464
  %4503 = vst.msk [vmem:[#allocation2] sm:$0xff] %vm15, %v4467
  %4504 = vst.msk [vmem:[#allocation2 + $0x8] sm:$0xff] %vm15, %v4468
  %4505 = vst.msk [vmem:[#allocation2 + $0x10] sm:$0xff] %vm15, %v4469
  %4506 = vst.msk [vmem:[#allocation2 + $0x18] sm:$0xff] %vm15, %v4470
  %4507 = vst.msk [vmem:[#allocation2 + $0x20] sm:$0xff] %vm15, %v4471
  %4508 = vst.msk [vmem:[#allocation2 + $0x28] sm:$0xff] %vm15, %v4472
  %4509 = vst.msk [vmem:[#allocation2 + $0x30] sm:$0xff] %vm15, %v4473
  %4510 = vst.msk [vmem:[#allocation2 + $0x38] sm:$0xff] %vm15, %v4474
  %4511 = vst.msk [vmem:[#allocation2 + $0x40] sm:$0xff] %vm15, %v4475
  %4512 = vst.msk [vmem:[#allocation2 + $0x48] sm:$0xff] %vm15, %v4476
  %4513 = vst.msk [vmem:[#allocation2 + $0x50] sm:$0xff] %vm15, %v4477
  %4514 = vst.msk [vmem:[#allocation2 + $0x58] sm:$0xff] %vm15, %v4478
  %4515 = vst.msk [vmem:[#allocation2 + $0x60] sm:$0xff] %vm15, %v4479
  %4516 = vst.msk [vmem:[#allocation2 + $0x68] sm:$0xff] %vm15, %v4480
  %4517 = vst.msk [vmem:[#allocation2 + $0x70] sm:$0xff] %vm15, %v4481
  %4518 = vst.msk [vmem:[#allocation2 + $0x78] sm:$0xff] %vm15, %v4482
  %4519 = vst.msk [vmem:[#allocation2 + $0x80] sm:$0xff] %vm15, %v4483
  %4520 = vst.msk [vmem:[#allocation2 + $0x88] sm:$0xff] %vm15, %v4484
  %4521 = vst.msk [vmem:[#allocation2 + $0x90] sm:$0xff] %vm15, %v4485
  %4522 = vst.msk [vmem:[#allocation2 + $0x98] sm:$0xff] %vm15, %v4486
  %4523 = vst.msk [vmem:[#allocation2 + $0xa0] sm:$0xff] %vm15, %v4487
  %4524 = vst.msk [vmem:[#allocation2 + $0xa8] sm:$0xff] %vm15, %v4488
  %4525 = vst.msk [vmem:[#allocation2 + $0xb0] sm:$0xff] %vm15, %v4489
  %4526 = vst.msk [vmem:[#allocation2 + $0xb8] sm:$0xff] %vm15, %v4490
  %4527 = vst.msk [vmem:[#allocation2 + $0xc0] sm:$0xff] %vm15, %v4491
  %4528 = vst.msk [vmem:[#allocation2 + $0xc8] sm:$0xff] %vm15, %v4492
  %4529 = vst.msk [vmem:[#allocation2 + $0xd0] sm:$0xff] %vm15, %v4493
  %4530 = vst.msk [vmem:[#allocation2 + $0xd8] sm:$0xff] %vm15, %v4494
  %4531 = vst.msk [vmem:[#allocation2 + $0xe0] sm:$0xff] %vm15, %v4495
  %4532 = vst.msk [vmem:[#allocation2 + $0xe8] sm:$0xff] %vm15, %v4496
  %4533 = vst.msk [vmem:[#allocation2 + $0xf0] sm:$0xff] %vm15, %v4497
  %4534 = vst.msk [vmem:[#allocation2 + $0xf8] sm:$0xff] %vm15, %v4498
  %4535 = vst.msk [vmem:[#allocation2 + $0x100] sm:$0xff] %vm15, %v4499
  %4536 = vst.msk [vmem:[#allocation2 + $0x108] sm:$0xff] %vm15, %v4500
  %4537 = vst.msk [vmem:[#allocation2 + $0x110] sm:$0xff] %vm15, %v4501
  %4538 = vst.msk [vmem:[#allocation2 + $0x118] sm:$0xff] %vm15, %v4502
  %v4539 = vld [vmem:[%s0 + $0x10] sm:$0x8]
  %v4540 = vld [vmem:[%s0 + $0x14] sm:$0xf]
  %v4541 = vld [vmem:[%s0 + $0x18] sm:$0xf]
  %v4542 = vld [vmem:[%s0 + $0x1c] sm:$0xf]
  %v4543 = vld [vmem:[%s0 + $0x20] sm:$0xf]
  %v4544 = vld [vmem:[%s0 + $0x24] sm:$0xf]
  %v4545 = vld [vmem:[%s0 + $0x28] sm:$0xf]
  %v4546 = vld [vmem:[%s0 + $0x2c] sm:$0xf]
  %v4547 = vld [vmem:[%s0 + $0x30] sm:$0xf]
  %v4548 = vld [vmem:[%s0 + $0x34] sm:$0xf]
  %v4549 = vld [vmem:[%s0 + $0x38] sm:$0xf]
  %v4550 = vld [vmem:[%s0 + $0x3c] sm:$0xf]
  %v4551 = vld [vmem:[%s0 + $0x40] sm:$0xf]
  %v4552 = vld [vmem:[%s0 + $0x44] sm:$0xf]
  %v4553 = vld [vmem:[%s0 + $0x48] sm:$0xf]
  %v4554 = vld [vmem:[%s0 + $0x4c] sm:$0xf]
  %v4555 = vld [vmem:[%s0 + $0x50] sm:$0xf]
  %v4556 = vld [vmem:[%s0 + $0x54] sm:$0xf]
  %v4557 = vld [vmem:[%s0 + $0x58] sm:$0xf]
  %v4558 = vld [vmem:[%s0 + $0x5c] sm:$0xf]
  %v4559 = vld [vmem:[%s0 + $0x60] sm:$0xf]
  %v4560 = vld [vmem:[%s0 + $0x64] sm:$0xf]
  %v4561 = vld [vmem:[%s0 + $0x68] sm:$0xf]
  %v4562 = vld [vmem:[%s0 + $0x6c] sm:$0xf]
  %v4563 = vld [vmem:[%s0 + $0x70] sm:$0xf]
  %v4564 = vld [vmem:[%s0 + $0x74] sm:$0xf]
  %v4565 = vld [vmem:[%s0 + $0x78] sm:$0xf]
  %v4566 = vld [vmem:[%s0 + $0x7c] sm:$0xf]
  %v4567 = vld [vmem:[%s0 + $0x80] sm:$0xf]
  %v4568 = vld [vmem:[%s0 + $0x84] sm:$0xf]
  %v4569 = vld [vmem:[%s0 + $0x88] sm:$0xf]
  %v4570 = vld [vmem:[%s0 + $0x8c] sm:$0xf]
  %v4571 = vld [vmem:[%s0 + $0x90] sm:$0xf]
  %v4572 = vld [vmem:[%s0 + $0x94] sm:$0xf]
  %v4573 = vld [vmem:[%s0 + $0x98] sm:$0xf]
  %v4574 = vld [vmem:[%s0 + $0x9c] sm:$0xf]
  %v4575 = vld [vmem:[%s0 + $0xa0] sm:$0x7]
  %v4576 = vld [vmem:[%s1 + $0xc] sm:$0x3]
  %v4577 = vld [vmem:[#allocation2] sm:$0xff]
  %v4578 = vld [vmem:[#allocation2 + $0x8] sm:$0xff]
  %v4579 = vld [vmem:[#allocation2 + $0x10] sm:$0xff]
  %v4580 = vld [vmem:[#allocation2 + $0x18] sm:$0xff]
  %v4581 = vld [vmem:[#allocation2 + $0x20] sm:$0xff]
  %v4582 = vld [vmem:[#allocation2 + $0x28] sm:$0xff]
  %v4583 = vld [vmem:[#allocation2 + $0x30] sm:$0xff]
  %v4584 = vld [vmem:[#allocation2 + $0x38] sm:$0xff]
  %v4585 = vld [vmem:[#allocation2 + $0x40] sm:$0xff]
  %v4586 = vld [vmem:[#allocation2 + $0x48] sm:$0xff]
  %v4587 = vld [vmem:[#allocation2 + $0x50] sm:$0xff]
  %v4588 = vld [vmem:[#allocation2 + $0x58] sm:$0xff]
  %v4589 = vld [vmem:[#allocation2 + $0x60] sm:$0xff]
  %v4590 = vld [vmem:[#allocation2 + $0x68] sm:$0xff]
  %v4591 = vld [vmem:[#allocation2 + $0x70] sm:$0xff]
  %v4592 = vld [vmem:[#allocation2 + $0x78] sm:$0xff]
  %v4593 = vld [vmem:[#allocation2 + $0x80] sm:$0xff]
  %v4594 = vld [vmem:[#allocation2 + $0x88] sm:$0xff]
  %v4595 = vld [vmem:[#allocation2 + $0x90] sm:$0xff]
  %v4596 = vld [vmem:[#allocation2 + $0x98] sm:$0xff]
  %v4597 = vld [vmem:[#allocation2 + $0xa0] sm:$0xff]
  %v4598 = vld [vmem:[#allocation2 + $0xa8] sm:$0xff]
  %v4599 = vld [vmem:[#allocation2 + $0xb0] sm:$0xff]
  %v4600 = vld [vmem:[#allocation2 + $0xb8] sm:$0xff]
  %v4601 = vld [vmem:[#allocation2 + $0xc0] sm:$0xff]
  %v4602 = vld [vmem:[#allocation2 + $0xc8] sm:$0xff]
  %v4603 = vld [vmem:[#allocation2 + $0xd0] sm:$0xff]
  %v4604 = vld [vmem:[#allocation2 + $0xd8] sm:$0xff]
  %v4605 = vld [vmem:[#allocation2 + $0xe0] sm:$0xff]
  %v4606 = vld [vmem:[#allocation2 + $0xe8] sm:$0xff]
  %v4607 = vld [vmem:[#allocation2 + $0xf0] sm:$0xff]
  %v4608 = vld [vmem:[#allocation2 + $0xf8] sm:$0xff]
  %v4609 = vld [vmem:[#allocation2 + $0x100] sm:$0xff]
  %v4610 = vld [vmem:[#allocation2 + $0x108] sm:$0xff]
  %v4611 = vld [vmem:[#allocation2 + $0x110] sm:$0xff]
  %v4612 = vld [vmem:[#allocation2 + $0x118] sm:$0xff]
  %v4650 = vunpack.c.l.b16 %v4539
  %v4651 = vunpack.c.l.b16 %v4540
  %v4652 = vunpack.c.l.b16 %v4541
  %v4653 = vunpack.c.l.b16 %v4542
  %v4654 = vunpack.c.l.b16 %v4543
  %v4655 = vunpack.c.l.b16 %v4544
  %v4656 = vunpack.c.l.b16 %v4545
  %v4657 = vunpack.c.l.b16 %v4546
  %v4658 = vunpack.c.l.b16 %v4547
  %v4659 = vunpack.c.l.b16 %v4548
  %v4660 = vunpack.c.l.b16 %v4549
  %v4661 = vunpack.c.l.b16 %v4550
  %v4662 = vunpack.c.l.b16 %v4551
  %v4663 = vunpack.c.l.b16 %v4552
  %v4664 = vunpack.c.l.b16 %v4553
  %v4665 = vunpack.c.l.b16 %v4554
  %v4666 = vunpack.c.l.b16 %v4555
  %v4667 = vunpack.c.l.b16 %v4556
  %v4668 = vunpack.c.l.b16 %v4557
  %v4669 = vunpack.c.l.b16 %v4558
  %v4670 = vunpack.c.l.b16 %v4559
  %v4671 = vunpack.c.l.b16 %v4560
  %v4672 = vunpack.c.l.b16 %v4561
  %v4673 = vunpack.c.l.b16 %v4562
  %v4674 = vunpack.c.l.b16 %v4563
  %v4675 = vunpack.c.l.b16 %v4564
  %v4676 = vunpack.c.l.b16 %v4565
  %v4677 = vunpack.c.l.b16 %v4566
  %v4678 = vunpack.c.l.b16 %v4567
  %v4679 = vunpack.c.l.b16 %v4568
  %v4680 = vunpack.c.l.b16 %v4569
  %v4681 = vunpack.c.l.b16 %v4570
  %v4682 = vunpack.c.l.b16 %v4571
  %v4683 = vunpack.c.l.b16 %v4572
  %v4684 = vunpack.c.l.b16 %v4573
  %v4685 = vunpack.c.l.b16 %v4574
  %v4686 = vunpack.c.l.b16 %v4575
  %v4687 = vpack.c.b16 %v4651, %v4650
  %v4688 = vpack.c.b16 %v4653, %v4652
  %v4689 = vpack.c.b16 %v4655, %v4654
  %v4690 = vpack.c.b16 %v4657, %v4656
  %v4691 = vpack.c.b16 %v4659, %v4658
  %v4692 = vpack.c.b16 %v4661, %v4660
  %v4693 = vpack.c.b16 %v4663, %v4662
  %v4694 = vpack.c.b16 %v4665, %v4664
  %v4695 = vpack.c.b16 %v4667, %v4666
  %v4696 = vpack.c.b16 %v4669, %v4668
  %v4697 = vpack.c.b16 %v4671, %v4670
  %v4698 = vpack.c.b16 %v4673, %v4672
  %v4699 = vpack.c.b16 %v4675, %v4674
  %v4700 = vpack.c.b16 %v4677, %v4676
  %v4701 = vpack.c.b16 %v4679, %v4678
  %v4702 = vpack.c.b16 %v4681, %v4680
  %v4703 = vpack.c.b16 %v4683, %v4682
  %v4704 = vpack.c.b16 %v4685, %v4684
  %v4705 = vpack.c.b16 %v4686, %v4686
  %vm4706 = vcmask 1044480
  %v4707 = vrot.slane %v4687, 3
  %v4708 = vrot.slane %v4688, 3
  %v4709 = vsel %vm4706, %v4707, %v4708
  %v4710 = vrot.slane %v4689, 3
  %v4711 = vsel %vm4706, %v4708, %v4710
  %v4712 = vrot.slane %v4690, 3
  %v4713 = vsel %vm4706, %v4710, %v4712
  %v4714 = vrot.slane %v4691, 3
  %v4715 = vsel %vm4706, %v4712, %v4714
  %v4716 = vrot.slane %v4692, 3
  %v4717 = vsel %vm4706, %v4714, %v4716
  %v4718 = vrot.slane %v4693, 3
  %v4719 = vsel %vm4706, %v4716, %v4718
  %v4720 = vrot.slane %v4694, 3
  %v4721 = vsel %vm4706, %v4718, %v4720
  %v4722 = vrot.slane %v4695, 3
  %v4723 = vsel %vm4706, %v4720, %v4722
  %v4724 = vrot.slane %v4696, 3
  %v4725 = vsel %vm4706, %v4722, %v4724
  %v4726 = vrot.slane %v4697, 3
  %v4727 = vsel %vm4706, %v4724, %v4726
  %v4728 = vrot.slane %v4698, 3
  %v4729 = vsel %vm4706, %v4726, %v4728
  %v4730 = vrot.slane %v4699, 3
  %v4731 = vsel %vm4706, %v4728, %v4730
  %v4732 = vrot.slane %v4700, 3
  %v4733 = vsel %vm4706, %v4730, %v4732
  %v4734 = vrot.slane %v4701, 3
  %v4735 = vsel %vm4706, %v4732, %v4734
  %v4736 = vrot.slane %v4702, 3
  %v4737 = vsel %vm4706, %v4734, %v4736
  %v4738 = vrot.slane %v4703, 3
  %v4739 = vsel %vm4706, %v4736, %v4738
  %v4740 = vrot.slane %v4704, 3
  %v4741 = vsel %vm4706, %v4738, %v4740
  %v4742 = vrot.slane %v4705, 3
  %v4743 = vsel %vm4706, %v4740, %v4742
  %v4745 = vsel %vm215, %v4709, 0
  %v4748 = vsel %vm215, %v4711, 0
  %v4751 = vsel %vm215, %v4713, 0
  %v4754 = vsel %vm215, %v4715, 0
  %v4757 = vsel %vm215, %v4717, 0
  %v4760 = vsel %vm215, %v4719, 0
  %v4763 = vsel %vm215, %v4721, 0
  %v4766 = vsel %vm215, %v4723, 0
  %v4769 = vsel %vm215, %v4725, 0
  %v4772 = vsel %vm215, %v4727, 0
  %v4775 = vsel %vm215, %v4729, 0
  %v4778 = vsel %vm215, %v4731, 0
  %v4781 = vsel %vm215, %v4733, 0
  %v4784 = vsel %vm215, %v4735, 0
  %v4787 = vsel %vm215, %v4737, 0
  %v4790 = vsel %vm215, %v4739, 0
  %v4793 = vsel %vm215, %v4741, 0
  %v4796 = vsel %vm215, %v4743, 0
  %v4799 = vand.u32 %v4576, %v273
  %4801 = vmatprep.subr.bf16.mxu0 0
  %4802 = vmatpush1.bf16.msra.mxu0 0
  %4803 = vmatprep.subr.bf16.mxu0 0
  %4804 = vmatpush1.bf16.msra.mxu0 0
  %4805 = vmatprep.subr.bf16.mxu0 0
  %4806 = vmatpush1.bf16.msra.mxu0 0
  %4807 = vmatprep.subr.bf16.mxu0 0
  %4808 = vmatpush1.bf16.msra.mxu0 0
  %4809 = vmatprep.subr.bf16.mxu0 0
  %4810 = vmatpush1.bf16.msra.mxu0 0
  %4811 = vmatprep.subr.bf16.mxu0 0
  %4812 = vmatpush1.bf16.msra.mxu0 0
  %4813 = vmatprep.subr.bf16.mxu0 0
  %4814 = vmatpush1.bf16.msra.mxu0 0
  %4815 = vmatprep.subr.bf16.mxu0 0
  %4816 = vmatpush1.bf16.msra.mxu0 %v4799
  %4817 = vmatprep.subr.bf16.mxu0 0
  %4818 = vmatpush2.bf16.msra.mxu0 0
  %4819 = vmatprep.subr.bf16.mxu0 0
  %4820 = vmatpush2.bf16.msra.mxu0 0
  %4821 = vmatprep.subr.bf16.mxu0 0
  %4822 = vmatpush2.bf16.msra.mxu0 0
  %4823 = vmatprep.subr.bf16.mxu0 0
  %4824 = vmatpush2.bf16.msra.mxu0 0
  %4825 = vmatprep.subr.bf16.mxu0 0
  %4826 = vmatpush2.bf16.msra.mxu0 0
  %4827 = vmatprep.subr.bf16.mxu0 0
  %4828 = vmatpush2.bf16.msra.mxu0 0
  %4829 = vmatprep.subr.bf16.mxu0 0
  %4830 = vmatpush2.bf16.msra.mxu0 0
  %4831 = vmatprep.subr.bf16.mxu0 0
  %4832 = vmatpush2.bf16.msra.mxu0 0
  %4833 = vmatprep.mubr.bf16.mxu0 0
  %4834 = vmatmul.mubr.bf16.gmra.mxu0 %v4745
  %v4835 = vpop.f32.mrf.mxu0
  %v4836 = vadd.f32 0.0, %v4835
  %v4837 = vpop.f32.mrf.mxu0
  %v4838 = vpop.f32.mrf.mxu0
  %v4839 = vadd.f32 0.0, %v4838
  %v4840 = vpop.f32.mrf.mxu0
  %4841 = vmatprep.mubr.bf16.mxu0 0
  %4842 = vmatmul.mubr.bf16.gmra.mxu0 %v4748
  %v4843 = vpop.f32.mrf.mxu0
  %v4844 = vadd.f32 0.0, %v4843
  %v4845 = vpop.f32.mrf.mxu0
  %v4846 = vpop.f32.mrf.mxu0
  %v4847 = vadd.f32 0.0, %v4846
  %v4848 = vpop.f32.mrf.mxu0
  %4849 = vmatprep.mubr.bf16.mxu0 0
  %4850 = vmatmul.mubr.bf16.gmra.mxu0 %v4751
  %v4851 = vpop.f32.mrf.mxu0
  %v4852 = vadd.f32 0.0, %v4851
  %v4853 = vpop.f32.mrf.mxu0
  %v4854 = vpop.f32.mrf.mxu0
  %v4855 = vadd.f32 0.0, %v4854
  %v4856 = vpop.f32.mrf.mxu0
  %4857 = vmatprep.mubr.bf16.mxu0 0
  %4858 = vmatmul.mubr.bf16.gmra.mxu0 %v4754
  %v4859 = vpop.f32.mrf.mxu0
  %v4860 = vadd.f32 0.0, %v4859
  %v4861 = vpop.f32.mrf.mxu0
  %v4862 = vpop.f32.mrf.mxu0
  %v4863 = vadd.f32 0.0, %v4862
  %v4864 = vpop.f32.mrf.mxu0
  %4865 = vmatprep.mubr.bf16.mxu0 0
  %4866 = vmatmul.mubr.bf16.gmra.mxu0 %v4757
  %v4867 = vpop.f32.mrf.mxu0
  %v4868 = vadd.f32 0.0, %v4867
  %v4869 = vpop.f32.mrf.mxu0
  %v4870 = vpop.f32.mrf.mxu0
  %v4871 = vadd.f32 0.0, %v4870
  %v4872 = vpop.f32.mrf.mxu0
  %4873 = vmatprep.mubr.bf16.mxu0 0
  %4874 = vmatmul.mubr.bf16.gmra.mxu0 %v4760
  %v4875 = vpop.f32.mrf.mxu0
  %v4876 = vadd.f32 0.0, %v4875
  %v4877 = vpop.f32.mrf.mxu0
  %v4878 = vpop.f32.mrf.mxu0
  %v4879 = vadd.f32 0.0, %v4878
  %v4880 = vpop.f32.mrf.mxu0
  %4881 = vmatprep.mubr.bf16.mxu0 0
  %4882 = vmatmul.mubr.bf16.gmra.mxu0 %v4763
  %v4883 = vpop.f32.mrf.mxu0
  %v4884 = vadd.f32 0.0, %v4883
  %v4885 = vpop.f32.mrf.mxu0
  %v4886 = vpop.f32.mrf.mxu0
  %v4887 = vadd.f32 0.0, %v4886
  %v4888 = vpop.f32.mrf.mxu0
  %4889 = vmatprep.mubr.bf16.mxu0 0
  %4890 = vmatmul.mubr.bf16.gmra.mxu0 %v4766
  %v4891 = vpop.f32.mrf.mxu0
  %v4892 = vadd.f32 0.0, %v4891
  %v4893 = vpop.f32.mrf.mxu0
  %v4894 = vpop.f32.mrf.mxu0
  %v4895 = vadd.f32 0.0, %v4894
  %v4896 = vpop.f32.mrf.mxu0
  %4897 = vmatprep.mubr.bf16.mxu0 0
  %4898 = vmatmul.mubr.bf16.gmra.mxu0 %v4769
  %v4899 = vpop.f32.mrf.mxu0
  %v4900 = vadd.f32 0.0, %v4899
  %v4901 = vpop.f32.mrf.mxu0
  %v4902 = vpop.f32.mrf.mxu0
  %v4903 = vadd.f32 0.0, %v4902
  %v4904 = vpop.f32.mrf.mxu0
  %4905 = vmatprep.mubr.bf16.mxu0 0
  %4906 = vmatmul.mubr.bf16.gmra.mxu0 %v4772
  %v4907 = vpop.f32.mrf.mxu0
  %v4908 = vadd.f32 0.0, %v4907
  %v4909 = vpop.f32.mrf.mxu0
  %v4910 = vpop.f32.mrf.mxu0
  %v4911 = vadd.f32 0.0, %v4910
  %v4912 = vpop.f32.mrf.mxu0
  %4913 = vmatprep.mubr.bf16.mxu0 0
  %4914 = vmatmul.mubr.bf16.gmra.mxu0 %v4775
  %v4915 = vpop.f32.mrf.mxu0
  %v4916 = vadd.f32 0.0, %v4915
  %v4917 = vpop.f32.mrf.mxu0
  %v4918 = vpop.f32.mrf.mxu0
  %v4919 = vadd.f32 0.0, %v4918
  %v4920 = vpop.f32.mrf.mxu0
  %4921 = vmatprep.mubr.bf16.mxu0 0
  %4922 = vmatmul.mubr.bf16.gmra.mxu0 %v4778
  %v4923 = vpop.f32.mrf.mxu0
  %v4924 = vadd.f32 0.0, %v4923
  %v4925 = vpop.f32.mrf.mxu0
  %v4926 = vpop.f32.mrf.mxu0
  %v4927 = vadd.f32 0.0, %v4926
  %v4928 = vpop.f32.mrf.mxu0
  %4929 = vmatprep.mubr.bf16.mxu0 0
  %4930 = vmatmul.mubr.bf16.gmra.mxu0 %v4781
  %v4931 = vpop.f32.mrf.mxu0
  %v4932 = vadd.f32 0.0, %v4931
  %v4933 = vpop.f32.mrf.mxu0
  %v4934 = vpop.f32.mrf.mxu0
  %v4935 = vadd.f32 0.0, %v4934
  %v4936 = vpop.f32.mrf.mxu0
  %4937 = vmatprep.mubr.bf16.mxu0 0
  %4938 = vmatmul.mubr.bf16.gmra.mxu0 %v4784
  %v4939 = vpop.f32.mrf.mxu0
  %v4940 = vadd.f32 0.0, %v4939
  %v4941 = vpop.f32.mrf.mxu0
  %v4942 = vpop.f32.mrf.mxu0
  %v4943 = vadd.f32 0.0, %v4942
  %v4944 = vpop.f32.mrf.mxu0
  %4945 = vmatprep.mubr.bf16.mxu0 0
  %4946 = vmatmul.mubr.bf16.gmra.mxu0 %v4787
  %v4947 = vpop.f32.mrf.mxu0
  %v4948 = vadd.f32 0.0, %v4947
  %v4949 = vpop.f32.mrf.mxu0
  %v4950 = vpop.f32.mrf.mxu0
  %v4951 = vadd.f32 0.0, %v4950
  %v4952 = vpop.f32.mrf.mxu0
  %4953 = vmatprep.mubr.bf16.mxu0 0
  %4954 = vmatmul.mubr.bf16.gmra.mxu0 %v4790
  %v4955 = vpop.f32.mrf.mxu0
  %v4956 = vadd.f32 0.0, %v4955
  %v4957 = vpop.f32.mrf.mxu0
  %v4958 = vpop.f32.mrf.mxu0
  %v4959 = vadd.f32 0.0, %v4958
  %v4960 = vpop.f32.mrf.mxu0
  %4961 = vmatprep.mubr.bf16.mxu0 0
  %4962 = vmatmul.mubr.bf16.gmra.mxu0 %v4793
  %v4963 = vpop.f32.mrf.mxu0
  %v4964 = vadd.f32 0.0, %v4963
  %v4965 = vpop.f32.mrf.mxu0
  %v4966 = vpop.f32.mrf.mxu0
  %v4967 = vadd.f32 0.0, %v4966
  %v4968 = vpop.f32.mrf.mxu0
  %4969 = vmatprep.mubr.bf16.mxu0 0
  %4970 = vmatmul.mubr.bf16.gmra.mxu0 %v4796
  %v4971 = vpop.f32.mrf.mxu0
  %v4972 = vadd.f32 0.0, %v4971
  %v4973 = vpop.f32.mrf.mxu0
  %v4974 = vpop.f32.mrf.mxu0
  %v4975 = vadd.f32 0.0, %v4974
  %v4976 = vpop.f32.mrf.mxu0
  %4977 = vdwg.mxu0
  %v4978 = vadd.f32 %v4577, %v4836
  %v4979 = vadd.f32 %v4578, %v4839
  %v4980 = vadd.f32 %v4579, %v4844
  %v4981 = vadd.f32 %v4580, %v4847
  %v4982 = vadd.f32 %v4581, %v4852
  %v4983 = vadd.f32 %v4582, %v4855
  %v4984 = vadd.f32 %v4583, %v4860
  %v4985 = vadd.f32 %v4584, %v4863
  %v4986 = vadd.f32 %v4585, %v4868
  %v4987 = vadd.f32 %v4586, %v4871
  %v4988 = vadd.f32 %v4587, %v4876
  %v4989 = vadd.f32 %v4588, %v4879
  %v4990 = vadd.f32 %v4589, %v4884
  %v4991 = vadd.f32 %v4590, %v4887
  %v4992 = vadd.f32 %v4591, %v4892
  %v4993 = vadd.f32 %v4592, %v4895
  %v4994 = vadd.f32 %v4593, %v4900
  %v4995 = vadd.f32 %v4594, %v4903
  %v4996 = vadd.f32 %v4595, %v4908
  %v4997 = vadd.f32 %v4596, %v4911
  %v4998 = vadd.f32 %v4597, %v4916
  %v4999 = vadd.f32 %v4598, %v4919
  %v5000 = vadd.f32 %v4599, %v4924
  %v5001 = vadd.f32 %v4600, %v4927
  %v5002 = vadd.f32 %v4601, %v4932
  %v5003 = vadd.f32 %v4602, %v4935
  %v5004 = vadd.f32 %v4603, %v4940
  %v5005 = vadd.f32 %v4604, %v4943
  %v5006 = vadd.f32 %v4605, %v4948
  %v5007 = vadd.f32 %v4606, %v4951
  %v5008 = vadd.f32 %v4607, %v4956
  %v5009 = vadd.f32 %v4608, %v4959
  %v5010 = vadd.f32 %v4609, %v4964
  %v5011 = vadd.f32 %v4610, %v4967
  %v5012 = vadd.f32 %v4611, %v4972
  %v5013 = vadd.f32 %v4612, %v4975
  %5014 = vst.msk [vmem:[#allocation2] sm:$0xff] %vm15, %v4978
  %5015 = vst.msk [vmem:[#allocation2 + $0x8] sm:$0xff] %vm15, %v4979
  %5016 = vst.msk [vmem:[#allocation2 + $0x10] sm:$0xff] %vm15, %v4980
  %5017 = vst.msk [vmem:[#allocation2 + $0x18] sm:$0xff] %vm15, %v4981
  %5018 = vst.msk [vmem:[#allocation2 + $0x20] sm:$0xff] %vm15, %v4982
  %5019 = vst.msk [vmem:[#allocation2 + $0x28] sm:$0xff] %vm15, %v4983
  %5020 = vst.msk [vmem:[#allocation2 + $0x30] sm:$0xff] %vm15, %v4984
  %5021 = vst.msk [vmem:[#allocation2 + $0x38] sm:$0xff] %vm15, %v4985
  %5022 = vst.msk [vmem:[#allocation2 + $0x40] sm:$0xff] %vm15, %v4986
  %5023 = vst.msk [vmem:[#allocation2 + $0x48] sm:$0xff] %vm15, %v4987
  %5024 = vst.msk [vmem:[#allocation2 + $0x50] sm:$0xff] %vm15, %v4988
  %5025 = vst.msk [vmem:[#allocation2 + $0x58] sm:$0xff] %vm15, %v4989
  %5026 = vst.msk [vmem:[#allocation2 + $0x60] sm:$0xff] %vm15, %v4990
  %5027 = vst.msk [vmem:[#allocation2 + $0x68] sm:$0xff] %vm15, %v4991
  %5028 = vst.msk [vmem:[#allocation2 + $0x70] sm:$0xff] %vm15, %v4992
  %5029 = vst.msk [vmem:[#allocation2 + $0x78] sm:$0xff] %vm15, %v4993
  %5030 = vst.msk [vmem:[#allocation2 + $0x80] sm:$0xff] %vm15, %v4994
  %5031 = vst.msk [vmem:[#allocation2 + $0x88] sm:$0xff] %vm15, %v4995
  %5032 = vst.msk [vmem:[#allocation2 + $0x90] sm:$0xff] %vm15, %v4996
  %5033 = vst.msk [vmem:[#allocation2 + $0x98] sm:$0xff] %vm15, %v4997
  %5034 = vst.msk [vmem:[#allocation2 + $0xa0] sm:$0xff] %vm15, %v4998
  %5035 = vst.msk [vmem:[#allocation2 + $0xa8] sm:$0xff] %vm15, %v4999
  %5036 = vst.msk [vmem:[#allocation2 + $0xb0] sm:$0xff] %vm15, %v5000
  %5037 = vst.msk [vmem:[#allocation2 + $0xb8] sm:$0xff] %vm15, %v5001
  %5038 = vst.msk [vmem:[#allocation2 + $0xc0] sm:$0xff] %vm15, %v5002
  %5039 = vst.msk [vmem:[#allocation2 + $0xc8] sm:$0xff] %vm15, %v5003
  %5040 = vst.msk [vmem:[#allocation2 + $0xd0] sm:$0xff] %vm15, %v5004
  %5041 = vst.msk [vmem:[#allocation2 + $0xd8] sm:$0xff] %vm15, %v5005
  %5042 = vst.msk [vmem:[#allocation2 + $0xe0] sm:$0xff] %vm15, %v5006
  %5043 = vst.msk [vmem:[#allocation2 + $0xe8] sm:$0xff] %vm15, %v5007
  %5044 = vst.msk [vmem:[#allocation2 + $0xf0] sm:$0xff] %vm15, %v5008
  %5045 = vst.msk [vmem:[#allocation2 + $0xf8] sm:$0xff] %vm15, %v5009
  %5046 = vst.msk [vmem:[#allocation2 + $0x100] sm:$0xff] %vm15, %v5010
  %5047 = vst.msk [vmem:[#allocation2 + $0x108] sm:$0xff] %vm15, %v5011
  %5048 = vst.msk [vmem:[#allocation2 + $0x110] sm:$0xff] %vm15, %v5012
  %5049 = vst.msk [vmem:[#allocation2 + $0x118] sm:$0xff] %vm15, %v5013
  %v5050 = vld [vmem:[#allocation2] sm:$0xff]
  %v5051 = vld [vmem:[#allocation2 + $0x8] sm:$0xff]
  %v5052 = vld [vmem:[#allocation2 + $0x10] sm:$0xff]
  %v5053 = vld [vmem:[#allocation2 + $0x18] sm:$0xff]
  %v5054 = vld [vmem:[#allocation2 + $0x20] sm:$0xff]
  %v5055 = vld [vmem:[#allocation2 + $0x28] sm:$0xff]
  %v5056 = vld [vmem:[#allocation2 + $0x30] sm:$0xff]
  %v5057 = vld [vmem:[#allocation2 + $0x38] sm:$0xff]
  %v5058 = vld [vmem:[#allocation2 + $0x40] sm:$0xff]
  %v5059 = vld [vmem:[#allocation2 + $0x48] sm:$0xff]
  %v5060 = vld [vmem:[#allocation2 + $0x50] sm:$0xff]
  %v5061 = vld [vmem:[#allocation2 + $0x58] sm:$0xff]
  %v5062 = vld [vmem:[#allocation2 + $0x60] sm:$0xff]
  %v5063 = vld [vmem:[#allocation2 + $0x68] sm:$0xff]
  %v5064 = vld [vmem:[#allocation2 + $0x70] sm:$0xff]
  %v5065 = vld [vmem:[#allocation2 + $0x78] sm:$0xff]
  %v5066 = vld [vmem:[#allocation2 + $0x80] sm:$0xff]
  %v5067 = vld [vmem:[#allocation2 + $0x88] sm:$0xff]
  %v5068 = vld [vmem:[#allocation2 + $0x90] sm:$0xff]
  %v5069 = vld [vmem:[#allocation2 + $0x98] sm:$0xff]
  %v5070 = vld [vmem:[#allocation2 + $0xa0] sm:$0xff]
  %v5071 = vld [vmem:[#allocation2 + $0xa8] sm:$0xff]
  %v5072 = vld [vmem:[#allocation2 + $0xb0] sm:$0xff]
  %v5073 = vld [vmem:[#allocation2 + $0xb8] sm:$0xff]
  %v5074 = vld [vmem:[#allocation2 + $0xc0] sm:$0xff]
  %v5075 = vld [vmem:[#allocation2 + $0xc8] sm:$0xff]
  %v5076 = vld [vmem:[#allocation2 + $0xd0] sm:$0xff]
  %v5077 = vld [vmem:[#allocation2 + $0xd8] sm:$0xff]
  %v5078 = vld [vmem:[#allocation2 + $0xe0] sm:$0xff]
  %v5079 = vld [vmem:[#allocation2 + $0xe8] sm:$0xff]
  %v5080 = vld [vmem:[#allocation2 + $0xf0] sm:$0xff]
  %v5081 = vld [vmem:[#allocation2 + $0xf8] sm:$0xff]
  %v5082 = vld [vmem:[#allocation2 + $0x100] sm:$0xff]
  %v5083 = vld [vmem:[#allocation2 + $0x108] sm:$0xff]
  %v5084 = vld [vmem:[#allocation2 + $0x110] sm:$0xff]
  %v5085 = vld [vmem:[#allocation2 + $0x118] sm:$0xff]
  %v5086 = vld [vmem:[%s2] sm:$0x1]
  %v5088 = vlaneseq
  %v5089 = vshrl.u32 %v5088, 7
  %v5090 = vsub.s32 0, %v5089
  %v5091 = vrot.slane %v5086, %v5090
  %v5093 = vadd.f32 %v5050, %v5091
  %v5094 = vadd.f32 %v5051, %v5091
  %v5095 = vadd.f32 %v5052, %v5091
  %v5096 = vadd.f32 %v5053, %v5091
  %v5097 = vadd.f32 %v5054, %v5091
  %v5098 = vadd.f32 %v5055, %v5091
  %v5099 = vadd.f32 %v5056, %v5091
  %v5100 = vadd.f32 %v5057, %v5091
  %v5101 = vadd.f32 %v5058, %v5091
  %v5102 = vadd.f32 %v5059, %v5091
  %v5103 = vadd.f32 %v5060, %v5091
  %v5104 = vadd.f32 %v5061, %v5091
  %v5105 = vadd.f32 %v5062, %v5091
  %v5106 = vadd.f32 %v5063, %v5091
  %v5107 = vadd.f32 %v5064, %v5091
  %v5108 = vadd.f32 %v5065, %v5091
  %v5109 = vadd.f32 %v5066, %v5091
  %v5110 = vadd.f32 %v5067, %v5091
  %v5111 = vadd.f32 %v5068, %v5091
  %v5112 = vadd.f32 %v5069, %v5091
  %v5113 = vadd.f32 %v5070, %v5091
  %v5114 = vadd.f32 %v5071, %v5091
  %v5115 = vadd.f32 %v5072, %v5091
  %v5116 = vadd.f32 %v5073, %v5091
  %v5117 = vadd.f32 %v5074, %v5091
  %v5118 = vadd.f32 %v5075, %v5091
  %v5119 = vadd.f32 %v5076, %v5091
  %v5120 = vadd.f32 %v5077, %v5091
  %v5121 = vadd.f32 %v5078, %v5091
  %v5122 = vadd.f32 %v5079, %v5091
  %v5123 = vadd.f32 %v5080, %v5091
  %v5124 = vadd.f32 %v5081, %v5091
  %v5125 = vadd.f32 %v5082, %v5091
  %v5126 = vadd.f32 %v5083, %v5091
  %v5127 = vadd.f32 %v5084, %v5091
  %v5128 = vadd.f32 %v5085, %v5091
  %v5129 = vmax.f32 %v5093, 0.0
  %v5130 = vmax.f32 %v5094, 0.0
  %v5131 = vmax.f32 %v5095, 0.0
  %v5132 = vmax.f32 %v5096, 0.0
  %v5133 = vmax.f32 %v5097, 0.0
  %v5134 = vmax.f32 %v5098, 0.0
  %v5135 = vmax.f32 %v5099, 0.0
  %v5136 = vmax.f32 %v5100, 0.0
  %v5137 = vmax.f32 %v5101, 0.0
  %v5138 = vmax.f32 %v5102, 0.0
  %v5139 = vmax.f32 %v5103, 0.0
  %v5140 = vmax.f32 %v5104, 0.0
  %v5141 = vmax.f32 %v5105, 0.0
  %v5142 = vmax.f32 %v5106, 0.0
  %v5143 = vmax.f32 %v5107, 0.0
  %v5144 = vmax.f32 %v5108, 0.0
  %v5145 = vmax.f32 %v5109, 0.0
  %v5146 = vmax.f32 %v5110, 0.0
  %v5147 = vmax.f32 %v5111, 0.0
  %v5148 = vmax.f32 %v5112, 0.0
  %v5149 = vmax.f32 %v5113, 0.0
  %v5150 = vmax.f32 %v5114, 0.0
  %v5151 = vmax.f32 %v5115, 0.0
  %v5152 = vmax.f32 %v5116, 0.0
  %v5153 = vmax.f32 %v5117, 0.0
  %v5154 = vmax.f32 %v5118, 0.0
  %v5155 = vmax.f32 %v5119, 0.0
  %v5156 = vmax.f32 %v5120, 0.0
  %v5157 = vmax.f32 %v5121, 0.0
  %v5158 = vmax.f32 %v5122, 0.0
  %v5159 = vmax.f32 %v5123, 0.0
  %v5160 = vmax.f32 %v5124, 0.0
  %v5161 = vmax.f32 %v5125, 0.0
  %v5162 = vmax.f32 %v5126, 0.0
  %v5163 = vmax.f32 %v5127, 0.0
  %v5164 = vmax.f32 %v5128, 0.0
  %5165 = vst.msk [vmem:[%s3] sm:$0xff] %vm15, %v5129
  %5166 = vst.msk [vmem:[%s3 + $0x8] sm:$0xff] %vm15, %v5130
  %5167 = vst.msk [vmem:[%s3 + $0x10] sm:$0xff] %vm15, %v5131
  %5168 = vst.msk [vmem:[%s3 + $0x18] sm:$0xff] %vm15, %v5132
  %5169 = vst.msk [vmem:[%s3 + $0x20] sm:$0xff] %vm15, %v5133
  %5170 = vst.msk [vmem:[%s3 + $0x28] sm:$0xff] %vm15, %v5134
  %5171 = vst.msk [vmem:[%s3 + $0x30] sm:$0xff] %vm15, %v5135
  %5172 = vst.msk [vmem:[%s3 + $0x38] sm:$0xff] %vm15, %v5136
  %5173 = vst.msk [vmem:[%s3 + $0x40] sm:$0xff] %vm15, %v5137
  %5174 = vst.msk [vmem:[%s3 + $0x48] sm:$0xff] %vm15, %v5138
  %5175 = vst.msk [vmem:[%s3 + $0x50] sm:$0xff] %vm15, %v5139
  %5176 = vst.msk [vmem:[%s3 + $0x58] sm:$0xff] %vm15, %v5140
  %5177 = vst.msk [vmem:[%s3 + $0x60] sm:$0xff] %vm15, %v5141
  %5178 = vst.msk [vmem:[%s3 + $0x68] sm:$0xff] %vm15, %v5142
  %5179 = vst.msk [vmem:[%s3 + $0x70] sm:$0xff] %vm15, %v5143
  %5180 = vst.msk [vmem:[%s3 + $0x78] sm:$0xff] %vm15, %v5144
  %5181 = vst.msk [vmem:[%s3 + $0x80] sm:$0xff] %vm15, %v5145
  %5182 = vst.msk [vmem:[%s3 + $0x88] sm:$0xff] %vm15, %v5146
  %5183 = vst.msk [vmem:[%s3 + $0x90] sm:$0xff] %vm15, %v5147
  %5184 = vst.msk [vmem:[%s3 + $0x98] sm:$0xff] %vm15, %v5148
  %5185 = vst.msk [vmem:[%s3 + $0xa0] sm:$0xff] %vm15, %v5149
  %5186 = vst.msk [vmem:[%s3 + $0xa8] sm:$0xff] %vm15, %v5150
  %5187 = vst.msk [vmem:[%s3 + $0xb0] sm:$0xff] %vm15, %v5151
  %5188 = vst.msk [vmem:[%s3 + $0xb8] sm:$0xff] %vm15, %v5152
  %5189 = vst.msk [vmem:[%s3 + $0xc0] sm:$0xff] %vm15, %v5153
  %5190 = vst.msk [vmem:[%s3 + $0xc8] sm:$0xff] %vm15, %v5154
  %5191 = vst.msk [vmem:[%s3 + $0xd0] sm:$0xff] %vm15, %v5155
  %5192 = vst.msk [vmem:[%s3 + $0xd8] sm:$0xff] %vm15, %v5156
  %5193 = vst.msk [vmem:[%s3 + $0xe0] sm:$0xff] %vm15, %v5157
  %5194 = vst.msk [vmem:[%s3 + $0xe8] sm:$0xff] %vm15, %v5158
  %5195 = vst.msk [vmem:[%s3 + $0xf0] sm:$0xff] %vm15, %v5159
  %5196 = vst.msk [vmem:[%s3 + $0xf8] sm:$0xff] %vm15, %v5160
  %5197 = vst.msk [vmem:[%s3 + $0x100] sm:$0xff] %vm15, %v5161
  %5198 = vst.msk [vmem:[%s3 + $0x108] sm:$0xff] %vm15, %v5162
  %5199 = vst.msk [vmem:[%s3 + $0x110] sm:$0xff] %vm15, %v5163
  %5200 = vst.msk [vmem:[%s3 + $0x118] sm:$0xff] %vm15, %v5164
  // Predicated region
  $region14: #{tpu_custom_call.1} parent=0 // pred_check
    _
  $region15: #{tpu_custom_call.1} parent=0 // pred_check_branch
    %5202 = sbr.rel (0) target = $region17
  $region16: #{tpu_custom_call.1} parent=0 // pred_region
    _
  $region17: #{tpu_custom_call.1} parent=0 // pred_fallthru
    _
  // Predicated region
  $region18: #{tpu_custom_call.1} parent=0 // pred_check
    _
  $region19: #{tpu_custom_call.1} parent=0 // pred_check_branch
    %5204 = sbr.rel (0) target = $region21
  $region20: #{tpu_custom_call.1} parent=0 // pred_region
    _
  $region21: #{tpu_custom_call.1} parent=0 // pred_fallthru
    _

</llo_original>
